<compile_context>
chip_gen: v5e
topology: v5e:2x2
jax: 0.10.0
libtpu: 0.0.40
codegen_flags: <defaults>
</compile_context>

<pallas_src>
import functools
import math

import jax
import jax.numpy as jnp
from jax.experimental import pallas as pl
from jax.experimental.pallas import tpu as pltpu


# ----------------------------------------------------------------------------
# Kernel
# ----------------------------------------------------------------------------
def _layernorm(x, gamma, beta, eps):
    mu = jnp.mean(x, axis=-1, keepdims=True)
    var = jnp.mean((x - mu) ** 2, axis=-1, keepdims=True)
    return (x - mu) * jax.lax.rsqrt(var + eps) * gamma + beta


def encoder_kernel(x_ref,
                   w_in_ref, b_in_ref, w_o_ref, b_o_ref,
                   g1_ref, bt1_ref, w1_ref, b1_ref, w2_ref, b2_ref,
                   g2_ref, bt2_ref, fg_ref, fb_ref,
                   out_ref, attn_scratch, *, nhead, eps):
    """One (batch_block, layer) grid step of the fused encoder."""
    l = pl.program_id(1)
    last_layer = pl.num_programs(1) - 1

    # Layer 0: seed the resident activation carry (out block) with the input.
    @pl.when(l == 0)
    def _():
        out_ref[...] = x_ref[...]

    x3 = out_ref[...].astype(jnp.float32)          # (S, Bt, D) activation carry
    S, Bt, D = x3.shape
    H = nhead
    Dh = D // H
    R = S * Bt
    scale = 1.0 / math.sqrt(Dh)

    x2d = x3.reshape(R, D)                         # rows = (s, b), lane-dense D

    # ---- fused QKV projection over all rows (bf16 MXU, f32 accumulate) -----
    qkv = jnp.dot(x2d.astype(jnp.bfloat16), w_in_ref[0],
                  preferred_element_type=jnp.float32) + b_in_ref[0]   # (R, 3D)
    qkv3 = qkv.reshape(S, Bt, 3 * D)

    # ---- multi-head self attention: head-batched einsums per sequence ------
    for b in range(Bt):                            # static, small batch block
        qkv_b = qkv3[:, b, :]                      # (S, 3D)
        q_b = qkv_b[:, 0:D]
        k_b = qkv_b[:, D:2 * D]
        v_b = qkv_b[:, 2 * D:3 * D]
        # (H, S, Dh) head-batched tensors
        qh = jnp.stack([q_b[:, h * Dh:(h + 1) * Dh] for h in range(H)], axis=0) * scale
        kh = jnp.stack([k_b[:, h * Dh:(h + 1) * Dh] for h in range(H)], axis=0)
        vh = jnp.stack([v_b[:, h * Dh:(h + 1) * Dh] for h in range(H)], axis=0)

        s = jnp.einsum('hqd,hkd->hqk',
                       qh.astype(jnp.bfloat16), kh.astype(jnp.bfloat16),
                       preferred_element_type=jnp.float32)            # (H, S, S)
        s = s - jnp.max(s, axis=-1, keepdims=True)
        p = jnp.exp(s)
        p = p * pl.reciprocal(jnp.sum(p, axis=-1, keepdims=True), approx=True)
        o = jnp.einsum('hqk,hkd->hqd',
                       p.astype(jnp.bfloat16), vh.astype(jnp.bfloat16),
                       preferred_element_type=jnp.float32)            # (H, S, Dh)
        # merge heads back onto lanes and stash per-sequence result
        attn_scratch[:, b, :] = jnp.concatenate([o[h] for h in range(H)], axis=-1)

    attn = attn_scratch[...].reshape(R, D)
    attn = jnp.dot(attn.astype(jnp.bfloat16), w_o_ref[0],
                   preferred_element_type=jnp.float32) + b_o_ref[0]

    # ---- residual + LayerNorm 1 (f32) ---------------------------------------
    x1 = _layernorm(x2d + attn, g1_ref[0], bt1_ref[0], eps)

    # ---- feed-forward (relu), all rows jointly ------------------------------
    h1 = jnp.dot(x1.astype(jnp.bfloat16), w1_ref[0],
                 preferred_element_type=jnp.float32) + b1_ref[0]
    h1 = jnp.maximum(h1, 0.0)
    h2 = jnp.dot(h1.astype(jnp.bfloat16), w2_ref[0],
                 preferred_element_type=jnp.float32) + b2_ref[0]

    # ---- residual + LayerNorm 2 ---------------------------------------------
    y = _layernorm(x1 + h2, g2_ref[0], bt2_ref[0], eps)

    @pl.when(l != last_layer)
    def _():
        out_ref[...] = y.reshape(S, Bt, D).astype(out_ref.dtype)

    # Fused final encoder LayerNorm on the last layer step.
    @pl.when(l == last_layer)
    def _():
        yf = _layernorm(y, fg_ref[0], fb_ref[0], eps)
        out_ref[...] = yf.reshape(S, Bt, D).astype(out_ref.dtype)


# ----------------------------------------------------------------------------
# Wrapper
# ----------------------------------------------------------------------------
def encoder_forward(x_sbd, params, *, nhead, eps,
                    block_b=None, vmem_limit_bytes=48 * 1024 * 1024):
    """x_sbd: (S, B, D) seq-first input (PyTorch batch_first=False)."""
    S, B, D = x_sbd.shape
    L = params["w_in"].shape[0]
    F = params["w1"].shape[2]
    assert D % nhead == 0

    if block_b is None:
        # Second-minor block dim must be a multiple of 8 or the full dim.
        block_b = 8 if (B % 8 == 0) else B
    assert B % block_b == 0
    nb = B // block_b

    kernel = functools.partial(encoder_kernel, nhead=nhead, eps=eps)

    def layer_spec(shape):   # per-layer stacked params: leading (layer) index = l
        return pl.BlockSpec((1,) + shape, lambda b, l: (l, 0, 0))

    def const_spec(shape):   # final-LN params, loaded once
        return pl.BlockSpec((1,) + shape, lambda b, l: (0, 0, 0))

    act_spec = pl.BlockSpec((S, block_b, D), lambda b, l: (0, b, 0))

    in_specs = [
        act_spec,                                      # x (S, B, D)
        layer_spec((D, 3 * D)), layer_spec((1, 3 * D)),  # in-proj W, b
        layer_spec((D, D)),     layer_spec((1, D)),      # out-proj W, b
        layer_spec((1, D)),     layer_spec((1, D)),      # LN1 gamma, beta
        layer_spec((D, F)),     layer_spec((1, F)),      # linear1 W, b
        layer_spec((F, D)),     layer_spec((1, D)),      # linear2 W, b
        layer_spec((1, D)),     layer_spec((1, D)),      # LN2 gamma, beta
        const_spec((1, D)),     const_spec((1, D)),      # final LN gamma, beta
    ]

    return pl.pallas_call(
        kernel,
        out_shape=jax.ShapeDtypeStruct((S, B, D), x_sbd.dtype),
        grid=(nb, L),                                   # layer axis innermost
        in_specs=in_specs,
        out_specs=act_spec,                             # resident carry across layers
        scratch_shapes=[pltpu.VMEM((S, block_b, D), jnp.float32)],
        compiler_params=pltpu.CompilerParams(
            dimension_semantics=("parallel", "arbitrary"),
            vmem_limit_bytes=vmem_limit_bytes),
    )(x_sbd,
      params["w_in"], params["b_in"], params["w_o"], params["b_o"],
      params["g1"], params["bt1"], params["w1"], params["b1"],
      params["w2"], params["b2"], params["g2"], params["bt2"],
      params["fg"], params["fb"])


# ----------------------------------------------------------------------------
# Deterministic parameter construction (synthetic weights, no checkpoint)
# ----------------------------------------------------------------------------
def init_params(key, d_model, nhead, dim_feedforward, num_layers):
    D, F, L = d_model, dim_feedforward, num_layers
    s_in = 1.0 / math.sqrt(D)
    s_ff = 1.0 / math.sqrt(F)

    def per_layer(layer):
        ks = jax.random.split(jax.random.fold_in(key, layer), 6)
        return dict(
            w_in=jax.random.uniform(ks[0], (D, 3 * D), jnp.float32, -s_in, s_in),
            b_in=jax.random.uniform(ks[1], (1, 3 * D), jnp.float32, -s_in, s_in),
            w_o=jax.random.uniform(ks[2], (D, D), jnp.float32, -s_in, s_in),
            b_o=jnp.zeros((1, D), jnp.float32),
            g1=jnp.ones((1, D), jnp.float32),
            bt1=jnp.zeros((1, D), jnp.float32),
            w1=jax.random.uniform(ks[3], (D, F), jnp.float32, -s_in, s_in),
            b1=jax.random.uniform(ks[4], (1, F), jnp.float32, -s_in, s_in),
            w2=jax.random.uniform(ks[5], (F, D), jnp.float32, -s_ff, s_ff),
            b2=jnp.zeros((1, D), jnp.float32),
            g2=jnp.ones((1, D), jnp.float32),
            bt2=jnp.zeros((1, D), jnp.float32),
        )

    layers = [per_layer(i) for i in range(L)]
    stacked = {k: jnp.stack([lp[k] for lp in layers], axis=0) for k in layers[0]}
    # Matmul weights in bf16 (MXU inputs, half the DMA bytes); vector params stay f32.
    for k in ("w_in", "w_o", "w1", "w2"):
        stacked[k] = stacked[k].astype(jnp.bfloat16)
    # Final encoder LayerNorm.
    stacked["fg"] = jnp.ones((1, 1, D), jnp.float32)
    stacked["fb"] = jnp.zeros((1, 1, D), jnp.float32)
    return stacked


# ----------------------------------------------------------------------------
if __name__ == "__main__":
    # Small shapes consistent with the module's forward: (seq, batch, d_model).
    # d_model chosen lane-dense (multiple of 128).
    S, B, D = 8, 2, 128
    NHEAD = 4
    DIM_FF = 256
    NUM_LAYERS = 2
    EPS = 1e-5

    key = jax.random.PRNGKey(0)
    k_x, k_p = jax.random.split(key)
    x = jax.random.normal(k_x, (S, B, D), dtype=jnp.float32)

    params = init_params(k_p, D, NHEAD, DIM_FF, NUM_LAYERS)

    out = encoder_forward(x, params, nhead=NHEAD, eps=EPS)
    out = jax.block_until_ready(out)

    assert out.shape == (S, B, D)
    assert bool(jnp.all(jnp.isfinite(out)))
    print("KERNEL_OK")
</pallas_src>

<mosaic_0001>
module attributes {stable_mosaic.version = 11 : i64} {
  func.func @encoder_kernel(%arg0: i32, %arg1: i32, %arg2: memref<8x2x128xf32, #tpu.memory_space<vmem>>, %arg3: memref<1x128x384xbf16, #tpu.memory_space<vmem>>, %arg4: memref<1x1x384xf32, #tpu.memory_space<vmem>>, %arg5: memref<1x128x128xbf16, #tpu.memory_space<vmem>>, %arg6: memref<1x1x128xf32, #tpu.memory_space<vmem>>, %arg7: memref<1x1x128xf32, #tpu.memory_space<vmem>>, %arg8: memref<1x1x128xf32, #tpu.memory_space<vmem>>, %arg9: memref<1x128x256xbf16, #tpu.memory_space<vmem>>, %arg10: memref<1x1x256xf32, #tpu.memory_space<vmem>>, %arg11: memref<1x256x128xbf16, #tpu.memory_space<vmem>>, %arg12: memref<1x1x128xf32, #tpu.memory_space<vmem>>, %arg13: memref<1x1x128xf32, #tpu.memory_space<vmem>>, %arg14: memref<1x1x128xf32, #tpu.memory_space<vmem>>, %arg15: memref<1x1x128xf32, #tpu.memory_space<vmem>>, %arg16: memref<1x1x128xf32, #tpu.memory_space<vmem>>, %arg17: memref<8x2x128xf32, #tpu.memory_space<vmem>>, %arg18: memref<8x2x128xf32, #tpu.memory_space<vmem>>) attributes {dimension_semantics = [#tpu.dimension_semantics<parallel>, #tpu.dimension_semantics<arbitrary>], iteration_bounds = array<i64: 1, 2>, scalar_prefetch = 0 : i64, scratch_operands = 1 : i64, tpu.core_type = #tpu.core_type<tc>, window_params = [{transform_indices = @transform_0, window_bounds = array<i64: 8, 2, 128>}, {transform_indices = @transform_1, window_bounds = array<i64: 1, 128, 384>}, {transform_indices = @transform_2, window_bounds = array<i64: 1, 1, 384>}, {transform_indices = @transform_3, window_bounds = array<i64: 1, 128, 128>}, {transform_indices = @transform_4, window_bounds = array<i64: 1, 1, 128>}, {transform_indices = @transform_5, window_bounds = array<i64: 1, 1, 128>}, {transform_indices = @transform_6, window_bounds = array<i64: 1, 1, 128>}, {transform_indices = @transform_7, window_bounds = array<i64: 1, 128, 256>}, {transform_indices = @transform_8, window_bounds = array<i64: 1, 1, 256>}, {transform_indices = @transform_9, window_bounds = array<i64: 1, 256, 128>}, {transform_indices = @transform_10, window_bounds = array<i64: 1, 1, 128>}, {transform_indices = @transform_11, window_bounds = array<i64: 1, 1, 128>}, {transform_indices = @transform_12, window_bounds = array<i64: 1, 1, 128>}, {pipeline_mode = #tpu.pipeline_mode<synchronous>, transform_indices = @transform_13, window_bounds = array<i64: 1, 1, 128>}, {pipeline_mode = #tpu.pipeline_mode<synchronous>, transform_indices = @transform_14, window_bounds = array<i64: 1, 1, 128>}, {transform_indices = @transform_15, window_bounds = array<i64: 8, 2, 128>}]} {
    %c0_i32 = arith.constant 0 : i32
    %0 = arith.cmpi eq, %arg1, %c0_i32 : i32
    %1 = arith.extui %0 : i1 to i32
    %c0_i32_0 = arith.constant 0 : i32
    %2 = arith.cmpi ne, %1, %c0_i32_0 : i32
    scf.if %2 {
      %c0_74 = arith.constant 0 : index
      %c0_75 = arith.constant 0 : index
      %c0_76 = arith.constant 0 : index
      %226 = vector.load %arg2[%c0_74, %c0_75, %c0_76] : memref<8x2x128xf32, #tpu.memory_space<vmem>>, vector<8x2x128xf32>
      %c0_77 = arith.constant 0 : index
      %c0_78 = arith.constant 0 : index
      %c0_79 = arith.constant 0 : index
      %227 = vector.load %arg17[%c0_77, %c0_78, %c0_79] : memref<8x2x128xf32, #tpu.memory_space<vmem>>, vector<8x2x128xf32>
      tpu.vector_store %arg17[%c0_77, %c0_78, %c0_79], %226 {strides = array<i32>} : memref<8x2x128xf32, #tpu.memory_space<vmem>>, vector<8x2x128xf32>,
    } else {
    }
    %c0 = arith.constant 0 : index
    %c0_1 = arith.constant 0 : index
    %c0_2 = arith.constant 0 : index
    %3 = vector.load %arg17[%c0, %c0_1, %c0_2] : memref<8x2x128xf32, #tpu.memory_space<vmem>>, vector<8x2x128xf32>
    %4 = vector.shape_cast %3 : vector<8x2x128xf32> to vector<16x128xf32>
    %5 = arith.truncf %4 : vector<16x128xf32> to vector<16x128xbf16>
    %c0_3 = arith.constant 0 : index
    %c0_4 = arith.constant 0 : index
    %c0_5 = arith.constant 0 : index
    %6 = vector.load %arg3[%c0_3, %c0_4, %c0_5] : memref<1x128x384xbf16, #tpu.memory_space<vmem>>, vector<1x128x384xbf16>
    %7 = vector.shape_cast %6 : vector<1x128x384xbf16> to vector<128x384xbf16>
    %cst = arith.constant dense<0.000000e+00> : vector<16x384xf32>
    %8 = tpu.matmul %5, %7, %cst {dimension_numbers = #tpu.dot_dimension_numbers<[1], [0], [0], [1], [0, 0, 1, 1], [], []>} : vector<16x128xbf16>, vector<128x384xbf16>, vector<16x384xf32> -> vector<16x384xf32>
    %c0_6 = arith.constant 0 : index
    %c0_7 = arith.constant 0 : index
    %c0_8 = arith.constant 0 : index
    %9 = vector.load %arg4[%c0_6, %c0_7, %c0_8] : memref<1x1x384xf32, #tpu.memory_space<vmem>>, vector<1x1x384xf32>
    %10 = vector.shape_cast %9 : vector<1x1x384xf32> to vector<1x384xf32>
    %11 = vector.broadcast %10 : vector<1x384xf32> to vector<16x384xf32>
    %12 = arith.addf %8, %11 : vector<16x384xf32>
    %13 = vector.shape_cast %12 : vector<16x384xf32> to vector<8x2x384xf32>
    %14 = vector.extract_strided_slice %13 {offsets = [0, 0, 0], sizes = [8, 1, 384], strides = [1, 1, 1]} : vector<8x2x384xf32> to vector<8x1x384xf32>
    %15 = vector.shape_cast %14 : vector<8x1x384xf32> to vector<8x384xf32>
    %16 = vector.extract_strided_slice %15 {offsets = [0, 0], sizes = [8, 128], strides = [1, 1]} : vector<8x384xf32> to vector<8x128xf32>
    %17 = vector.extract_strided_slice %15 {offsets = [0, 128], sizes = [8, 128], strides = [1, 1]} : vector<8x384xf32> to vector<8x128xf32>
    %18 = vector.extract_strided_slice %15 {offsets = [0, 256], sizes = [8, 128], strides = [1, 1]} : vector<8x384xf32> to vector<8x128xf32>
    %19 = vector.extract_strided_slice %16 {offsets = [0, 0], sizes = [8, 32], strides = [1, 1]} : vector<8x128xf32> to vector<8x32xf32>
    %20 = vector.extract_strided_slice %16 {offsets = [0, 32], sizes = [8, 32], strides = [1, 1]} : vector<8x128xf32> to vector<8x32xf32>
    %21 = vector.extract_strided_slice %16 {offsets = [0, 64], sizes = [8, 32], strides = [1, 1]} : vector<8x128xf32> to vector<8x32xf32>
    %22 = vector.extract_strided_slice %16 {offsets = [0, 96], sizes = [8, 32], strides = [1, 1]} : vector<8x128xf32> to vector<8x32xf32>
    %23 = vector.shape_cast %19 : vector<8x32xf32> to vector<1x8x32xf32>
    %24 = vector.shape_cast %20 : vector<8x32xf32> to vector<1x8x32xf32>
    %25 = vector.shape_cast %21 : vector<8x32xf32> to vector<1x8x32xf32>
    %26 = vector.shape_cast %22 : vector<8x32xf32> to vector<1x8x32xf32>
    %27 = tpu.concatenate %23, %24, %25, %26 in 0 : vector<1x8x32xf32>, vector<1x8x32xf32>, vector<1x8x32xf32>, vector<1x8x32xf32> -> vector<4x8x32xf32>
    %cst_9 = arith.constant 0.176776692 : f32
    %28 = vector.broadcast %cst_9 : f32 to vector<4x8x32xf32>
    %29 = arith.mulf %27, %28 : vector<4x8x32xf32>
    %30 = vector.extract_strided_slice %17 {offsets = [0, 0], sizes = [8, 32], strides = [1, 1]} : vector<8x128xf32> to vector<8x32xf32>
    %31 = vector.extract_strided_slice %17 {offsets = [0, 32], sizes = [8, 32], strides = [1, 1]} : vector<8x128xf32> to vector<8x32xf32>
    %32 = vector.extract_strided_slice %17 {offsets = [0, 64], sizes = [8, 32], strides = [1, 1]} : vector<8x128xf32> to vector<8x32xf32>
    %33 = vector.extract_strided_slice %17 {offsets = [0, 96], sizes = [8, 32], strides = [1, 1]} : vector<8x128xf32> to vector<8x32xf32>
    %34 = vector.shape_cast %30 : vector<8x32xf32> to vector<1x8x32xf32>
    %35 = vector.shape_cast %31 : vector<8x32xf32> to vector<1x8x32xf32>
    %36 = vector.shape_cast %32 : vector<8x32xf32> to vector<1x8x32xf32>
    %37 = vector.shape_cast %33 : vector<8x32xf32> to vector<1x8x32xf32>
    %38 = tpu.concatenate %34, %35, %36, %37 in 0 : vector<1x8x32xf32>, vector<1x8x32xf32>, vector<1x8x32xf32>, vector<1x8x32xf32> -> vector<4x8x32xf32>
    %39 = vector.extract_strided_slice %18 {offsets = [0, 0], sizes = [8, 32], strides = [1, 1]} : vector<8x128xf32> to vector<8x32xf32>
    %40 = vector.extract_strided_slice %18 {offsets = [0, 32], sizes = [8, 32], strides = [1, 1]} : vector<8x128xf32> to vector<8x32xf32>
    %41 = vector.extract_strided_slice %18 {offsets = [0, 64], sizes = [8, 32], strides = [1, 1]} : vector<8x128xf32> to vector<8x32xf32>
    %42 = vector.extract_strided_slice %18 {offsets = [0, 96], sizes = [8, 32], strides = [1, 1]} : vector<8x128xf32> to vector<8x32xf32>
    %43 = vector.shape_cast %39 : vector<8x32xf32> to vector<1x8x32xf32>
    %44 = vector.shape_cast %40 : vector<8x32xf32> to vector<1x8x32xf32>
    %45 = vector.shape_cast %41 : vector<8x32xf32> to vector<1x8x32xf32>
    %46 = vector.shape_cast %42 : vector<8x32xf32> to vector<1x8x32xf32>
    %47 = tpu.concatenate %43, %44, %45, %46 in 0 : vector<1x8x32xf32>, vector<1x8x32xf32>, vector<1x8x32xf32>, vector<1x8x32xf32> -> vector<4x8x32xf32>
    %48 = arith.truncf %29 : vector<4x8x32xf32> to vector<4x8x32xbf16>
    %49 = arith.truncf %38 : vector<4x8x32xf32> to vector<4x8x32xbf16>
    "tpu.trace_start"() <{level = 10 : i32, message = "hqd,hkd->hqk"}> : () -> ()
    %cst_10 = arith.constant dense<0.000000e+00> : vector<4x8x8xf32>
    %50 = tpu.matmul %48, %49, %cst_10 {dimension_numbers = #tpu.dot_dimension_numbers<[2], [2], [1], [1], [0, 0, 0, 1, 1, 1], [0], [0]>} : vector<4x8x32xbf16>, vector<4x8x32xbf16>, vector<4x8x8xf32> -> vector<4x8x8xf32>
    "tpu.trace_stop"() : () -> ()
    %cst_11 = arith.constant dense<0xFF800000> : vector<4x8xf32>
    %51 = vector.multi_reduction <maximumf>, %50, %cst_11 [2] : vector<4x8x8xf32> to vector<4x8xf32>
    %52 = vector.shape_cast %51 : vector<4x8xf32> to vector<4x8x1xf32>
    %53 = vector.broadcast %52 : vector<4x8x1xf32> to vector<4x8x8xf32>
    %54 = arith.subf %50, %53 : vector<4x8x8xf32>
    %55 = math.exp %54 : vector<4x8x8xf32>
    %cst_12 = arith.constant dense<0.000000e+00> : vector<4x8xf32>
    %56 = vector.multi_reduction <add>, %55, %cst_12 [2] : vector<4x8x8xf32> to vector<4x8xf32>
    %57 = vector.shape_cast %56 : vector<4x8xf32> to vector<4x8x1xf32>
    %58 = tpu.reciprocal %57 {approx = true} : vector<4x8x1xf32> -> vector<4x8x1xf32>
    %59 = vector.broadcast %58 : vector<4x8x1xf32> to vector<4x8x8xf32>
    %60 = arith.mulf %55, %59 : vector<4x8x8xf32>
    %61 = arith.truncf %60 : vector<4x8x8xf32> to vector<4x8x8xbf16>
    %62 = arith.truncf %47 : vector<4x8x32xf32> to vector<4x8x32xbf16>
    "tpu.trace_start"() <{level = 10 : i32, message = "hqk,hkd->hqd"}> : () -> ()
    %cst_13 = arith.constant dense<0.000000e+00> : vector<4x8x32xf32>
    %63 = tpu.matmul %61, %62, %cst_13 {dimension_numbers = #tpu.dot_dimension_numbers<[2], [1], [1], [2], [0, 0, 0, 1, 1, 2], [0], [0]>} : vector<4x8x8xbf16>, vector<4x8x32xbf16>, vector<4x8x32xf32> -> vector<4x8x32xf32>
    "tpu.trace_stop"() : () -> ()
    %64 = vector.extract_strided_slice %63 {offsets = [0, 0, 0], sizes = [1, 8, 32], strides = [1, 1, 1]} : vector<4x8x32xf32> to vector<1x8x32xf32>
    %65 = vector.shape_cast %64 : vector<1x8x32xf32> to vector<8x32xf32>
    %66 = vector.extract_strided_slice %63 {offsets = [1, 0, 0], sizes = [1, 8, 32], strides = [1, 1, 1]} : vector<4x8x32xf32> to vector<1x8x32xf32>
    %67 = vector.shape_cast %66 : vector<1x8x32xf32> to vector<8x32xf32>
    %68 = vector.extract_strided_slice %63 {offsets = [2, 0, 0], sizes = [1, 8, 32], strides = [1, 1, 1]} : vector<4x8x32xf32> to vector<1x8x32xf32>
    %69 = vector.shape_cast %68 : vector<1x8x32xf32> to vector<8x32xf32>
    %70 = vector.extract_strided_slice %63 {offsets = [3, 0, 0], sizes = [1, 8, 32], strides = [1, 1, 1]} : vector<4x8x32xf32> to vector<1x8x32xf32>
    %71 = vector.shape_cast %70 : vector<1x8x32xf32> to vector<8x32xf32>
    %72 = tpu.concatenate %65, %67, %69, %71 in 1 : vector<8x32xf32>, vector<8x32xf32>, vector<8x32xf32>, vector<8x32xf32> -> vector<8x128xf32>
    %c0_14 = arith.constant 0 : index
    %c0_15 = arith.constant 0 : index
    %c0_16 = arith.constant 0 : index
    %73 = vector.load %arg18[%c0_14, %c0_15, %c0_16] : memref<8x2x128xf32, #tpu.memory_space<vmem>>, vector<8x1x128xf32>
    %74 = vector.shape_cast %73 : vector<8x1x128xf32> to vector<8x128xf32>
    %75 = vector.shape_cast %72 : vector<8x128xf32> to vector<8x1x128xf32>
    tpu.vector_store %arg18[%c0_14, %c0_15, %c0_16], %75 {strides = array<i32>} : memref<8x2x128xf32, #tpu.memory_space<vmem>>, vector<8x1x128xf32>,
    %76 = vector.extract_strided_slice %13 {offsets = [0, 1, 0], sizes = [8, 1, 384], strides = [1, 1, 1]} : vector<8x2x384xf32> to vector<8x1x384xf32>
    %77 = vector.shape_cast %76 : vector<8x1x384xf32> to vector<8x384xf32>
    %78 = vector.extract_strided_slice %77 {offsets = [0, 0], sizes = [8, 128], strides = [1, 1]} : vector<8x384xf32> to vector<8x128xf32>
    %79 = vector.extract_strided_slice %77 {offsets = [0, 128], sizes = [8, 128], strides = [1, 1]} : vector<8x384xf32> to vector<8x128xf32>
    %80 = vector.extract_strided_slice %77 {offsets = [0, 256], sizes = [8, 128], strides = [1, 1]} : vector<8x384xf32> to vector<8x128xf32>
    %81 = vector.extract_strided_slice %78 {offsets = [0, 0], sizes = [8, 32], strides = [1, 1]} : vector<8x128xf32> to vector<8x32xf32>
    %82 = vector.extract_strided_slice %78 {offsets = [0, 32], sizes = [8, 32], strides = [1, 1]} : vector<8x128xf32> to vector<8x32xf32>
    %83 = vector.extract_strided_slice %78 {offsets = [0, 64], sizes = [8, 32], strides = [1, 1]} : vector<8x128xf32> to vector<8x32xf32>
    %84 = vector.extract_strided_slice %78 {offsets = [0, 96], sizes = [8, 32], strides = [1, 1]} : vector<8x128xf32> to vector<8x32xf32>
    %85 = vector.shape_cast %81 : vector<8x32xf32> to vector<1x8x32xf32>
    %86 = vector.shape_cast %82 : vector<8x32xf32> to vector<1x8x32xf32>
    %87 = vector.shape_cast %83 : vector<8x32xf32> to vector<1x8x32xf32>
    %88 = vector.shape_cast %84 : vector<8x32xf32> to vector<1x8x32xf32>
    %89 = tpu.concatenate %85, %86, %87, %88 in 0 : vector<1x8x32xf32>, vector<1x8x32xf32>, vector<1x8x32xf32>, vector<1x8x32xf32> -> vector<4x8x32xf32>
    %cst_17 = arith.constant 0.176776692 : f32
    %90 = vector.broadcast %cst_17 : f32 to vector<4x8x32xf32>
    %91 = arith.mulf %89, %90 : vector<4x8x32xf32>
    %92 = vector.extract_strided_slice %79 {offsets = [0, 0], sizes = [8, 32], strides = [1, 1]} : vector<8x128xf32> to vector<8x32xf32>
    %93 = vector.extract_strided_slice %79 {offsets = [0, 32], sizes = [8, 32], strides = [1, 1]} : vector<8x128xf32> to vector<8x32xf32>
    %94 = vector.extract_strided_slice %79 {offsets = [0, 64], sizes = [8, 32], strides = [1, 1]} : vector<8x128xf32> to vector<8x32xf32>
    %95 = vector.extract_strided_slice %79 {offsets = [0, 96], sizes = [8, 32], strides = [1, 1]} : vector<8x128xf32> to vector<8x32xf32>
    %96 = vector.shape_cast %92 : vector<8x32xf32> to vector<1x8x32xf32>
    %97 = vector.shape_cast %93 : vector<8x32xf32> to vector<1x8x32xf32>
    %98 = vector.shape_cast %94 : vector<8x32xf32> to vector<1x8x32xf32>
    %99 = vector.shape_cast %95 : vector<8x32xf32> to vector<1x8x32xf32>
    %100 = tpu.concatenate %96, %97, %98, %99 in 0 : vector<1x8x32xf32>, vector<1x8x32xf32>, vector<1x8x32xf32>, vector<1x8x32xf32> -> vector<4x8x32xf32>
    %101 = vector.extract_strided_slice %80 {offsets = [0, 0], sizes = [8, 32], strides = [1, 1]} : vector<8x128xf32> to vector<8x32xf32>
    %102 = vector.extract_strided_slice %80 {offsets = [0, 32], sizes = [8, 32], strides = [1, 1]} : vector<8x128xf32> to vector<8x32xf32>
    %103 = vector.extract_strided_slice %80 {offsets = [0, 64], sizes = [8, 32], strides = [1, 1]} : vector<8x128xf32> to vector<8x32xf32>
    %104 = vector.extract_strided_slice %80 {offsets = [0, 96], sizes = [8, 32], strides = [1, 1]} : vector<8x128xf32> to vector<8x32xf32>
    %105 = vector.shape_cast %101 : vector<8x32xf32> to vector<1x8x32xf32>
    %106 = vector.shape_cast %102 : vector<8x32xf32> to vector<1x8x32xf32>
    %107 = vector.shape_cast %103 : vector<8x32xf32> to vector<1x8x32xf32>
    %108 = vector.shape_cast %104 : vector<8x32xf32> to vector<1x8x32xf32>
    %109 = tpu.concatenate %105, %106, %107, %108 in 0 : vector<1x8x32xf32>, vector<1x8x32xf32>, vector<1x8x32xf32>, vector<1x8x32xf32> -> vector<4x8x32xf32>
    %110 = arith.truncf %91 : vector<4x8x32xf32> to vector<4x8x32xbf16>
    %111 = arith.truncf %100 : vector<4x8x32xf32> to vector<4x8x32xbf16>
    "tpu.trace_start"() <{level = 10 : i32, message = "hqd,hkd->hqk"}> : () -> ()
    %cst_18 = arith.constant dense<0.000000e+00> : vector<4x8x8xf32>
    %112 = tpu.matmul %110, %111, %cst_18 {dimension_numbers = #tpu.dot_dimension_numbers<[2], [2], [1], [1], [0, 0, 0, 1, 1, 1], [0], [0]>} : vector<4x8x32xbf16>, vector<4x8x32xbf16>, vector<4x8x8xf32> -> vector<4x8x8xf32>
    "tpu.trace_stop"() : () -> ()
    %cst_19 = arith.constant dense<0xFF800000> : vector<4x8xf32>
    %113 = vector.multi_reduction <maximumf>, %112, %cst_19 [2] : vector<4x8x8xf32> to vector<4x8xf32>
    %114 = vector.shape_cast %113 : vector<4x8xf32> to vector<4x8x1xf32>
    %115 = vector.broadcast %114 : vector<4x8x1xf32> to vector<4x8x8xf32>
    %116 = arith.subf %112, %115 : vector<4x8x8xf32>
    %117 = math.exp %116 : vector<4x8x8xf32>
    %cst_20 = arith.constant dense<0.000000e+00> : vector<4x8xf32>
    %118 = vector.multi_reduction <add>, %117, %cst_20 [2] : vector<4x8x8xf32> to vector<4x8xf32>
    %119 = vector.shape_cast %118 : vector<4x8xf32> to vector<4x8x1xf32>
    %120 = tpu.reciprocal %119 {approx = true} : vector<4x8x1xf32> -> vector<4x8x1xf32>
    %121 = vector.broadcast %120 : vector<4x8x1xf32> to vector<4x8x8xf32>
    %122 = arith.mulf %117, %121 : vector<4x8x8xf32>
    %123 = arith.truncf %122 : vector<4x8x8xf32> to vector<4x8x8xbf16>
    %124 = arith.truncf %109 : vector<4x8x32xf32> to vector<4x8x32xbf16>
    "tpu.trace_start"() <{level = 10 : i32, message = "hqk,hkd->hqd"}> : () -> ()
    %cst_21 = arith.constant dense<0.000000e+00> : vector<4x8x32xf32>
    %125 = tpu.matmul %123, %124, %cst_21 {dimension_numbers = #tpu.dot_dimension_numbers<[2], [1], [1], [2], [0, 0, 0, 1, 1, 2], [0], [0]>} : vector<4x8x8xbf16>, vector<4x8x32xbf16>, vector<4x8x32xf32> -> vector<4x8x32xf32>
    "tpu.trace_stop"() : () -> ()
    %126 = vector.extract_strided_slice %125 {offsets = [0, 0, 0], sizes = [1, 8, 32], strides = [1, 1, 1]} : vector<4x8x32xf32> to vector<1x8x32xf32>
    %127 = vector.shape_cast %126 : vector<1x8x32xf32> to vector<8x32xf32>
    %128 = vector.extract_strided_slice %125 {offsets = [1, 0, 0], sizes = [1, 8, 32], strides = [1, 1, 1]} : vector<4x8x32xf32> to vector<1x8x32xf32>
    %129 = vector.shape_cast %128 : vector<1x8x32xf32> to vector<8x32xf32>
    %130 = vector.extract_strided_slice %125 {offsets = [2, 0, 0], sizes = [1, 8, 32], strides = [1, 1, 1]} : vector<4x8x32xf32> to vector<1x8x32xf32>
    %131 = vector.shape_cast %130 : vector<1x8x32xf32> to vector<8x32xf32>
    %132 = vector.extract_strided_slice %125 {offsets = [3, 0, 0], sizes = [1, 8, 32], strides = [1, 1, 1]} : vector<4x8x32xf32> to vector<1x8x32xf32>
    %133 = vector.shape_cast %132 : vector<1x8x32xf32> to vector<8x32xf32>
    %134 = tpu.concatenate %127, %129, %131, %133 in 1 : vector<8x32xf32>, vector<8x32xf32>, vector<8x32xf32>, vector<8x32xf32> -> vector<8x128xf32>
    %c0_22 = arith.constant 0 : index
    %c1 = arith.constant 1 : index
    %c0_23 = arith.constant 0 : index
    %135 = vector.load %arg18[%c0_22, %c1, %c0_23] : memref<8x2x128xf32, #tpu.memory_space<vmem>>, vector<8x1x128xf32>
    %136 = vector.shape_cast %135 : vector<8x1x128xf32> to vector<8x128xf32>
    %137 = vector.shape_cast %134 : vector<8x128xf32> to vector<8x1x128xf32>
    tpu.vector_store %arg18[%c0_22, %c1, %c0_23], %137 {strides = array<i32>} : memref<8x2x128xf32, #tpu.memory_space<vmem>>, vector<8x1x128xf32>,
    %c0_24 = arith.constant 0 : index
    %c0_25 = arith.constant 0 : index
    %c0_26 = arith.constant 0 : index
    %138 = vector.load %arg18[%c0_24, %c0_25, %c0_26] : memref<8x2x128xf32, #tpu.memory_space<vmem>>, vector<8x2x128xf32>
    %139 = vector.shape_cast %138 : vector<8x2x128xf32> to vector<16x128xf32>
    %140 = arith.truncf %139 : vector<16x128xf32> to vector<16x128xbf16>
    %c0_27 = arith.constant 0 : index
    %c0_28 = arith.constant 0 : index
    %c0_29 = arith.constant 0 : index
    %141 = vector.load %arg5[%c0_27, %c0_28, %c0_29] : memref<1x128x128xbf16, #tpu.memory_space<vmem>>, vector<1x128x128xbf16>
    %142 = vector.shape_cast %141 : vector<1x128x128xbf16> to vector<128x128xbf16>
    %cst_30 = arith.constant dense<0.000000e+00> : vector<16x128xf32>
    %143 = tpu.matmul %140, %142, %cst_30 {dimension_numbers = #tpu.dot_dimension_numbers<[1], [0], [0], [1], [0, 0, 1, 1], [], []>} : vector<16x128xbf16>, vector<128x128xbf16>, vector<16x128xf32> -> vector<16x128xf32>
    %c0_31 = arith.constant 0 : index
    %c0_32 = arith.constant 0 : index
    %c0_33 = arith.constant 0 : index
    %144 = vector.load %arg6[%c0_31, %c0_32, %c0_33] : memref<1x1x128xf32, #tpu.memory_space<vmem>>, vector<1x1x128xf32>
    %145 = vector.shape_cast %144 : vector<1x1x128xf32> to vector<1x128xf32>
    %146 = vector.broadcast %145 : vector<1x128xf32> to vector<16x128xf32>
    %147 = arith.addf %143, %146 : vector<16x128xf32>
    %148 = arith.addf %4, %147 : vector<16x128xf32>
    %c0_34 = arith.constant 0 : index
    %c0_35 = arith.constant 0 : index
    %c0_36 = arith.constant 0 : index
    %149 = vector.load %arg7[%c0_34, %c0_35, %c0_36] : memref<1x1x128xf32, #tpu.memory_space<vmem>>, vector<1x1x128xf32>
    %150 = vector.shape_cast %149 : vector<1x1x128xf32> to vector<1x128xf32>
    %c0_37 = arith.constant 0 : index
    %c0_38 = arith.constant 0 : index
    %c0_39 = arith.constant 0 : index
    %151 = vector.load %arg8[%c0_37, %c0_38, %c0_39] : memref<1x1x128xf32, #tpu.memory_space<vmem>>, vector<1x1x128xf32>
    %152 = vector.shape_cast %151 : vector<1x1x128xf32> to vector<1x128xf32>
    %cst_40 = arith.constant dense<0.000000e+00> : vector<16xf32>
    %153 = vector.multi_reduction <add>, %148, %cst_40 [1] : vector<16x128xf32> to vector<16xf32>
    %154 = vector.shape_cast %153 : vector<16xf32> to vector<16x1xf32>
    %cst_41 = arith.constant 1.280000e+02 : f32
    %155 = vector.broadcast %cst_41 : f32 to vector<16x1xf32>
    %156 = arith.divf %154, %155 : vector<16x1xf32>
    %157 = vector.broadcast %156 : vector<16x1xf32> to vector<16x128xf32>
    %158 = arith.subf %148, %157 : vector<16x128xf32>
    %159 = arith.mulf %158, %158 : vector<16x128xf32>
    %cst_42 = arith.constant dense<0.000000e+00> : vector<16xf32>
    %160 = vector.multi_reduction <add>, %159, %cst_42 [1] : vector<16x128xf32> to vector<16xf32>
    %161 = vector.shape_cast %160 : vector<16xf32> to vector<16x1xf32>
    %cst_43 = arith.constant 1.280000e+02 : f32
    %162 = vector.broadcast %cst_43 : f32 to vector<16x1xf32>
    %163 = arith.divf %161, %162 : vector<16x1xf32>
    %164 = vector.broadcast %156 : vector<16x1xf32> to vector<16x128xf32>
    %165 = arith.subf %148, %164 : vector<16x128xf32>
    %cst_44 = arith.constant 9.99999974E-6 : f32
    %166 = vector.broadcast %cst_44 : f32 to vector<16x1xf32>
    %167 = arith.addf %163, %166 : vector<16x1xf32>
    %168 = math.rsqrt %167 : vector<16x1xf32>
    %169 = vector.broadcast %168 : vector<16x1xf32> to vector<16x128xf32>
    %170 = arith.mulf %165, %169 : vector<16x128xf32>
    %171 = vector.broadcast %150 : vector<1x128xf32> to vector<16x128xf32>
    %172 = arith.mulf %170, %171 : vector<16x128xf32>
    %173 = vector.broadcast %152 : vector<1x128xf32> to vector<16x128xf32>
    %174 = arith.addf %172, %173 : vector<16x128xf32>
    %175 = arith.truncf %174 : vector<16x128xf32> to vector<16x128xbf16>
    %c0_45 = arith.constant 0 : index
    %c0_46 = arith.constant 0 : index
    %c0_47 = arith.constant 0 : index
    %176 = vector.load %arg9[%c0_45, %c0_46, %c0_47] : memref<1x128x256xbf16, #tpu.memory_space<vmem>>, vector<1x128x256xbf16>
    %177 = vector.shape_cast %176 : vector<1x128x256xbf16> to vector<128x256xbf16>
    %cst_48 = arith.constant dense<0.000000e+00> : vector<16x256xf32>
    %178 = tpu.matmul %175, %177, %cst_48 {dimension_numbers = #tpu.dot_dimension_numbers<[1], [0], [0], [1], [0, 0, 1, 1], [], []>} : vector<16x128xbf16>, vector<128x256xbf16>, vector<16x256xf32> -> vector<16x256xf32>
    %c0_49 = arith.constant 0 : index
    %c0_50 = arith.constant 0 : index
    %c0_51 = arith.constant 0 : index
    %179 = vector.load %arg10[%c0_49, %c0_50, %c0_51] : memref<1x1x256xf32, #tpu.memory_space<vmem>>, vector<1x1x256xf32>
    %180 = vector.shape_cast %179 : vector<1x1x256xf32> to vector<1x256xf32>
    %181 = vector.broadcast %180 : vector<1x256xf32> to vector<16x256xf32>
    %182 = arith.addf %178, %181 : vector<16x256xf32>
    %cst_52 = arith.constant 0.000000e+00 : f32
    %183 = vector.broadcast %cst_52 : f32 to vector<16x256xf32>
    %184 = arith.maximumf %182, %183 : vector<16x256xf32>
    %185 = arith.truncf %184 : vector<16x256xf32> to vector<16x256xbf16>
    %c0_53 = arith.constant 0 : index
    %c0_54 = arith.constant 0 : index
    %c0_55 = arith.constant 0 : index
    %186 = vector.load %arg11[%c0_53, %c0_54, %c0_55] : memref<1x256x128xbf16, #tpu.memory_space<vmem>>, vector<1x256x128xbf16>
    %187 = vector.shape_cast %186 : vector<1x256x128xbf16> to vector<256x128xbf16>
    %cst_56 = arith.constant dense<0.000000e+00> : vector<16x128xf32>
    %188 = tpu.matmul %185, %187, %cst_56 {dimension_numbers = #tpu.dot_dimension_numbers<[1], [0], [0], [1], [0, 0, 1, 1], [], []>} : vector<16x256xbf16>, vector<256x128xbf16>, vector<16x128xf32> -> vector<16x128xf32>
    %c0_57 = arith.constant 0 : index
    %c0_58 = arith.constant 0 : index
    %c0_59 = arith.constant 0 : index
    %189 = vector.load %arg12[%c0_57, %c0_58, %c0_59] : memref<1x1x128xf32, #tpu.memory_space<vmem>>, vector<1x1x128xf32>
    %190 = vector.shape_cast %189 : vector<1x1x128xf32> to vector<1x128xf32>
    %191 = vector.broadcast %190 : vector<1x128xf32> to vector<16x128xf32>
    %192 = arith.addf %188, %191 : vector<16x128xf32>
    %193 = arith.addf %174, %192 : vector<16x128xf32>
    %c0_60 = arith.constant 0 : index
    %c0_61 = arith.constant 0 : index
    %c0_62 = arith.constant 0 : index
    %194 = vector.load %arg13[%c0_60, %c0_61, %c0_62] : memref<1x1x128xf32, #tpu.memory_space<vmem>>, vector<1x1x128xf32>
    %195 = vector.shape_cast %194 : vector<1x1x128xf32> to vector<1x128xf32>
    %c0_63 = arith.constant 0 : index
    %c0_64 = arith.constant 0 : index
    %c0_65 = arith.constant 0 : index
    %196 = vector.load %arg14[%c0_63, %c0_64, %c0_65] : memref<1x1x128xf32, #tpu.memory_space<vmem>>, vector<1x1x128xf32>
    %197 = vector.shape_cast %196 : vector<1x1x128xf32> to vector<1x128xf32>
    %cst_66 = arith.constant dense<0.000000e+00> : vector<16xf32>
    %198 = vector.multi_reduction <add>, %193, %cst_66 [1] : vector<16x128xf32> to vector<16xf32>
    %199 = vector.shape_cast %198 : vector<16xf32> to vector<16x1xf32>
    %cst_67 = arith.constant 1.280000e+02 : f32
    %200 = vector.broadcast %cst_67 : f32 to vector<16x1xf32>
    %201 = arith.divf %199, %200 : vector<16x1xf32>
    %202 = vector.broadcast %201 : vector<16x1xf32> to vector<16x128xf32>
    %203 = arith.subf %193, %202 : vector<16x128xf32>
    %204 = arith.mulf %203, %203 : vector<16x128xf32>
    %cst_68 = arith.constant dense<0.000000e+00> : vector<16xf32>
    %205 = vector.multi_reduction <add>, %204, %cst_68 [1] : vector<16x128xf32> to vector<16xf32>
    %206 = vector.shape_cast %205 : vector<16xf32> to vector<16x1xf32>
    %cst_69 = arith.constant 1.280000e+02 : f32
    %207 = vector.broadcast %cst_69 : f32 to vector<16x1xf32>
    %208 = arith.divf %206, %207 : vector<16x1xf32>
    %209 = vector.broadcast %201 : vector<16x1xf32> to vector<16x128xf32>
    %210 = arith.subf %193, %209 : vector<16x128xf32>
    %cst_70 = arith.constant 9.99999974E-6 : f32
    %211 = vector.broadcast %cst_70 : f32 to vector<16x1xf32>
    %212 = arith.addf %208, %211 : vector<16x1xf32>
    %213 = math.rsqrt %212 : vector<16x1xf32>
    %214 = vector.broadcast %213 : vector<16x1xf32> to vector<16x128xf32>
    %215 = arith.mulf %210, %214 : vector<16x128xf32>
    %216 = vector.broadcast %195 : vector<1x128xf32> to vector<16x128xf32>
    %217 = arith.mulf %215, %216 : vector<16x128xf32>
    %218 = vector.broadcast %197 : vector<1x128xf32> to vector<16x128xf32>
    %219 = arith.addf %217, %218 : vector<16x128xf32>
    %c1_i32 = arith.constant 1 : i32
    %220 = arith.cmpi ne, %arg1, %c1_i32 : i32
    %221 = arith.extui %220 : i1 to i32
    %c0_i32_71 = arith.constant 0 : i32
    %222 = arith.cmpi ne, %221, %c0_i32_71 : i32
    scf.if %222 {
      %226 = vector.shape_cast %219 : vector<16x128xf32> to vector<8x2x128xf32>
      %c0_74 = arith.constant 0 : index
      %c0_75 = arith.constant 0 : index
      %c0_76 = arith.constant 0 : index
      %227 = vector.load %arg17[%c0_74, %c0_75, %c0_76] : memref<8x2x128xf32, #tpu.memory_space<vmem>>, vector<8x2x128xf32>
      tpu.vector_store %arg17[%c0_74, %c0_75, %c0_76], %226 {strides = array<i32>} : memref<8x2x128xf32, #tpu.memory_space<vmem>>, vector<8x2x128xf32>,
    } else {
    }
    %c1_i32_72 = arith.constant 1 : i32
    %223 = arith.cmpi eq, %arg1, %c1_i32_72 : i32
    %224 = arith.extui %223 : i1 to i32
    %c0_i32_73 = arith.constant 0 : i32
    %225 = arith.cmpi ne, %224, %c0_i32_73 : i32
    scf.if %225 {
      %c0_74 = arith.constant 0 : index
      %c0_75 = arith.constant 0 : index
      %c0_76 = arith.constant 0 : index
      %226 = vector.load %arg15[%c0_74, %c0_75, %c0_76] : memref<1x1x128xf32, #tpu.memory_space<vmem>>, vector<1x1x128xf32>
      %227 = vector.shape_cast %226 : vector<1x1x128xf32> to vector<1x128xf32>
      %c0_77 = arith.constant 0 : index
      %c0_78 = arith.constant 0 : index
      %c0_79 = arith.constant 0 : index
      %228 = vector.load %arg16[%c0_77, %c0_78, %c0_79] : memref<1x1x128xf32, #tpu.memory_space<vmem>>, vector<1x1x128xf32>
      %229 = vector.shape_cast %228 : vector<1x1x128xf32> to vector<1x128xf32>
      %cst_80 = arith.constant dense<0.000000e+00> : vector<16xf32>
      %230 = vector.multi_reduction <add>, %219, %cst_80 [1] : vector<16x128xf32> to vector<16xf32>
      %231 = vector.shape_cast %230 : vector<16xf32> to vector<16x1xf32>
      %cst_81 = arith.constant 1.280000e+02 : f32
      %232 = vector.broadcast %cst_81 : f32 to vector<16x1xf32>
      %233 = arith.divf %231, %232 : vector<16x1xf32>
      %234 = vector.broadcast %233 : vector<16x1xf32> to vector<16x128xf32>
      %235 = arith.subf %219, %234 : vector<16x128xf32>
      %236 = arith.mulf %235, %235 : vector<16x128xf32>
      %cst_82 = arith.constant dense<0.000000e+00> : vector<16xf32>
      %237 = vector.multi_reduction <add>, %236, %cst_82 [1] : vector<16x128xf32> to vector<16xf32>
      %238 = vector.shape_cast %237 : vector<16xf32> to vector<16x1xf32>
      %cst_83 = arith.constant 1.280000e+02 : f32
      %239 = vector.broadcast %cst_83 : f32 to vector<16x1xf32>
      %240 = arith.divf %238, %239 : vector<16x1xf32>
      %241 = vector.broadcast %233 : vector<16x1xf32> to vector<16x128xf32>
      %242 = arith.subf %219, %241 : vector<16x128xf32>
      %cst_84 = arith.constant 9.99999974E-6 : f32
      %243 = vector.broadcast %cst_84 : f32 to vector<16x1xf32>
      %244 = arith.addf %240, %243 : vector<16x1xf32>
      %245 = math.rsqrt %244 : vector<16x1xf32>
      %246 = vector.broadcast %245 : vector<16x1xf32> to vector<16x128xf32>
      %247 = arith.mulf %242, %246 : vector<16x128xf32>
      %248 = vector.broadcast %227 : vector<1x128xf32> to vector<16x128xf32>
      %249 = arith.mulf %247, %248 : vector<16x128xf32>
      %250 = vector.broadcast %229 : vector<1x128xf32> to vector<16x128xf32>
      %251 = arith.addf %249, %250 : vector<16x128xf32>
      %252 = vector.shape_cast %251 : vector<16x128xf32> to vector<8x2x128xf32>
      %c0_85 = arith.constant 0 : index
      %c0_86 = arith.constant 0 : index
      %c0_87 = arith.constant 0 : index
      %253 = vector.load %arg17[%c0_85, %c0_86, %c0_87] : memref<8x2x128xf32, #tpu.memory_space<vmem>>, vector<8x2x128xf32>
      tpu.vector_store %arg17[%c0_85, %c0_86, %c0_87], %252 {strides = array<i32>} : memref<8x2x128xf32, #tpu.memory_space<vmem>>, vector<8x2x128xf32>,
    } else {
    }
    return
  }
  func.func @transform_0(%arg0: i32, %arg1: i32) -> (i32, i32, i32) {
    %c0_i32 = arith.constant 0 : i32
    %c0_i32_0 = arith.constant 0 : i32
    %c0_i32_1 = arith.constant 0 : i32
    return %c0_i32, %arg0, %c0_i32_0 : i32, i32, i32
  }
  func.func @transform_1(%arg0: i32, %arg1: i32) -> (i32, i32, i32) {
    %c0_i32 = arith.constant 0 : i32
    %c0_i32_0 = arith.constant 0 : i32
    %c0_i32_1 = arith.constant 0 : i32
    return %arg1, %c0_i32, %c0_i32_0 : i32, i32, i32
  }
  func.func @transform_2(%arg0: i32, %arg1: i32) -> (i32, i32, i32) {
    %c0_i32 = arith.constant 0 : i32
    %c0_i32_0 = arith.constant 0 : i32
    %c0_i32_1 = arith.constant 0 : i32
    return %arg1, %c0_i32, %c0_i32_0 : i32, i32, i32
  }
  func.func @transform_3(%arg0: i32, %arg1: i32) -> (i32, i32, i32) {
    %c0_i32 = arith.constant 0 : i32
    %c0_i32_0 = arith.constant 0 : i32
    %c0_i32_1 = arith.constant 0 : i32
    return %arg1, %c0_i32, %c0_i32_0 : i32, i32, i32
  }
  func.func @transform_4(%arg0: i32, %arg1: i32) -> (i32, i32, i32) {
    %c0_i32 = arith.constant 0 : i32
    %c0_i32_0 = arith.constant 0 : i32
    %c0_i32_1 = arith.constant 0 : i32
    return %arg1, %c0_i32, %c0_i32_0 : i32, i32, i32
  }
  func.func @transform_5(%arg0: i32, %arg1: i32) -> (i32, i32, i32) {
    %c0_i32 = arith.constant 0 : i32
    %c0_i32_0 = arith.constant 0 : i32
    %c0_i32_1 = arith.constant 0 : i32
    return %arg1, %c0_i32, %c0_i32_0 : i32, i32, i32
  }
  func.func @transform_6(%arg0: i32, %arg1: i32) -> (i32, i32, i32) {
    %c0_i32 = arith.constant 0 : i32
    %c0_i32_0 = arith.constant 0 : i32
    %c0_i32_1 = arith.constant 0 : i32
    return %arg1, %c0_i32, %c0_i32_0 : i32, i32, i32
  }
  func.func @transform_7(%arg0: i32, %arg1: i32) -> (i32, i32, i32) {
    %c0_i32 = arith.constant 0 : i32
    %c0_i32_0 = arith.constant 0 : i32
    %c0_i32_1 = arith.constant 0 : i32
    return %arg1, %c0_i32, %c0_i32_0 : i32, i32, i32
  }
  func.func @transform_8(%arg0: i32, %arg1: i32) -> (i32, i32, i32) {
    %c0_i32 = arith.constant 0 : i32
    %c0_i32_0 = arith.constant 0 : i32
    %c0_i32_1 = arith.constant 0 : i32
    return %arg1, %c0_i32, %c0_i32_0 : i32, i32, i32
  }
  func.func @transform_9(%arg0: i32, %arg1: i32) -> (i32, i32, i32) {
    %c0_i32 = arith.constant 0 : i32
    %c0_i32_0 = arith.constant 0 : i32
    %c0_i32_1 = arith.constant 0 : i32
    return %arg1, %c0_i32, %c0_i32_0 : i32, i32, i32
  }
  func.func @transform_10(%arg0: i32, %arg1: i32) -> (i32, i32, i32) {
    %c0_i32 = arith.constant 0 : i32
    %c0_i32_0 = arith.constant 0 : i32
    %c0_i32_1 = arith.constant 0 : i32
    return %arg1, %c0_i32, %c0_i32_0 : i32, i32, i32
  }
  func.func @transform_11(%arg0: i32, %arg1: i32) -> (i32, i32, i32) {
    %c0_i32 = arith.constant 0 : i32
    %c0_i32_0 = arith.constant 0 : i32
    %c0_i32_1 = arith.constant 0 : i32
    return %arg1, %c0_i32, %c0_i32_0 : i32, i32, i32
  }
  func.func @transform_12(%arg0: i32, %arg1: i32) -> (i32, i32, i32) {
    %c0_i32 = arith.constant 0 : i32
    %c0_i32_0 = arith.constant 0 : i32
    %c0_i32_1 = arith.constant 0 : i32
    return %arg1, %c0_i32, %c0_i32_0 : i32, i32, i32
  }
  func.func @transform_13(%arg0: i32, %arg1: i32) -> (i32, i32, i32) {
    %c0_i32 = arith.constant 0 : i32
    %c0_i32_0 = arith.constant 0 : i32
    %c0_i32_1 = arith.constant 0 : i32
    %c0_i32_2 = arith.constant 0 : i32
    return %c0_i32, %c0_i32_0, %c0_i32_1 : i32, i32, i32
  }
  func.func @transform_14(%arg0: i32, %arg1: i32) -> (i32, i32, i32) {
    %c0_i32 = arith.constant 0 : i32
    %c0_i32_0 = arith.constant 0 : i32
    %c0_i32_1 = arith.constant 0 : i32
    %c0_i32_2 = arith.constant 0 : i32
    return %c0_i32, %c0_i32_0, %c0_i32_1 : i32, i32, i32
  }
  func.func @transform_15(%arg0: i32, %arg1: i32) -> (i32, i32, i32) {
    %c0_i32 = arith.constant 0 : i32
    %c0_i32_0 = arith.constant 0 : i32
    %c0_i32_1 = arith.constant 0 : i32
    return %c0_i32, %arg0, %c0_i32_0 : i32, i32, i32
  }
}

</mosaic_0001>

<llo_original>
// kernel: tpu_custom_call.1
$region0: #{tpu_custom_call.1}
  #allocation0 [shape = 'u32[]', space=smem, size = 0x4, offset = 0x4, fixed_abs, tag = 'smem constant byte address 0x4 - core index']
  #allocation1 [shape = 'u32[72,128]{1,0:T(1,128)}', space=vmem, size = 0x9000, scoped, tag = 'internal scratch']
  #allocation2 [shape = 'f32[8,2,128]{2,1,0:T(2,128)}', space=vmem, size = 0x2000, scoped, tag = 'scratch operand']
  %s0 = inlined_call_operand.hbm [shape: f32[8,2,128], index: 0, kind: input, shape index: {}]
  %s1 = inlined_call_operand.hbm [shape: bf16[2,128,384], index: 1, kind: input, shape index: {}]
  %s2 = inlined_call_operand.hbm [shape: f32[2,1,384], index: 2, kind: input, shape index: {}]
  %s3 = inlined_call_operand.hbm [shape: bf16[2,128,128], index: 3, kind: input, shape index: {}]
  %s4 = inlined_call_operand.vmem [shape: f32[2,1,128], index: 4, kind: input, shape index: {}]
  %s5 = inlined_call_operand.hbm [shape: f32[2,1,128], index: 5, kind: input, shape index: {}]
  %s6 = inlined_call_operand.hbm [shape: f32[2,1,128], index: 6, kind: input, shape index: {}]
  %s7 = inlined_call_operand.hbm [shape: bf16[2,128,256], index: 7, kind: input, shape index: {}]
  %s8 = inlined_call_operand.vmem [shape: f32[2,1,256], index: 8, kind: input, shape index: {}]
  %s9 = inlined_call_operand.hbm [shape: bf16[2,256,128], index: 9, kind: input, shape index: {}]
  %s10 = inlined_call_operand.vmem [shape: f32[2,1,128], index: 10, kind: input, shape index: {}]
  %s11 = inlined_call_operand.vmem [shape: f32[2,1,128], index: 11, kind: input, shape index: {}]
  %s12 = inlined_call_operand.hbm [shape: f32[2,1,128], index: 12, kind: input, shape index: {}]
  %s13 = inlined_call_operand.vmem [shape: f32[1,1,128], index: 13, kind: input, shape index: {}]
  %s14 = inlined_call_operand.vmem [shape: f32[1,1,128], index: 14, kind: input, shape index: {}]
  %s15 = inlined_call_operand.hbm [shape: f32[8,2,128], index: 15, kind: output, shape index: {}]
  %s16 = sld [smem:[#allocation0]]
  $region141: #{tpu_custom_call.1} parent=0
    _
  %s18 = ssub.s32 1, %s16
  %s19 = scalar_select 0, %s18, %s16
  $region1: #{tpu_custom_call.1} parent=0
    #allocation3 [shape = 'u8[8192]{0}', space=vmem, size = 0x2000, scoped, tag = 'input window, operand 0, single buffered']
    #allocation4 [shape = 's32[2]{0}', space=sflag, size = 0x8, scoped, tag = 'scoped memory for tpu_custom_call.1']
    #allocation5 [shape = 's32[2]{0}', space=sflag, size = 0x8, scoped, tag = 'scoped memory for tpu_custom_call.1']
    #allocation6 [shape = 'u8[196608]{0}', space=vmem, size = 0x30000, scoped, tag = 'input window, operand 1']
    #allocation7 [shape = 's32[2]{0}', space=sflag, size = 0x8, scoped, tag = 'scoped memory for tpu_custom_call.1']
    #allocation8 [shape = 'u8[3072]{0}', space=vmem, size = 0xc00, scoped, tag = 'input window, operand 2']
    #allocation9 [shape = 'u8[65536]{0}', space=vmem, size = 0x10000, scoped, tag = 'input window, operand 3']
    #allocation10 [shape = 's32[2]{0}', space=sflag, size = 0x8, scoped, tag = 'scoped memory for tpu_custom_call.1']
    #allocation11 [shape = 'u8[1024]{0}', space=vmem, size = 0x400, scoped, tag = 'input window, operand 5']
    #allocation12 [shape = 'u8[1024]{0}', space=vmem, size = 0x400, scoped, tag = 'input window, operand 6']
    #allocation13 [shape = 's32[2]{0}', space=sflag, size = 0x8, scoped, tag = 'scoped memory for tpu_custom_call.1']
    #allocation14 [shape = 'u8[131072]{0}', space=vmem, size = 0x20000, scoped, tag = 'input window, operand 7']
    #allocation15 [shape = 'u8[131072]{0}', space=vmem, size = 0x20000, scoped, tag = 'input window, operand 9']
    #allocation16 [shape = 's32[2]{0}', space=sflag, size = 0x8, scoped, tag = 'scoped memory for tpu_custom_call.1']
    #allocation17 [shape = 'u8[1024]{0}', space=vmem, size = 0x400, scoped, tag = 'input window, operand 12']
    #allocation18 [shape = 'u8[8192]{0}', space=vmem, size = 0x2000, scoped, tag = 'output window, operand 0, single buffered']
    %20 = vsyncpa [#allocation4], 0
    %21 = vsyncpa [#allocation7], 0
    %s22 = scalar_lea.sflag [#allocation7], 1
    %23 = vsyncpa %s22, 0
    %24 = vsyncpa [#allocation10], 0
    %s25 = scalar_lea.sflag [#allocation10], 1
    %26 = vsyncpa %s25, 0
    %27 = vsyncpa [#allocation13], 0
    %s28 = scalar_lea.sflag [#allocation13], 1
    %29 = vsyncpa %s28, 0
    %30 = vsyncpa [#allocation16], 0
    %s31 = scalar_lea.sflag [#allocation16], 1
    %32 = vsyncpa %s31, 0
    %33 = vsyncpa [#allocation5], 0
    loop: start=0, step=1, limit=4
    $region2: #{tpu_custom_call.1} parent=1 // loop_pre_header
      _
    $region3: #{tpu_custom_call.1} parent=1 // loop_header
      %s35 = sphi 0, %s39
      %p36 = scmp.ge.s32.totalorder %s35, 4
      %s42 = sphi 0, %s54
      %s43 = sphi 0, %s50
      %s44 = sphi 0, %s42
      %s45 = sphi 0, %s43
      %s46 = sphi 0, %s44
      %s47 = sphi 0, %s45
      %s57 = sphi 0, %s59
      %s60 = sphi 0, %s57
      %s61 = sphi 0, %s60
      %s77 = sphi 0, %s61
      %s83 = sphi 0, %s85
      %s86 = sphi 0, %s83
      %s87 = sphi 0, %s86
      %s103 = sphi 0, %s87
      %s109 = sphi 0, %s111
      %s112 = sphi 0, %s109
      %s113 = sphi 0, %s112
      %s129 = sphi 0, %s113
      %s135 = sphi 0, %s137
      %s138 = sphi 0, %s135
      %s139 = sphi 0, %s138
      %s155 = sphi 0, %s139
      %s161 = sphi 0, %s163
      %s164 = sphi 0, %s161
      %s165 = sphi 0, %s164
      %s181 = sphi 0, %s165
      %s187 = sphi 0, %s189
      %s190 = sphi 0, %s187
      %s191 = sphi 0, %s190
      %s207 = sphi 0, %s191
      %s213 = sphi 0, %s215
      %s216 = sphi 0, %s213
      %s217 = sphi 0, %s216
      %s233 = sphi 0, %s217
      %s239 = sphi 0, %s241
      %s242 = sphi 0, %s239
      %s243 = sphi 0, %s242
      %s259 = sphi 0, %s243
      %s265 = sphi 0, %s267
      %s268 = sphi 0, %s265
      %s269 = sphi 0, %s268
      %s285 = sphi 0, %s269
      %s291 = sphi 0, %s293
      %s294 = sphi 0, %s291
      %s295 = sphi 0, %s294
      %s311 = sphi 0, %s295
      %s317 = sphi 0, %s319
      %s320 = sphi 0, %s317
      %s321 = sphi 0, %s320
      %s337 = sphi 0, %s321
      %s343 = sphi 0, %s345
      %s346 = sphi 0, %s343
      %s347 = sphi 0, %s346
      %s363 = sphi 0, %s347
      %s369 = sphi 0, %s371
      %s372 = sphi 0, %s369
      %s373 = sphi 0, %s372
      %s389 = sphi 0, %s373
      %s393 = sphi 0, %s393
      %s395 = sphi 0, %s393
      %s396 = sphi 0, %s395
      %s410 = sphi 0, %s396
      %s414 = sphi 0, %s414
      %s416 = sphi 0, %s414
      %s417 = sphi 0, %s416
      %s431 = sphi 0, %s417
      %s437 = sphi 0, %s439
      %s440 = sphi 0, %s437
      %s441 = sphi 0, %s440
      %s457 = sphi 0, %s441
    $region4: #{tpu_custom_call.1} parent=1 // loop_header_branch
      %38 = sbr.rel (%p36) target = $region8
    $region5: #{tpu_custom_call.1} parent=1 // loop_body
      %s40 = ssub.s32 %s35, 1
      %s41 = ssub.s32 %s35, 2
      %s48 = sadd.s32 1, %s43
      %p49 = scmp.ge.s32.totalorder %s48, 2
      %s50 = scalar_select %p49, 0, %s48
      %s51 = sadd.s32 1, %s42
      %s52 = scalar_select %p49, %s51, %s42
      %p53 = scmp.ge.s32.totalorder %s52, 1
      %s54 = scalar_select %p53, 0, %s52
      %s55 = ssub.s32 %s42, %s54
      %p56 = scmp.eq.s32.totalorder %s55, 0
      %s58 = sadd.s32 %s57, 1
      %s59 = scalar_select %p56, %s57, %s58
      %p62 = pneg %p56
      %p63 = scmp.eq.s32.totalorder %s35, 1
      %p64 = por %p62, %p63
      %p65 = scmp.ne.s32.totalorder %s57, %s60
      %p66 = scmp.eq.s32.totalorder %s35, 0
      %p67 = por %p65, %p66
      %p68 = scmp.ne.s32.totalorder %s57, %s60
      %p69 = scmp.eq.s32.totalorder %s40, 1
      %p70 = por %p68, %p69
      %p71 = scmp.ne.s32.totalorder %s60, %s61
      %p72 = scmp.eq.s32.totalorder %s40, 0
      %p73 = por %p71, %p72
      %p74 = scmp.ne.s32.totalorder %s60, %s61
      %p75 = scmp.eq.s32.totalorder %s41, 1
      %p76 = por %p74, %p75
      %p78 = scmp.ne.s32.totalorder %s61, %s77
      %p79 = scmp.eq.s32.totalorder %s41, 0
      %p80 = por %p78, %p79
      %s81 = ssub.s32 %s43, %s50
      %p82 = scmp.eq.s32.totalorder %s81, 0
      %s84 = sadd.s32 %s83, 1
      %s85 = scalar_select %p82, %s83, %s84
      %p88 = pneg %p82
      %p89 = scmp.eq.s32.totalorder %s35, 1
      %p90 = por %p88, %p89
      %p91 = scmp.ne.s32.totalorder %s83, %s86
      %p92 = scmp.eq.s32.totalorder %s35, 0
      %p93 = por %p91, %p92
      %p94 = scmp.ne.s32.totalorder %s83, %s86
      %p95 = scmp.eq.s32.totalorder %s40, 1
      %p96 = por %p94, %p95
      %p97 = scmp.ne.s32.totalorder %s86, %s87
      %p98 = scmp.eq.s32.totalorder %s40, 0
      %p99 = por %p97, %p98
      %p100 = scmp.ne.s32.totalorder %s86, %s87
      %p101 = scmp.eq.s32.totalorder %s41, 1
      %p102 = por %p100, %p101
      %p104 = scmp.ne.s32.totalorder %s87, %s103
      %p105 = scmp.eq.s32.totalorder %s41, 0
      %p106 = por %p104, %p105
      %s107 = ssub.s32 %s43, %s50
      %p108 = scmp.eq.s32.totalorder %s107, 0
      %s110 = sadd.s32 %s109, 1
      %s111 = scalar_select %p108, %s109, %s110
      %p114 = pneg %p108
      %p115 = scmp.eq.s32.totalorder %s35, 1
      %p116 = por %p114, %p115
      %p117 = scmp.ne.s32.totalorder %s109, %s112
      %p118 = scmp.eq.s32.totalorder %s35, 0
      %p119 = por %p117, %p118
      %p120 = scmp.ne.s32.totalorder %s109, %s112
      %p121 = scmp.eq.s32.totalorder %s40, 1
      %p122 = por %p120, %p121
      %p123 = scmp.ne.s32.totalorder %s112, %s113
      %p124 = scmp.eq.s32.totalorder %s40, 0
      %p125 = por %p123, %p124
      %p126 = scmp.ne.s32.totalorder %s112, %s113
      %p127 = scmp.eq.s32.totalorder %s41, 1
      %p128 = por %p126, %p127
      %p130 = scmp.ne.s32.totalorder %s113, %s129
      %p131 = scmp.eq.s32.totalorder %s41, 0
      %p132 = por %p130, %p131
      %s133 = ssub.s32 %s43, %s50
      %p134 = scmp.eq.s32.totalorder %s133, 0
      %s136 = sadd.s32 %s135, 1
      %s137 = scalar_select %p134, %s135, %s136
      %p140 = pneg %p134
      %p141 = scmp.eq.s32.totalorder %s35, 1
      %p142 = por %p140, %p141
      %p143 = scmp.ne.s32.totalorder %s135, %s138
      %p144 = scmp.eq.s32.totalorder %s35, 0
      %p145 = por %p143, %p144
      %p146 = scmp.ne.s32.totalorder %s135, %s138
      %p147 = scmp.eq.s32.totalorder %s40, 1
      %p148 = por %p146, %p147
      %p149 = scmp.ne.s32.totalorder %s138, %s139
      %p150 = scmp.eq.s32.totalorder %s40, 0
      %p151 = por %p149, %p150
      %p152 = scmp.ne.s32.totalorder %s138, %s139
      %p153 = scmp.eq.s32.totalorder %s41, 1
      %p154 = por %p152, %p153
      %p156 = scmp.ne.s32.totalorder %s139, %s155
      %p157 = scmp.eq.s32.totalorder %s41, 0
      %p158 = por %p156, %p157
      %s159 = ssub.s32 %s43, %s50
      %p160 = scmp.eq.s32.totalorder %s159, 0
      %s162 = sadd.s32 %s161, 1
      %s163 = scalar_select %p160, %s161, %s162
      %p166 = pneg %p160
      %p167 = scmp.eq.s32.totalorder %s35, 1
      %p168 = por %p166, %p167
      %p169 = scmp.ne.s32.totalorder %s161, %s164
      %p170 = scmp.eq.s32.totalorder %s35, 0
      %p171 = por %p169, %p170
      %p172 = scmp.ne.s32.totalorder %s161, %s164
      %p173 = scmp.eq.s32.totalorder %s40, 1
      %p174 = por %p172, %p173
      %p175 = scmp.ne.s32.totalorder %s164, %s165
      %p176 = scmp.eq.s32.totalorder %s40, 0
      %p177 = por %p175, %p176
      %p178 = scmp.ne.s32.totalorder %s164, %s165
      %p179 = scmp.eq.s32.totalorder %s41, 1
      %p180 = por %p178, %p179
      %p182 = scmp.ne.s32.totalorder %s165, %s181
      %p183 = scmp.eq.s32.totalorder %s41, 0
      %p184 = por %p182, %p183
      %s185 = ssub.s32 %s43, %s50
      %p186 = scmp.eq.s32.totalorder %s185, 0
      %s188 = sadd.s32 %s187, 1
      %s189 = scalar_select %p186, %s187, %s188
      %p192 = pneg %p186
      %p193 = scmp.eq.s32.totalorder %s35, 1
      %p194 = por %p192, %p193
      %p195 = scmp.ne.s32.totalorder %s187, %s190
      %p196 = scmp.eq.s32.totalorder %s35, 0
      %p197 = por %p195, %p196
      %p198 = scmp.ne.s32.totalorder %s187, %s190
      %p199 = scmp.eq.s32.totalorder %s40, 1
      %p200 = por %p198, %p199
      %p201 = scmp.ne.s32.totalorder %s190, %s191
      %p202 = scmp.eq.s32.totalorder %s40, 0
      %p203 = por %p201, %p202
      %p204 = scmp.ne.s32.totalorder %s190, %s191
      %p205 = scmp.eq.s32.totalorder %s41, 1
      %p206 = por %p204, %p205
      %p208 = scmp.ne.s32.totalorder %s191, %s207
      %p209 = scmp.eq.s32.totalorder %s41, 0
      %p210 = por %p208, %p209
      %s211 = ssub.s32 %s43, %s50
      %p212 = scmp.eq.s32.totalorder %s211, 0
      %s214 = sadd.s32 %s213, 1
      %s215 = scalar_select %p212, %s213, %s214
      %p218 = pneg %p212
      %p219 = scmp.eq.s32.totalorder %s35, 1
      %p220 = por %p218, %p219
      %p221 = scmp.ne.s32.totalorder %s213, %s216
      %p222 = scmp.eq.s32.totalorder %s35, 0
      %p223 = por %p221, %p222
      %p224 = scmp.ne.s32.totalorder %s213, %s216
      %p225 = scmp.eq.s32.totalorder %s40, 1
      %p226 = por %p224, %p225
      %p227 = scmp.ne.s32.totalorder %s216, %s217
      %p228 = scmp.eq.s32.totalorder %s40, 0
      %p229 = por %p227, %p228
      %p230 = scmp.ne.s32.totalorder %s216, %s217
      %p231 = scmp.eq.s32.totalorder %s41, 1
      %p232 = por %p230, %p231
      %p234 = scmp.ne.s32.totalorder %s217, %s233
      %p235 = scmp.eq.s32.totalorder %s41, 0
      %p236 = por %p234, %p235
      %s237 = ssub.s32 %s43, %s50
      %p238 = scmp.eq.s32.totalorder %s237, 0
      %s240 = sadd.s32 %s239, 1
      %s241 = scalar_select %p238, %s239, %s240
      %p244 = pneg %p238
      %p245 = scmp.eq.s32.totalorder %s35, 1
      %p246 = por %p244, %p245
      %p247 = scmp.ne.s32.totalorder %s239, %s242
      %p248 = scmp.eq.s32.totalorder %s35, 0
      %p249 = por %p247, %p248
      %p250 = scmp.ne.s32.totalorder %s239, %s242
      %p251 = scmp.eq.s32.totalorder %s40, 1
      %p252 = por %p250, %p251
      %p253 = scmp.ne.s32.totalorder %s242, %s243
      %p254 = scmp.eq.s32.totalorder %s40, 0
      %p255 = por %p253, %p254
      %p256 = scmp.ne.s32.totalorder %s242, %s243
      %p257 = scmp.eq.s32.totalorder %s41, 1
      %p258 = por %p256, %p257
      %p260 = scmp.ne.s32.totalorder %s243, %s259
      %p261 = scmp.eq.s32.totalorder %s41, 0
      %p262 = por %p260, %p261
      %s263 = ssub.s32 %s43, %s50
      %p264 = scmp.eq.s32.totalorder %s263, 0
      %s266 = sadd.s32 %s265, 1
      %s267 = scalar_select %p264, %s265, %s266
      %p270 = pneg %p264
      %p271 = scmp.eq.s32.totalorder %s35, 1
      %p272 = por %p270, %p271
      %p273 = scmp.ne.s32.totalorder %s265, %s268
      %p274 = scmp.eq.s32.totalorder %s35, 0
      %p275 = por %p273, %p274
      %p276 = scmp.ne.s32.totalorder %s265, %s268
      %p277 = scmp.eq.s32.totalorder %s40, 1
      %p278 = por %p276, %p277
      %p279 = scmp.ne.s32.totalorder %s268, %s269
      %p280 = scmp.eq.s32.totalorder %s40, 0
      %p281 = por %p279, %p280
      %p282 = scmp.ne.s32.totalorder %s268, %s269
      %p283 = scmp.eq.s32.totalorder %s41, 1
      %p284 = por %p282, %p283
      %p286 = scmp.ne.s32.totalorder %s269, %s285
      %p287 = scmp.eq.s32.totalorder %s41, 0
      %p288 = por %p286, %p287
      %s289 = ssub.s32 %s43, %s50
      %p290 = scmp.eq.s32.totalorder %s289, 0
      %s292 = sadd.s32 %s291, 1
      %s293 = scalar_select %p290, %s291, %s292
      %p296 = pneg %p290
      %p297 = scmp.eq.s32.totalorder %s35, 1
      %p298 = por %p296, %p297
      %p299 = scmp.ne.s32.totalorder %s291, %s294
      %p300 = scmp.eq.s32.totalorder %s35, 0
      %p301 = por %p299, %p300
      %p302 = scmp.ne.s32.totalorder %s291, %s294
      %p303 = scmp.eq.s32.totalorder %s40, 1
      %p304 = por %p302, %p303
      %p305 = scmp.ne.s32.totalorder %s294, %s295
      %p306 = scmp.eq.s32.totalorder %s40, 0
      %p307 = por %p305, %p306
      %p308 = scmp.ne.s32.totalorder %s294, %s295
      %p309 = scmp.eq.s32.totalorder %s41, 1
      %p310 = por %p308, %p309
      %p312 = scmp.ne.s32.totalorder %s295, %s311
      %p313 = scmp.eq.s32.totalorder %s41, 0
      %p314 = por %p312, %p313
      %s315 = ssub.s32 %s43, %s50
      %p316 = scmp.eq.s32.totalorder %s315, 0
      %s318 = sadd.s32 %s317, 1
      %s319 = scalar_select %p316, %s317, %s318
      %p322 = pneg %p316
      %p323 = scmp.eq.s32.totalorder %s35, 1
      %p324 = por %p322, %p323
      %p325 = scmp.ne.s32.totalorder %s317, %s320
      %p326 = scmp.eq.s32.totalorder %s35, 0
      %p327 = por %p325, %p326
      %p328 = scmp.ne.s32.totalorder %s317, %s320
      %p329 = scmp.eq.s32.totalorder %s40, 1
      %p330 = por %p328, %p329
      %p331 = scmp.ne.s32.totalorder %s320, %s321
      %p332 = scmp.eq.s32.totalorder %s40, 0
      %p333 = por %p331, %p332
      %p334 = scmp.ne.s32.totalorder %s320, %s321
      %p335 = scmp.eq.s32.totalorder %s41, 1
      %p336 = por %p334, %p335
      %p338 = scmp.ne.s32.totalorder %s321, %s337
      %p339 = scmp.eq.s32.totalorder %s41, 0
      %p340 = por %p338, %p339
      %s341 = ssub.s32 %s43, %s50
      %p342 = scmp.eq.s32.totalorder %s341, 0
      %s344 = sadd.s32 %s343, 1
      %s345 = scalar_select %p342, %s343, %s344
      %p348 = pneg %p342
      %p349 = scmp.eq.s32.totalorder %s35, 1
      %p350 = por %p348, %p349
      %p351 = scmp.ne.s32.totalorder %s343, %s346
      %p352 = scmp.eq.s32.totalorder %s35, 0
      %p353 = por %p351, %p352
      %p354 = scmp.ne.s32.totalorder %s343, %s346
      %p355 = scmp.eq.s32.totalorder %s40, 1
      %p356 = por %p354, %p355
      %p357 = scmp.ne.s32.totalorder %s346, %s347
      %p358 = scmp.eq.s32.totalorder %s40, 0
      %p359 = por %p357, %p358
      %p360 = scmp.ne.s32.totalorder %s346, %s347
      %p361 = scmp.eq.s32.totalorder %s41, 1
      %p362 = por %p360, %p361
      %p364 = scmp.ne.s32.totalorder %s347, %s363
      %p365 = scmp.eq.s32.totalorder %s41, 0
      %p366 = por %p364, %p365
      %s367 = ssub.s32 %s43, %s50
      %p368 = scmp.eq.s32.totalorder %s367, 0
      %s370 = sadd.s32 %s369, 1
      %s371 = scalar_select %p368, %s369, %s370
      %p374 = pneg %p368
      %p375 = scmp.eq.s32.totalorder %s35, 1
      %p376 = por %p374, %p375
      %p377 = scmp.ne.s32.totalorder %s369, %s372
      %p378 = scmp.eq.s32.totalorder %s35, 0
      %p379 = por %p377, %p378
      %p380 = scmp.ne.s32.totalorder %s369, %s372
      %p381 = scmp.eq.s32.totalorder %s40, 1
      %p382 = por %p380, %p381
      %p383 = scmp.ne.s32.totalorder %s372, %s373
      %p384 = scmp.eq.s32.totalorder %s40, 0
      %p385 = por %p383, %p384
      %p386 = scmp.ne.s32.totalorder %s372, %s373
      %p387 = scmp.eq.s32.totalorder %s41, 1
      %p388 = por %p386, %p387
      %p390 = scmp.ne.s32.totalorder %s373, %s389
      %p391 = scmp.eq.s32.totalorder %s41, 0
      %p392 = por %p390, %p391
      %s394 = sadd.s32 %s393, 1
      %p397 = scmp.eq.s32.totalorder %s35, 1
      %p398 = scmp.ne.s32.totalorder %s393, %s395
      %p399 = scmp.eq.s32.totalorder %s35, 0
      %p400 = por %p398, %p399
      %p401 = scmp.ne.s32.totalorder %s393, %s395
      %p402 = scmp.eq.s32.totalorder %s40, 1
      %p403 = por %p401, %p402
      %p404 = scmp.ne.s32.totalorder %s395, %s396
      %p405 = scmp.eq.s32.totalorder %s40, 0
      %p406 = por %p404, %p405
      %p407 = scmp.ne.s32.totalorder %s395, %s396
      %p408 = scmp.eq.s32.totalorder %s41, 1
      %p409 = por %p407, %p408
      %p411 = scmp.ne.s32.totalorder %s396, %s410
      %p412 = scmp.eq.s32.totalorder %s41, 0
      %p413 = por %p411, %p412
      %s415 = sadd.s32 %s414, 1
      %p418 = scmp.eq.s32.totalorder %s35, 1
      %p419 = scmp.ne.s32.totalorder %s414, %s416
      %p420 = scmp.eq.s32.totalorder %s35, 0
      %p421 = por %p419, %p420
      %p422 = scmp.ne.s32.totalorder %s414, %s416
      %p423 = scmp.eq.s32.totalorder %s40, 1
      %p424 = por %p422, %p423
      %p425 = scmp.ne.s32.totalorder %s416, %s417
      %p426 = scmp.eq.s32.totalorder %s40, 0
      %p427 = por %p425, %p426
      %p428 = scmp.ne.s32.totalorder %s416, %s417
      %p429 = scmp.eq.s32.totalorder %s41, 1
      %p430 = por %p428, %p429
      %p432 = scmp.ne.s32.totalorder %s417, %s431
      %p433 = scmp.eq.s32.totalorder %s41, 0
      %p434 = por %p432, %p433
      %s435 = ssub.s32 %s42, %s54
      %p436 = scmp.eq.s32.totalorder %s435, 0
      %s438 = sadd.s32 %s437, 1
      %s439 = scalar_select %p436, %s437, %s438
      %p442 = pneg %p436
      %p443 = scmp.eq.s32.totalorder %s35, 1
      %p444 = por %p442, %p443
      %p445 = scmp.ne.s32.totalorder %s437, %s440
      %p446 = scmp.eq.s32.totalorder %s35, 0
      %p447 = por %p445, %p446
      %p448 = scmp.ne.s32.totalorder %s437, %s440
      %p449 = scmp.eq.s32.totalorder %s40, 1
      %p450 = por %p448, %p449
      %p451 = scmp.ne.s32.totalorder %s440, %s441
      %p452 = scmp.eq.s32.totalorder %s40, 0
      %p453 = por %p451, %p452
      %p454 = scmp.ne.s32.totalorder %s440, %s441
      %p455 = scmp.eq.s32.totalorder %s41, 1
      %p456 = por %p454, %p455
      %p458 = scmp.ne.s32.totalorder %s441, %s457
      %p459 = scmp.eq.s32.totalorder %s41, 0
      %p460 = por %p458, %p459
      %p461 = scmp.le.s32.totalorder 1, %s35
      %p462 = scmp.lt.s32.totalorder %s35, 3
      %p463 = pnand %p461, %p462
      %p464 = pneg %p463
      // Predicated region
      $region9: #{tpu_custom_call.1} parent=5 // pred_check
        _
      $region10: #{tpu_custom_call.1} parent=5 // pred_check_branch
        %466 = sbr.rel (%p463) target = $region12
      $region11: #{tpu_custom_call.1} parent=5 // pred_region
        %s467 = ssub.s32 %s35, 1
        // Predicated region
        $region13: #{tpu_custom_call.1} parent=11 // pred_check
          %p468 = pneg %p73
        $region14: #{tpu_custom_call.1} parent=11 // pred_check_branch
          %470 = sbr.rel (%p468) target = $region16
        $region15: #{tpu_custom_call.1} parent=11 // pred_region
          %472 = vsyncadd [#allocation4], 0
          %s473 = smul.addr %s44, 2
          %s474 = scalar_lea.hbm %s0, %s473
          %s475 = sshll.u32 %s474, 4
          %s476 = int_to_ptr.hbm [resolvable:$true] %s475
          %s477 = sshll.u32 [#allocation3], 4
          %s478 = int_to_ptr.vmem [resolvable:$true] %s477
          %483 = dma.hbm_to_vmem [thread:$0]  %s476, 256, %s478, [#allocation4], 32, 32, 2
        $region16: #{tpu_custom_call.1} parent=11 // pred_fallthru
          _
        // Predicated region
        $region17: #{tpu_custom_call.1} parent=11 // pred_check
          %p484 = pneg %p406
        $region18: #{tpu_custom_call.1} parent=11 // pred_check_branch
          %486 = sbr.rel (%p484) target = $region20
        $region19: #{tpu_custom_call.1} parent=11 // pred_region
          _
        $region20: #{tpu_custom_call.1} parent=11 // pred_fallthru
          _
        // Predicated region
        $region21: #{tpu_custom_call.1} parent=11 // pred_check
          %p487 = pneg %p427
        $region22: #{tpu_custom_call.1} parent=11 // pred_check_branch
          %489 = sbr.rel (%p487) target = $region24
        $region23: #{tpu_custom_call.1} parent=11 // pred_region
          _
        $region24: #{tpu_custom_call.1} parent=11 // pred_fallthru
          _
      $region12: #{tpu_custom_call.1} parent=5 // pred_fallthru
        _
      %p490 = scmp.lt.s32.totalorder %s35, 2
      // Predicated region
      $region25: #{tpu_custom_call.1} parent=5 // pred_check
        %p491 = pneg %p490
      $region26: #{tpu_custom_call.1} parent=5 // pred_check_branch
        %493 = sbr.rel (%p491) target = $region28
      $region27: #{tpu_custom_call.1} parent=5 // pred_region
        // Predicated region
        $region29: #{tpu_custom_call.1} parent=27 // pred_check
          %p494 = pneg %p93
        $region30: #{tpu_custom_call.1} parent=27 // pred_check_branch
          %496 = sbr.rel (%p494) target = $region32
        $region31: #{tpu_custom_call.1} parent=27 // pred_region
          %s497 = sand.u32 %s35, 1
          %s498 = scalar_lea.sflag [#allocation7], %s497
          %s499 = sand.u32 %s83, 1
          %s500 = smul.addr %s499, 192
          %s501 = scalar_lea.vmem [#allocation6], %s500
          %503 = vsyncadd %s498, 0
          %s504 = smul.addr %s43, 48
          %s505 = smul.addr %s504, 4
          %s506 = scalar_lea.hbm %s1, %s505
          %s507 = sshll.u32 %s506, 4
          %s508 = int_to_ptr.hbm [resolvable:$true] %s507
          %s509 = sshll.u32 %s501, 4
          %s510 = int_to_ptr.vmem [resolvable:$true] %s509
          %515 = dma.hbm_to_vmem [thread:$0]  %s508, 3072, %s510, %s498, 192, 192, 12
        $region32: #{tpu_custom_call.1} parent=27 // pred_fallthru
          _
        // Predicated region
        $region33: #{tpu_custom_call.1} parent=27 // pred_check
          %p516 = pneg %p119
        $region34: #{tpu_custom_call.1} parent=27 // pred_check_branch
          %518 = sbr.rel (%p516) target = $region36
        $region35: #{tpu_custom_call.1} parent=27 // pred_region
          %s519 = sand.u32 %s35, 1
          %s520 = scalar_lea.sflag [#allocation7], %s519
          %s521 = sand.u32 %s109, 1
          %s522 = smul.addr %s521, 3
          %s523 = scalar_lea.vmem [#allocation8], %s522
          %525 = vsyncadd %s520, 0
          %s526 = smul.addr %s43, 3
          %s527 = scalar_lea.hbm %s2, %s526
          %s529 = sshll.u32 %s527, 4
          %s530 = int_to_ptr.hbm [resolvable:$true] %s529
          %s531 = sshll.u32 %s523, 4
          %s532 = int_to_ptr.vmem [resolvable:$true] %s531
          %534 = dma.hbm_to_vmem [thread:$0]  %s530, 48, %s532, %s520
        $region36: #{tpu_custom_call.1} parent=27 // pred_fallthru
          _
        // Predicated region
        $region37: #{tpu_custom_call.1} parent=27 // pred_check
          %p535 = pneg %p145
        $region38: #{tpu_custom_call.1} parent=27 // pred_check_branch
          %537 = sbr.rel (%p535) target = $region40
        $region39: #{tpu_custom_call.1} parent=27 // pred_region
          %s538 = sand.u32 %s35, 1
          %s539 = scalar_lea.sflag [#allocation10], %s538
          %s540 = sand.u32 %s135, 1
          %s541 = smul.addr %s540, 64
          %s542 = scalar_lea.vmem [#allocation9], %s541
          %544 = vsyncadd %s539, 0
          %s545 = smul.addr %s43, 16
          %s546 = smul.addr %s545, 4
          %s547 = scalar_lea.hbm %s3, %s546
          %s548 = sshll.u32 %s547, 4
          %s549 = int_to_ptr.hbm [resolvable:$true] %s548
          %s550 = sshll.u32 %s542, 4
          %s551 = int_to_ptr.vmem [resolvable:$true] %s550
          %556 = dma.hbm_to_vmem [thread:$0]  %s549, 1024, %s551, %s539, 64, 64, 4
        $region40: #{tpu_custom_call.1} parent=27 // pred_fallthru
          _
        // Predicated region
        $region41: #{tpu_custom_call.1} parent=27 // pred_check
          %p557 = pneg %p171
        $region42: #{tpu_custom_call.1} parent=27 // pred_check_branch
          %559 = sbr.rel (%p557) target = $region44
        $region43: #{tpu_custom_call.1} parent=27 // pred_region
          %p560 = scmp.lt.s32.totalorder %s43, 1
          %s561 = scalar_select %p560, %s43, 1
          %s562 = scalar_lea.vmem %s4, %s561
        $region44: #{tpu_custom_call.1} parent=27 // pred_fallthru
          _
        // Predicated region
        $region45: #{tpu_custom_call.1} parent=27 // pred_check
          %p563 = pneg %p197
        $region46: #{tpu_custom_call.1} parent=27 // pred_check_branch
          %565 = sbr.rel (%p563) target = $region48
        $region47: #{tpu_custom_call.1} parent=27 // pred_region
          %s566 = sand.u32 %s35, 1
          %s567 = scalar_lea.sflag [#allocation10], %s566
          %s568 = sand.u32 %s187, 1
          %s569 = scalar_lea.vmem [#allocation11], %s568
          %571 = vsyncadd %s567, 0
          %s572 = scalar_lea.hbm %s5, %s43
          %s574 = sshll.u32 %s572, 4
          %s575 = int_to_ptr.hbm [resolvable:$true] %s574
          %s576 = sshll.u32 %s569, 4
          %s577 = int_to_ptr.vmem [resolvable:$true] %s576
          %579 = dma.hbm_to_vmem [thread:$0]  %s575, 16, %s577, %s567
        $region48: #{tpu_custom_call.1} parent=27 // pred_fallthru
          _
        // Predicated region
        $region49: #{tpu_custom_call.1} parent=27 // pred_check
          %p580 = pneg %p223
        $region50: #{tpu_custom_call.1} parent=27 // pred_check_branch
          %582 = sbr.rel (%p580) target = $region52
        $region51: #{tpu_custom_call.1} parent=27 // pred_region
          %s583 = sand.u32 %s35, 1
          %s584 = scalar_lea.sflag [#allocation13], %s583
          %s585 = sand.u32 %s213, 1
          %s586 = scalar_lea.vmem [#allocation12], %s585
          %588 = vsyncadd %s584, 0
          %s589 = scalar_lea.hbm %s6, %s43
          %s591 = sshll.u32 %s589, 4
          %s592 = int_to_ptr.hbm [resolvable:$true] %s591
          %s593 = sshll.u32 %s586, 4
          %s594 = int_to_ptr.vmem [resolvable:$true] %s593
          %596 = dma.hbm_to_vmem [thread:$0]  %s592, 16, %s594, %s584
        $region52: #{tpu_custom_call.1} parent=27 // pred_fallthru
          _
        // Predicated region
        $region53: #{tpu_custom_call.1} parent=27 // pred_check
          %p597 = pneg %p249
        $region54: #{tpu_custom_call.1} parent=27 // pred_check_branch
          %599 = sbr.rel (%p597) target = $region56
        $region55: #{tpu_custom_call.1} parent=27 // pred_region
          %s600 = sand.u32 %s35, 1
          %s601 = scalar_lea.sflag [#allocation13], %s600
          %s602 = sand.u32 %s239, 1
          %s603 = smul.addr %s602, 128
          %s604 = scalar_lea.vmem [#allocation14], %s603
          %606 = vsyncadd %s601, 0
          %s607 = smul.addr %s43, 32
          %s608 = smul.addr %s607, 4
          %s609 = scalar_lea.hbm %s7, %s608
          %s610 = sshll.u32 %s609, 4
          %s611 = int_to_ptr.hbm [resolvable:$true] %s610
          %s612 = sshll.u32 %s604, 4
          %s613 = int_to_ptr.vmem [resolvable:$true] %s612
          %618 = dma.hbm_to_vmem [thread:$0]  %s611, 2048, %s613, %s601, 128, 128, 8
        $region56: #{tpu_custom_call.1} parent=27 // pred_fallthru
          _
        // Predicated region
        $region57: #{tpu_custom_call.1} parent=27 // pred_check
          %p619 = pneg %p275
        $region58: #{tpu_custom_call.1} parent=27 // pred_check_branch
          %621 = sbr.rel (%p619) target = $region60
        $region59: #{tpu_custom_call.1} parent=27 // pred_region
          %p622 = scmp.lt.s32.totalorder %s43, 1
          %s623 = scalar_select %p622, %s43, 1
          %s624 = smul.addr %s623, 2
          %s625 = scalar_lea.vmem %s8, %s624
        $region60: #{tpu_custom_call.1} parent=27 // pred_fallthru
          _
        // Predicated region
        $region61: #{tpu_custom_call.1} parent=27 // pred_check
          %p626 = pneg %p301
        $region62: #{tpu_custom_call.1} parent=27 // pred_check_branch
          %628 = sbr.rel (%p626) target = $region64
        $region63: #{tpu_custom_call.1} parent=27 // pred_region
          %s629 = sand.u32 %s35, 1
          %s630 = scalar_lea.sflag [#allocation16], %s629
          %s631 = sand.u32 %s291, 1
          %s632 = smul.addr %s631, 128
          %s633 = scalar_lea.vmem [#allocation15], %s632
          %635 = vsyncadd %s630, 0
          %s636 = smul.addr %s43, 32
          %s637 = smul.addr %s636, 4
          %s638 = scalar_lea.hbm %s9, %s637
          %s639 = sshll.u32 %s638, 4
          %s640 = int_to_ptr.hbm [resolvable:$true] %s639
          %s641 = sshll.u32 %s633, 4
          %s642 = int_to_ptr.vmem [resolvable:$true] %s641
          %647 = dma.hbm_to_vmem [thread:$0]  %s640, 2048, %s642, %s630, 64, 64, 4
        $region64: #{tpu_custom_call.1} parent=27 // pred_fallthru
          _
        // Predicated region
        $region65: #{tpu_custom_call.1} parent=27 // pred_check
          %p648 = pneg %p327
        $region66: #{tpu_custom_call.1} parent=27 // pred_check_branch
          %650 = sbr.rel (%p648) target = $region68
        $region67: #{tpu_custom_call.1} parent=27 // pred_region
          %p651 = scmp.lt.s32.totalorder %s43, 1
          %s652 = scalar_select %p651, %s43, 1
          %s653 = scalar_lea.vmem %s10, %s652
        $region68: #{tpu_custom_call.1} parent=27 // pred_fallthru
          _
        // Predicated region
        $region69: #{tpu_custom_call.1} parent=27 // pred_check
          %p654 = pneg %p353
        $region70: #{tpu_custom_call.1} parent=27 // pred_check_branch
          %656 = sbr.rel (%p654) target = $region72
        $region71: #{tpu_custom_call.1} parent=27 // pred_region
          %p657 = scmp.lt.s32.totalorder %s43, 1
          %s658 = scalar_select %p657, %s43, 1
          %s659 = scalar_lea.vmem %s11, %s658
        $region72: #{tpu_custom_call.1} parent=27 // pred_fallthru
          _
        // Predicated region
        $region73: #{tpu_custom_call.1} parent=27 // pred_check
          %p660 = pneg %p379
        $region74: #{tpu_custom_call.1} parent=27 // pred_check_branch
          %662 = sbr.rel (%p660) target = $region76
        $region75: #{tpu_custom_call.1} parent=27 // pred_region
          %s663 = sand.u32 %s35, 1
          %s664 = scalar_lea.sflag [#allocation16], %s663
          %s665 = sand.u32 %s369, 1
          %s666 = scalar_lea.vmem [#allocation17], %s665
          %668 = vsyncadd %s664, 0
          %s669 = scalar_lea.hbm %s12, %s43
          %s671 = sshll.u32 %s669, 4
          %s672 = int_to_ptr.hbm [resolvable:$true] %s671
          %s673 = sshll.u32 %s666, 4
          %s674 = int_to_ptr.vmem [resolvable:$true] %s673
          %676 = dma.hbm_to_vmem [thread:$0]  %s672, 16, %s674, %s664
        $region76: #{tpu_custom_call.1} parent=27 // pred_fallthru
          _
      $region28: #{tpu_custom_call.1} parent=5 // pred_fallthru
        _
      %p677 = scmp.le.s32.totalorder 1, %s35
      %p678 = scmp.lt.s32.totalorder %s35, 3
      %p679 = pnand %p677, %p678
      %p680 = pneg %p679
      // Predicated region
      $region77: #{tpu_custom_call.1} parent=5 // pred_check
        _
      $region78: #{tpu_custom_call.1} parent=5 // pred_check_branch
        %682 = sbr.rel (%p679) target = $region80
      $region79: #{tpu_custom_call.1} parent=5 // pred_region
        %s683 = ssub.s32 %s35, 1
        // Predicated region
        $region81: #{tpu_custom_call.1} parent=79 // pred_check
          %p684 = pneg %p73
        $region82: #{tpu_custom_call.1} parent=79 // pred_check_branch
          %686 = sbr.rel (%p684) target = $region84
        $region83: #{tpu_custom_call.1} parent=79 // pred_region
          %688 = dma.done [#allocation4], 256
        $region84: #{tpu_custom_call.1} parent=79 // pred_fallthru
          _
        %s689 = sand.u32 %s40, 1
        %s690 = scalar_lea.sflag [#allocation7], %s689
        %s691 = sand.u32 %s86, 1
        %s692 = smul.addr %s691, 192
        %s693 = scalar_lea.vmem [#allocation6], %s692
        // Predicated region
        $region85: #{tpu_custom_call.1} parent=79 // pred_check
          %p694 = pneg %p99
        $region86: #{tpu_custom_call.1} parent=79 // pred_check_branch
          %696 = sbr.rel (%p694) target = $region88
        $region87: #{tpu_custom_call.1} parent=79 // pred_region
          %698 = dma.done %s690, 3072
        $region88: #{tpu_custom_call.1} parent=79 // pred_fallthru
          _
        %s699 = sand.u32 %s40, 1
        %s700 = scalar_lea.sflag [#allocation7], %s699
        %s701 = sand.u32 %s112, 1
        %s702 = smul.addr %s701, 3
        %s703 = scalar_lea.vmem [#allocation8], %s702
        // Predicated region
        $region89: #{tpu_custom_call.1} parent=79 // pred_check
          %p704 = pneg %p125
        $region90: #{tpu_custom_call.1} parent=79 // pred_check_branch
          %706 = sbr.rel (%p704) target = $region92
        $region91: #{tpu_custom_call.1} parent=79 // pred_region
          %708 = dma.done %s700, 48
        $region92: #{tpu_custom_call.1} parent=79 // pred_fallthru
          _
        %s709 = sand.u32 %s40, 1
        %s710 = scalar_lea.sflag [#allocation10], %s709
        %s711 = sand.u32 %s138, 1
        %s712 = smul.addr %s711, 64
        %s713 = scalar_lea.vmem [#allocation9], %s712
        // Predicated region
        $region93: #{tpu_custom_call.1} parent=79 // pred_check
          %p714 = pneg %p151
        $region94: #{tpu_custom_call.1} parent=79 // pred_check_branch
          %716 = sbr.rel (%p714) target = $region96
        $region95: #{tpu_custom_call.1} parent=79 // pred_region
          %718 = dma.done %s710, 1024
        $region96: #{tpu_custom_call.1} parent=79 // pred_fallthru
          _
        %s719 = sand.u32 %s40, 1
        %s720 = scalar_lea.sflag [#allocation10], %s719
        %s721 = sand.u32 %s190, 1
        %s722 = scalar_lea.vmem [#allocation11], %s721
        // Predicated region
        $region97: #{tpu_custom_call.1} parent=79 // pred_check
          %p723 = pneg %p203
        $region98: #{tpu_custom_call.1} parent=79 // pred_check_branch
          %725 = sbr.rel (%p723) target = $region100
        $region99: #{tpu_custom_call.1} parent=79 // pred_region
          %727 = dma.done %s720, 16
        $region100: #{tpu_custom_call.1} parent=79 // pred_fallthru
          _
        %s728 = sand.u32 %s40, 1
        %s729 = scalar_lea.sflag [#allocation13], %s728
        %s730 = sand.u32 %s216, 1
        %s731 = scalar_lea.vmem [#allocation12], %s730
        // Predicated region
        $region101: #{tpu_custom_call.1} parent=79 // pred_check
          %p732 = pneg %p229
        $region102: #{tpu_custom_call.1} parent=79 // pred_check_branch
          %734 = sbr.rel (%p732) target = $region104
        $region103: #{tpu_custom_call.1} parent=79 // pred_region
          %736 = dma.done %s729, 16
        $region104: #{tpu_custom_call.1} parent=79 // pred_fallthru
          _
        %s737 = sand.u32 %s40, 1
        %s738 = scalar_lea.sflag [#allocation13], %s737
        %s739 = sand.u32 %s242, 1
        %s740 = smul.addr %s739, 128
        %s741 = scalar_lea.vmem [#allocation14], %s740
        // Predicated region
        $region105: #{tpu_custom_call.1} parent=79 // pred_check
          %p742 = pneg %p255
        $region106: #{tpu_custom_call.1} parent=79 // pred_check_branch
          %744 = sbr.rel (%p742) target = $region108
        $region107: #{tpu_custom_call.1} parent=79 // pred_region
          %746 = dma.done %s738, 2048
        $region108: #{tpu_custom_call.1} parent=79 // pred_fallthru
          _
        %s747 = sand.u32 %s40, 1
        %s748 = scalar_lea.sflag [#allocation16], %s747
        %s749 = sand.u32 %s294, 1
        %s750 = smul.addr %s749, 128
        %s751 = scalar_lea.vmem [#allocation15], %s750
        // Predicated region
        $region109: #{tpu_custom_call.1} parent=79 // pred_check
          %p752 = pneg %p307
        $region110: #{tpu_custom_call.1} parent=79 // pred_check_branch
          %754 = sbr.rel (%p752) target = $region112
        $region111: #{tpu_custom_call.1} parent=79 // pred_region
          %756 = dma.done %s748, 2048
        $region112: #{tpu_custom_call.1} parent=79 // pred_fallthru
          _
        %s757 = sand.u32 %s40, 1
        %s758 = scalar_lea.sflag [#allocation16], %s757
        %s759 = sand.u32 %s372, 1
        %s760 = scalar_lea.vmem [#allocation17], %s759
        // Predicated region
        $region113: #{tpu_custom_call.1} parent=79 // pred_check
          %p761 = pneg %p385
        $region114: #{tpu_custom_call.1} parent=79 // pred_check_branch
          %763 = sbr.rel (%p761) target = $region116
        $region115: #{tpu_custom_call.1} parent=79 // pred_region
          %765 = dma.done %s758, 16
        $region116: #{tpu_custom_call.1} parent=79 // pred_fallthru
          _
        %p766 = pneg %p73
        %p767 = pneg %p70
        %s768 = sand.u32 %s40, 1
        %s769 = scalar_lea.sflag [#allocation7], %s768
        %s770 = sand.u32 %s86, 1
        %s771 = smul.addr %s770, 192
        %s772 = scalar_lea.vmem [#allocation6], %s771
        %p773 = pneg %p99
        %p774 = pneg %p96
        %s775 = sand.u32 %s40, 1
        %s776 = scalar_lea.sflag [#allocation7], %s775
        %s777 = sand.u32 %s112, 1
        %s778 = smul.addr %s777, 3
        %s779 = scalar_lea.vmem [#allocation8], %s778
        %p780 = pneg %p125
        %p781 = pneg %p122
        %s782 = sand.u32 %s40, 1
        %s783 = scalar_lea.sflag [#allocation10], %s782
        %s784 = sand.u32 %s138, 1
        %s785 = smul.addr %s784, 64
        %s786 = scalar_lea.vmem [#allocation9], %s785
        %p787 = pneg %p151
        %p788 = pneg %p148
        %p789 = scmp.lt.s32.totalorder %s45, 1
        %s790 = scalar_select %p789, %s45, 1
        %s791 = scalar_lea.vmem %s4, %s790
        %p792 = pneg %p177
        %p793 = pneg %p174
        %s794 = sand.u32 %s40, 1
        %s795 = scalar_lea.sflag [#allocation10], %s794
        %s796 = sand.u32 %s190, 1
        %s797 = scalar_lea.vmem [#allocation11], %s796
        %p798 = pneg %p203
        %p799 = pneg %p200
        %s800 = sand.u32 %s40, 1
        %s801 = scalar_lea.sflag [#allocation13], %s800
        %s802 = sand.u32 %s216, 1
        %s803 = scalar_lea.vmem [#allocation12], %s802
        %p804 = pneg %p229
        %p805 = pneg %p226
        %s806 = sand.u32 %s40, 1
        %s807 = scalar_lea.sflag [#allocation13], %s806
        %s808 = sand.u32 %s242, 1
        %s809 = smul.addr %s808, 128
        %s810 = scalar_lea.vmem [#allocation14], %s809
        %p811 = pneg %p255
        %p812 = pneg %p252
        %p813 = scmp.lt.s32.totalorder %s45, 1
        %s814 = scalar_select %p813, %s45, 1
        %s815 = smul.addr %s814, 2
        %s816 = scalar_lea.vmem %s8, %s815
        %p817 = pneg %p281
        %p818 = pneg %p278
        %s819 = sand.u32 %s40, 1
        %s820 = scalar_lea.sflag [#allocation16], %s819
        %s821 = sand.u32 %s294, 1
        %s822 = smul.addr %s821, 128
        %s823 = scalar_lea.vmem [#allocation15], %s822
        %p824 = pneg %p307
        %p825 = pneg %p304
        %p826 = scmp.lt.s32.totalorder %s45, 1
        %s827 = scalar_select %p826, %s45, 1
        %s828 = scalar_lea.vmem %s10, %s827
        %p829 = pneg %p333
        %p830 = pneg %p330
        %p831 = scmp.lt.s32.totalorder %s45, 1
        %s832 = scalar_select %p831, %s45, 1
        %s833 = scalar_lea.vmem %s11, %s832
        %p834 = pneg %p359
        %p835 = pneg %p356
        %s836 = sand.u32 %s40, 1
        %s837 = scalar_lea.sflag [#allocation16], %s836
        %s838 = sand.u32 %s372, 1
        %s839 = scalar_lea.vmem [#allocation17], %s838
        %p840 = pneg %p385
        %p841 = pneg %p382
        %p842 = pneg %p406
        %p843 = pneg %p403
        %p844 = pneg %p427
        %p845 = pneg %p424
        %p846 = pneg %p453
        %p847 = pneg %p450
        %p848 = scmp.lt.s32.totalorder %s45, 1
        %s849 = scalar_select %p848, %s45, 1
        %s850 = scalar_lea.vmem %s4, %s849
        %p851 = scmp.lt.s32.totalorder %s45, 1
        %s852 = scalar_select %p851, %s45, 1
        %s853 = smul.addr %s852, 2
        %s854 = scalar_lea.vmem %s8, %s853
        %p855 = scmp.lt.s32.totalorder %s45, 1
        %s856 = scalar_select %p855, %s45, 1
        %s857 = scalar_lea.vmem %s10, %s856
        %p858 = scmp.lt.s32.totalorder %s45, 1
        %s859 = scalar_select %p858, %s45, 1
        %s860 = scalar_lea.vmem %s11, %s859
        %p862 = scmp.eq.s32.totalorder %s45, 0
        // Predicated region
        $region117: #{tpu_custom_call.1} parent=79 // pred_check
          %p863 = pneg %p862
        $region118: #{tpu_custom_call.1} parent=79 // pred_check_branch
          %865 = sbr.rel (%p863) target = $region120
        $region119: #{tpu_custom_call.1} parent=79 // pred_region
          %v866 = vld [vmem:[#allocation3] sm:$0x3]
          %v867 = vld [vmem:[#allocation3 + $0x2] sm:$0x3]
          %v868 = vld [vmem:[#allocation3 + $0x4] sm:$0x3]
          %v869 = vld [vmem:[#allocation3 + $0x6] sm:$0x3]
          %v870 = vld [vmem:[#allocation3 + $0x8] sm:$0x3]
          %v871 = vld [vmem:[#allocation3 + $0xa] sm:$0x3]
          %v872 = vld [vmem:[#allocation3 + $0xc] sm:$0x3]
          %v873 = vld [vmem:[#allocation3 + $0xe] sm:$0x3]
          %874 = vst [vmem:[#allocation18] sm:$0x3] %v866
          %875 = vst [vmem:[#allocation18 + $0x2] sm:$0x3] %v867
          %876 = vst [vmem:[#allocation18 + $0x4] sm:$0x3] %v868
          %877 = vst [vmem:[#allocation18 + $0x6] sm:$0x3] %v869
          %878 = vst [vmem:[#allocation18 + $0x8] sm:$0x3] %v870
          %879 = vst [vmem:[#allocation18 + $0xa] sm:$0x3] %v871
          %880 = vst [vmem:[#allocation18 + $0xc] sm:$0x3] %v872
          %881 = vst [vmem:[#allocation18 + $0xe] sm:$0x3] %v873
        $region120: #{tpu_custom_call.1} parent=79 // pred_fallthru
          _
        %v882 = vld [vmem:[#allocation18] sm:$0x3]
        %v883 = vld [vmem:[#allocation18 + $0x2] sm:$0x3]
        %v884 = vld [vmem:[#allocation18 + $0x4] sm:$0x3]
        %v885 = vld [vmem:[#allocation18 + $0x6] sm:$0x3]
        %v886 = vld [vmem:[#allocation18 + $0x8] sm:$0x3]
        %v887 = vld [vmem:[#allocation18 + $0xa] sm:$0x3]
        %v888 = vld [vmem:[#allocation18 + $0xc] sm:$0x3]
        %v889 = vld [vmem:[#allocation18 + $0xe] sm:$0x3]
        %898 = vst [vmem:[#allocation1] ss:$4 sm:$0xff] %v882
        %s899 = scalar_lea.vmem [#allocation1], 1
        %900 = vst [vmem:[%s899] ss:$4 sm:$0xff] %v883
        %s901 = scalar_lea.vmem [#allocation1], 2
        %902 = vst [vmem:[%s901] ss:$4 sm:$0xff] %v884
        %s903 = scalar_lea.vmem [#allocation1], 3
        %904 = vst [vmem:[%s903] ss:$4 sm:$0xff] %v885
        %s905 = scalar_lea.vmem [#allocation1], 32
        %906 = vst [vmem:[%s905] ss:$4 sm:$0xff] %v886
        %s907 = scalar_lea.vmem [#allocation1], 33
        %908 = vst [vmem:[%s907] ss:$4 sm:$0xff] %v887
        %s909 = scalar_lea.vmem [#allocation1], 34
        %910 = vst [vmem:[%s909] ss:$4 sm:$0xff] %v888
        %s911 = scalar_lea.vmem [#allocation1], 35
        %912 = vst [vmem:[%s911] ss:$4 sm:$0xff] %v889
        %v913 = vld.sshfl [vmem:[#allocation1] sm:$0xff pattern:$0x73625140]
        %v914 = vld.sshfl [vmem:[#allocation1 + $0x20] sm:$0xff pattern:$0x73625140]
        %v917 = vpack.c.bf16 %v914, %v913
        %v918 = vld [vmem:[%s693] sm:$0xff]
        %v919 = vld [vmem:[%s693 + $0x8] sm:$0xf]
        %v920 = vld [vmem:[%s693 + $0xc] sm:$0xff]
        %v921 = vld [vmem:[%s693 + $0x14] sm:$0xf]
        %v922 = vld [vmem:[%s693 + $0x18] sm:$0xff]
        %v923 = vld [vmem:[%s693 + $0x20] sm:$0xf]
        %v924 = vld [vmem:[%s693 + $0x24] sm:$0xff]
        %v925 = vld [vmem:[%s693 + $0x2c] sm:$0xf]
        %v926 = vld [vmem:[%s693 + $0x30] sm:$0xff]
        %v927 = vld [vmem:[%s693 + $0x38] sm:$0xf]
        %v928 = vld [vmem:[%s693 + $0x3c] sm:$0xff]
        %v929 = vld [vmem:[%s693 + $0x44] sm:$0xf]
        %v930 = vld [vmem:[%s693 + $0x48] sm:$0xff]
        %v931 = vld [vmem:[%s693 + $0x50] sm:$0xf]
        %v932 = vld [vmem:[%s693 + $0x54] sm:$0xff]
        %v933 = vld [vmem:[%s693 + $0x5c] sm:$0xf]
        %v934 = vld [vmem:[%s693 + $0x60] sm:$0xff]
        %v935 = vld [vmem:[%s693 + $0x68] sm:$0xf]
        %v936 = vld [vmem:[%s693 + $0x6c] sm:$0xff]
        %v937 = vld [vmem:[%s693 + $0x74] sm:$0xf]
        %v938 = vld [vmem:[%s693 + $0x78] sm:$0xff]
        %v939 = vld [vmem:[%s693 + $0x80] sm:$0xf]
        %v940 = vld [vmem:[%s693 + $0x84] sm:$0xff]
        %v941 = vld [vmem:[%s693 + $0x8c] sm:$0xf]
        %v942 = vld [vmem:[%s693 + $0x90] sm:$0xff]
        %v943 = vld [vmem:[%s693 + $0x98] sm:$0xf]
        %v944 = vld [vmem:[%s693 + $0x9c] sm:$0xff]
        %v945 = vld [vmem:[%s693 + $0xa4] sm:$0xf]
        %v946 = vld [vmem:[%s693 + $0xa8] sm:$0xff]
        %v947 = vld [vmem:[%s693 + $0xb0] sm:$0xf]
        %v948 = vld [vmem:[%s693 + $0xb4] sm:$0xff]
        %v949 = vld [vmem:[%s693 + $0xbc] sm:$0xf]
        %v950 = vld [vmem:[%s703] sm:$0x7]
        %v952 = vperm.slane %v950, 0
        %v953 = vperm.slane %v950, 1
        %v954 = vperm.slane %v950, 2
        %v990 = vunpack.c.l.b16 %v918
        %v991 = vunpack.c.h.b16 %v918
        %v992 = vunpack.c.l.b16 %v919
        %v993 = vunpack.c.l.b16 %v920
        %v994 = vunpack.c.h.b16 %v920
        %v995 = vunpack.c.l.b16 %v921
        %v996 = vunpack.c.l.b16 %v922
        %v997 = vunpack.c.h.b16 %v922
        %v998 = vunpack.c.l.b16 %v923
        %v999 = vunpack.c.l.b16 %v924
        %v1000 = vunpack.c.h.b16 %v924
        %v1001 = vunpack.c.l.b16 %v925
        %v1002 = vunpack.c.l.b16 %v926
        %v1003 = vunpack.c.h.b16 %v926
        %v1004 = vunpack.c.l.b16 %v927
        %v1005 = vunpack.c.l.b16 %v928
        %v1006 = vunpack.c.h.b16 %v928
        %v1007 = vunpack.c.l.b16 %v929
        %v1008 = vunpack.c.l.b16 %v930
        %v1009 = vunpack.c.h.b16 %v930
        %v1010 = vunpack.c.l.b16 %v931
        %v1011 = vunpack.c.l.b16 %v932
        %v1012 = vunpack.c.h.b16 %v932
        %v1013 = vunpack.c.l.b16 %v933
        %v1014 = vunpack.c.l.b16 %v934
        %v1015 = vunpack.c.h.b16 %v934
        %v1016 = vunpack.c.l.b16 %v935
        %v1017 = vunpack.c.l.b16 %v936
        %v1018 = vunpack.c.h.b16 %v936
        %v1019 = vunpack.c.l.b16 %v937
        %v1020 = vunpack.c.l.b16 %v938
        %v1021 = vunpack.c.h.b16 %v938
        %v1022 = vunpack.c.l.b16 %v939
        %v1023 = vunpack.c.l.b16 %v940
        %v1024 = vunpack.c.h.b16 %v940
        %v1025 = vunpack.c.l.b16 %v941
        %v1026 = vunpack.c.l.b16 %v942
        %v1027 = vunpack.c.h.b16 %v942
        %v1028 = vunpack.c.l.b16 %v943
        %v1029 = vunpack.c.l.b16 %v944
        %v1030 = vunpack.c.h.b16 %v944
        %v1031 = vunpack.c.l.b16 %v945
        %v1032 = vunpack.c.l.b16 %v946
        %v1033 = vunpack.c.h.b16 %v946
        %v1034 = vunpack.c.l.b16 %v947
        %v1035 = vunpack.c.l.b16 %v948
        %v1036 = vunpack.c.h.b16 %v948
        %v1037 = vunpack.c.l.b16 %v949
        %v1038 = vpack.c.b16 %v993, %v990
        %v1039 = vpack.c.b16 %v994, %v991
        %v1040 = vpack.c.b16 %v995, %v992
        %v1041 = vpack.c.b16 %v999, %v996
        %v1042 = vpack.c.b16 %v1000, %v997
        %v1043 = vpack.c.b16 %v1001, %v998
        %v1044 = vpack.c.b16 %v1005, %v1002
        %v1045 = vpack.c.b16 %v1006, %v1003
        %v1046 = vpack.c.b16 %v1007, %v1004
        %v1047 = vpack.c.b16 %v1011, %v1008
        %v1048 = vpack.c.b16 %v1012, %v1009
        %v1049 = vpack.c.b16 %v1013, %v1010
        %v1050 = vpack.c.b16 %v1017, %v1014
        %v1051 = vpack.c.b16 %v1018, %v1015
        %v1052 = vpack.c.b16 %v1019, %v1016
        %v1053 = vpack.c.b16 %v1023, %v1020
        %v1054 = vpack.c.b16 %v1024, %v1021
        %v1055 = vpack.c.b16 %v1025, %v1022
        %v1056 = vpack.c.b16 %v1029, %v1026
        %v1057 = vpack.c.b16 %v1030, %v1027
        %v1058 = vpack.c.b16 %v1031, %v1028
        %v1059 = vpack.c.b16 %v1035, %v1032
        %v1060 = vpack.c.b16 %v1036, %v1033
        %v1061 = vpack.c.b16 %v1037, %v1034
        %1086 = vmatpush.bf16.msra.mxu0 %v1059
        %1087 = vmatpush.bf16.msra.mxu0 %v1056
        %1088 = vmatpush.bf16.msra.mxu0 %v1053
        %1089 = vmatpush.bf16.msra.mxu0 %v1050
        %1090 = vmatpush.bf16.msra.mxu0 %v1047
        %1091 = vmatpush.bf16.msra.mxu0 %v1044
        %1092 = vmatpush.bf16.msra.mxu0 %v1041
        %1093 = vmatpush.bf16.msra.mxu0 %v1038
        %1094 = vmatmul.bf16.gmra.mxu0 %v917
        %v1095 = vpop.f32.mrf.mxu0
        %v1096 = vadd.f32 %v952, %v1095
        %v1097 = vpop.f32.mrf.mxu0
        %v1098 = vadd.f32 %v952, %v1097
        %1099 = vdwg.mxu0
        %1100 = vmatpush.bf16.msra.mxu0 %v1060
        %1101 = vmatpush.bf16.msra.mxu0 %v1057
        %1102 = vmatpush.bf16.msra.mxu0 %v1054
        %1103 = vmatpush.bf16.msra.mxu0 %v1051
        %1104 = vmatpush.bf16.msra.mxu0 %v1048
        %1105 = vmatpush.bf16.msra.mxu0 %v1045
        %1106 = vmatpush.bf16.msra.mxu0 %v1042
        %1107 = vmatpush.bf16.msra.mxu0 %v1039
        %1108 = vmatmul.bf16.gmra.mxu0 %v917
        %v1109 = vpop.f32.mrf.mxu0
        %v1110 = vadd.f32 %v953, %v1109
        %v1111 = vpop.f32.mrf.mxu0
        %v1112 = vadd.f32 %v953, %v1111
        %1113 = vdwg.mxu0
        %1114 = vmatpush.bf16.msra.mxu0 %v1061
        %1115 = vmatpush.bf16.msra.mxu0 %v1058
        %1116 = vmatpush.bf16.msra.mxu0 %v1055
        %1117 = vmatpush.bf16.msra.mxu0 %v1052
        %1118 = vmatpush.bf16.msra.mxu0 %v1049
        %1119 = vmatpush.bf16.msra.mxu0 %v1046
        %1120 = vmatpush.bf16.msra.mxu0 %v1043
        %1121 = vmatpush.bf16.msra.mxu0 %v1040
        %1122 = vmatmul.bf16.gmra.mxu0 %v917
        %v1123 = vpop.f32.mrf.mxu0
        %v1124 = vadd.f32 %v954, %v1123
        %v1125 = vpop.f32.mrf.mxu0
        %v1126 = vadd.f32 %v954, %v1125
        %1127 = vdwg.mxu0
        %v1134 = vrot.slane %v1110, 6
        %v1135 = vrot.slane %v1124, 4
        %v1136 = vrot.slane %v1112, 6
        %v1137 = vrot.slane %v1126, 4
        %vm1138 = vcmask 1041408
        %v1139 = vsel %vm1138, %v1096, %v1134
        %vm1140 = vcmask 1043456
        %v1141 = vsel %vm1140, %v1139, %v1135
        %vm1142 = vcmask 1043458
        %v1143 = vsel %vm1142, %v1096, %v1134
        %vm1144 = vcmask 1045506
        %v1145 = vsel %vm1144, %v1143, %v1135
        %v1146 = vrot.slane %v1145, 2
        %vm1147 = vcmask 1045508
        %v1148 = vsel %vm1147, %v1096, %v1134
        %v1149 = vsel %vm1140, %v1135, %v1148
        %v1150 = vrot.slane %v1149, 4
        %vm1151 = vcmask 1045504
        %v1152 = vsel %vm1151, %v1134, %v1096
        %v1153 = vsel %vm1144, %v1135, %v1152
        %v1154 = vrot.slane %v1153, 6
        %v1155 = vsel %vm1138, %v1098, %v1136
        %v1156 = vsel %vm1140, %v1155, %v1137
        %v1157 = vsel %vm1142, %v1098, %v1136
        %v1158 = vsel %vm1144, %v1157, %v1137
        %v1159 = vrot.slane %v1158, 2
        %v1160 = vsel %vm1147, %v1098, %v1136
        %v1161 = vsel %vm1140, %v1137, %v1160
        %v1162 = vrot.slane %v1161, 4
        %v1163 = vsel %vm1151, %v1136, %v1098
        %v1164 = vsel %vm1144, %v1137, %v1163
        %v1165 = vrot.slane %v1164, 6
        %1174 = vrot.lane.b32.xlu0 %v1141, 96
        %v1175 = vpop.permute.xlu0 %1174
        %1176 = vrot.lane.b32.xlu0 %v1146, 96
        %v1177 = vpop.permute.xlu0 %1176
        %1178 = vrot.lane.b32.xlu0 %v1150, 96
        %v1179 = vpop.permute.xlu0 %1178
        %1180 = vrot.lane.b32.xlu0 %v1154, 96
        %v1181 = vpop.permute.xlu0 %1180
        %1182 = vrot.lane.b32.xlu0 %v1156, 96
        %v1183 = vpop.permute.xlu0 %1182
        %1184 = vrot.lane.b32.xlu0 %v1159, 96
        %v1185 = vpop.permute.xlu0 %1184
        %1186 = vrot.lane.b32.xlu0 %v1162, 96
        %v1187 = vpop.permute.xlu0 %1186
        %1188 = vrot.lane.b32.xlu0 %v1165, 96
        %v1189 = vpop.permute.xlu0 %1188
        %1198 = vrot.lane.b32.xlu0 %v1141, 64
        %v1199 = vpop.permute.xlu0 %1198
        %1200 = vrot.lane.b32.xlu0 %v1146, 64
        %v1201 = vpop.permute.xlu0 %1200
        %1202 = vrot.lane.b32.xlu0 %v1150, 64
        %v1203 = vpop.permute.xlu0 %1202
        %1204 = vrot.lane.b32.xlu0 %v1154, 64
        %v1205 = vpop.permute.xlu0 %1204
        %1206 = vrot.lane.b32.xlu0 %v1156, 64
        %v1207 = vpop.permute.xlu0 %1206
        %1208 = vrot.lane.b32.xlu0 %v1159, 64
        %v1209 = vpop.permute.xlu0 %1208
        %1210 = vrot.lane.b32.xlu0 %v1162, 64
        %v1211 = vpop.permute.xlu0 %1210
        %1212 = vrot.lane.b32.xlu0 %v1165, 64
        %v1213 = vpop.permute.xlu0 %1212
        %1222 = vrot.lane.b32.xlu0 %v1141, 32
        %v1223 = vpop.permute.xlu0 %1222
        %1224 = vrot.lane.b32.xlu0 %v1146, 32
        %v1225 = vpop.permute.xlu0 %1224
        %1226 = vrot.lane.b32.xlu0 %v1150, 32
        %v1227 = vpop.permute.xlu0 %1226
        %1228 = vrot.lane.b32.xlu0 %v1154, 32
        %v1229 = vpop.permute.xlu0 %1228
        %1230 = vrot.lane.b32.xlu0 %v1156, 32
        %v1231 = vpop.permute.xlu0 %1230
        %1232 = vrot.lane.b32.xlu0 %v1159, 32
        %v1233 = vpop.permute.xlu0 %1232
        %1234 = vrot.lane.b32.xlu0 %v1162, 32
        %v1235 = vpop.permute.xlu0 %1234
        %1236 = vrot.lane.b32.xlu0 %v1165, 32
        %v1237 = vpop.permute.xlu0 %1236
        %v1246 = vmul.f32 %v1141, 0.17677669
        %v1247 = vmul.f32 %v1146, 0.17677669
        %v1248 = vmul.f32 %v1150, 0.17677669
        %v1249 = vmul.f32 %v1154, 0.17677669
        %v1250 = vmul.f32 %v1156, 0.17677669
        %v1251 = vmul.f32 %v1159, 0.17677669
        %v1252 = vmul.f32 %v1162, 0.17677669
        %v1253 = vmul.f32 %v1165, 0.17677669
        %v1254 = vmul.f32 %v1175, 0.17677669
        %v1255 = vmul.f32 %v1177, 0.17677669
        %v1256 = vmul.f32 %v1179, 0.17677669
        %v1257 = vmul.f32 %v1181, 0.17677669
        %v1258 = vmul.f32 %v1183, 0.17677669
        %v1259 = vmul.f32 %v1185, 0.17677669
        %v1260 = vmul.f32 %v1187, 0.17677669
        %v1261 = vmul.f32 %v1189, 0.17677669
        %v1262 = vmul.f32 %v1199, 0.17677669
        %v1263 = vmul.f32 %v1201, 0.17677669
        %v1264 = vmul.f32 %v1203, 0.17677669
        %v1265 = vmul.f32 %v1205, 0.17677669
        %v1266 = vmul.f32 %v1207, 0.17677669
        %v1267 = vmul.f32 %v1209, 0.17677669
        %v1268 = vmul.f32 %v1211, 0.17677669
        %v1269 = vmul.f32 %v1213, 0.17677669
        %v1270 = vmul.f32 %v1223, 0.17677669
        %v1271 = vmul.f32 %v1225, 0.17677669
        %v1272 = vmul.f32 %v1227, 0.17677669
        %v1273 = vmul.f32 %v1229, 0.17677669
        %v1274 = vmul.f32 %v1231, 0.17677669
        %v1275 = vmul.f32 %v1233, 0.17677669
        %v1276 = vmul.f32 %v1235, 0.17677669
        %v1277 = vmul.f32 %v1237, 0.17677669
        %v1278 = vrot.slane %v1141, 2
        %v1279 = vrot.slane %v1146, 2
        %v1280 = vrot.slane %v1150, 2
        %v1281 = vrot.slane %v1154, 2
        %v1282 = vrot.slane %v1156, 2
        %v1283 = vrot.slane %v1159, 2
        %v1284 = vrot.slane %v1162, 2
        %v1285 = vrot.slane %v1165, 2
        %v1294 = vrot.slane %v1175, 2
        %v1295 = vrot.slane %v1177, 2
        %v1296 = vrot.slane %v1179, 2
        %v1297 = vrot.slane %v1181, 2
        %v1298 = vrot.slane %v1183, 2
        %v1299 = vrot.slane %v1185, 2
        %v1300 = vrot.slane %v1187, 2
        %v1301 = vrot.slane %v1189, 2
        %v1310 = vrot.slane %v1199, 2
        %v1311 = vrot.slane %v1201, 2
        %v1312 = vrot.slane %v1203, 2
        %v1313 = vrot.slane %v1205, 2
        %v1314 = vrot.slane %v1207, 2
        %v1315 = vrot.slane %v1209, 2
        %v1316 = vrot.slane %v1211, 2
        %v1317 = vrot.slane %v1213, 2
        %v1326 = vrot.slane %v1223, 2
        %v1327 = vrot.slane %v1225, 2
        %v1328 = vrot.slane %v1227, 2
        %v1329 = vrot.slane %v1229, 2
        %v1330 = vrot.slane %v1231, 2
        %v1331 = vrot.slane %v1233, 2
        %v1332 = vrot.slane %v1235, 2
        %v1333 = vrot.slane %v1237, 2
        %v1342 = vrot.slane %v1141, 4
        %v1343 = vrot.slane %v1146, 4
        %v1344 = vrot.slane %v1150, 4
        %v1345 = vrot.slane %v1154, 4
        %v1346 = vrot.slane %v1156, 4
        %v1347 = vrot.slane %v1159, 4
        %v1348 = vrot.slane %v1162, 4
        %v1349 = vrot.slane %v1165, 4
        %v1358 = vrot.slane %v1175, 4
        %v1359 = vrot.slane %v1177, 4
        %v1360 = vrot.slane %v1179, 4
        %v1361 = vrot.slane %v1181, 4
        %v1362 = vrot.slane %v1183, 4
        %v1363 = vrot.slane %v1185, 4
        %v1364 = vrot.slane %v1187, 4
        %v1365 = vrot.slane %v1189, 4
        %v1374 = vrot.slane %v1199, 4
        %v1375 = vrot.slane %v1201, 4
        %v1376 = vrot.slane %v1203, 4
        %v1377 = vrot.slane %v1205, 4
        %v1378 = vrot.slane %v1207, 4
        %v1379 = vrot.slane %v1209, 4
        %v1380 = vrot.slane %v1211, 4
        %v1381 = vrot.slane %v1213, 4
        %v1390 = vrot.slane %v1223, 4
        %v1391 = vrot.slane %v1225, 4
        %v1392 = vrot.slane %v1227, 4
        %v1393 = vrot.slane %v1229, 4
        %v1394 = vrot.slane %v1231, 4
        %v1395 = vrot.slane %v1233, 4
        %v1396 = vrot.slane %v1235, 4
        %v1397 = vrot.slane %v1237, 4
        %v1406 = vpack.c.bf16 %v1246, %v1246
        %v1407 = vpack.c.bf16 %v1247, %v1247
        %v1408 = vpack.c.bf16 %v1248, %v1248
        %v1409 = vpack.c.bf16 %v1249, %v1249
        %v1410 = vpack.c.bf16 %v1250, %v1250
        %v1411 = vpack.c.bf16 %v1251, %v1251
        %v1412 = vpack.c.bf16 %v1252, %v1252
        %v1413 = vpack.c.bf16 %v1253, %v1253
        %v1414 = vpack.c.bf16 %v1254, %v1254
        %v1415 = vpack.c.bf16 %v1255, %v1255
        %v1416 = vpack.c.bf16 %v1256, %v1256
        %v1417 = vpack.c.bf16 %v1257, %v1257
        %v1418 = vpack.c.bf16 %v1258, %v1258
        %v1419 = vpack.c.bf16 %v1259, %v1259
        %v1420 = vpack.c.bf16 %v1260, %v1260
        %v1421 = vpack.c.bf16 %v1261, %v1261
        %v1422 = vpack.c.bf16 %v1262, %v1262
        %v1423 = vpack.c.bf16 %v1263, %v1263
        %v1424 = vpack.c.bf16 %v1264, %v1264
        %v1425 = vpack.c.bf16 %v1265, %v1265
        %v1426 = vpack.c.bf16 %v1266, %v1266
        %v1427 = vpack.c.bf16 %v1267, %v1267
        %v1428 = vpack.c.bf16 %v1268, %v1268
        %v1429 = vpack.c.bf16 %v1269, %v1269
        %v1430 = vpack.c.bf16 %v1270, %v1270
        %v1431 = vpack.c.bf16 %v1271, %v1271
        %v1432 = vpack.c.bf16 %v1272, %v1272
        %v1433 = vpack.c.bf16 %v1273, %v1273
        %v1434 = vpack.c.bf16 %v1274, %v1274
        %v1435 = vpack.c.bf16 %v1275, %v1275
        %v1436 = vpack.c.bf16 %v1276, %v1276
        %v1437 = vpack.c.bf16 %v1277, %v1277
        %v1438 = vpack.c.bf16 %v1278, %v1278
        %v1439 = vpack.c.bf16 %v1279, %v1279
        %v1440 = vpack.c.bf16 %v1280, %v1280
        %v1441 = vpack.c.bf16 %v1281, %v1281
        %v1442 = vpack.c.bf16 %v1282, %v1282
        %v1443 = vpack.c.bf16 %v1283, %v1283
        %v1444 = vpack.c.bf16 %v1284, %v1284
        %v1445 = vpack.c.bf16 %v1285, %v1285
        %v1446 = vpack.c.bf16 %v1294, %v1294
        %v1447 = vpack.c.bf16 %v1295, %v1295
        %v1448 = vpack.c.bf16 %v1296, %v1296
        %v1449 = vpack.c.bf16 %v1297, %v1297
        %v1450 = vpack.c.bf16 %v1298, %v1298
        %v1451 = vpack.c.bf16 %v1299, %v1299
        %v1452 = vpack.c.bf16 %v1300, %v1300
        %v1453 = vpack.c.bf16 %v1301, %v1301
        %v1454 = vpack.c.bf16 %v1310, %v1310
        %v1455 = vpack.c.bf16 %v1311, %v1311
        %v1456 = vpack.c.bf16 %v1312, %v1312
        %v1457 = vpack.c.bf16 %v1313, %v1313
        %v1458 = vpack.c.bf16 %v1314, %v1314
        %v1459 = vpack.c.bf16 %v1315, %v1315
        %v1460 = vpack.c.bf16 %v1316, %v1316
        %v1461 = vpack.c.bf16 %v1317, %v1317
        %v1462 = vpack.c.bf16 %v1326, %v1326
        %v1463 = vpack.c.bf16 %v1327, %v1327
        %v1464 = vpack.c.bf16 %v1328, %v1328
        %v1465 = vpack.c.bf16 %v1329, %v1329
        %v1466 = vpack.c.bf16 %v1330, %v1330
        %v1467 = vpack.c.bf16 %v1331, %v1331
        %v1468 = vpack.c.bf16 %v1332, %v1332
        %v1469 = vpack.c.bf16 %v1333, %v1333
        %v1478 = vunpack.c.l.b16 %v1406
        %v1479 = vunpack.c.l.b16 %v1407
        %v1480 = vunpack.c.l.b16 %v1408
        %v1481 = vunpack.c.l.b16 %v1409
        %v1482 = vunpack.c.l.b16 %v1410
        %v1483 = vunpack.c.l.b16 %v1411
        %v1484 = vunpack.c.l.b16 %v1412
        %v1485 = vunpack.c.l.b16 %v1413
        %v1486 = vpack.c.b16 %v1478, %v1478
        %v1487 = vpack.c.b16 %v1479, %v1479
        %v1488 = vpack.c.b16 %v1480, %v1480
        %v1489 = vpack.c.b16 %v1481, %v1481
        %v1490 = vpack.c.b16 %v1482, %v1482
        %v1491 = vpack.c.b16 %v1483, %v1483
        %v1492 = vpack.c.b16 %v1484, %v1484
        %v1493 = vpack.c.b16 %v1485, %v1485
        %v1494 = vunpack.c.l.b16 %v1486
        %v1495 = vunpack.c.l.b16 %v1487
        %v1496 = vunpack.c.l.b16 %v1488
        %v1497 = vunpack.c.l.b16 %v1489
        %v1498 = vunpack.c.l.b16 %v1490
        %v1499 = vunpack.c.l.b16 %v1491
        %v1500 = vunpack.c.l.b16 %v1492
        %v1501 = vunpack.c.l.b16 %v1493
        %v1502 = vrot.slane %v1495, 7
        %vm1503 = vcmask 1041409
        %v1504 = vsel %vm1503, %v1502, %v1494
        %v1505 = vrot.slane %v1496, 6
        %vm1506 = vcmask 1042434
        %v1507 = vsel %vm1506, %v1505, %v1504
        %v1508 = vrot.slane %v1497, 5
        %vm1509 = vcmask 1043459
        %v1510 = vsel %vm1509, %v1508, %v1507
        %v1511 = vrot.slane %v1498, 4
        %vm1512 = vcmask 1044484
        %v1513 = vsel %vm1512, %v1511, %v1510
        %v1514 = vrot.slane %v1499, 3
        %vm1515 = vcmask 1045509
        %v1516 = vsel %vm1515, %v1514, %v1513
        %v1517 = vrot.slane %v1500, 2
        %vm1518 = vcmask 1046534
        %v1519 = vsel %vm1518, %v1517, %v1516
        %v1520 = vrot.slane %v1501, 1
        %vm1521 = vcmask 1047559
        %v1522 = vsel %vm1521, %v1520, %v1519
        %v1523 = vpack.c.b16 %v1522, %v1522
        %v1532 = vunpack.c.l.b16 %v1438
        %v1533 = vunpack.c.l.b16 %v1439
        %v1534 = vunpack.c.l.b16 %v1440
        %v1535 = vunpack.c.l.b16 %v1441
        %v1536 = vunpack.c.l.b16 %v1442
        %v1537 = vunpack.c.l.b16 %v1443
        %v1538 = vunpack.c.l.b16 %v1444
        %v1539 = vunpack.c.l.b16 %v1445
        %v1540 = vpack.c.b16 %v1532, %v1532
        %v1541 = vpack.c.b16 %v1533, %v1533
        %v1542 = vpack.c.b16 %v1534, %v1534
        %v1543 = vpack.c.b16 %v1535, %v1535
        %v1544 = vpack.c.b16 %v1536, %v1536
        %v1545 = vpack.c.b16 %v1537, %v1537
        %v1546 = vpack.c.b16 %v1538, %v1538
        %v1547 = vpack.c.b16 %v1539, %v1539
        %v1548 = vunpack.c.l.b16 %v1540
        %v1549 = vunpack.c.l.b16 %v1541
        %v1550 = vunpack.c.l.b16 %v1542
        %v1551 = vunpack.c.l.b16 %v1543
        %v1552 = vunpack.c.l.b16 %v1544
        %v1553 = vunpack.c.l.b16 %v1545
        %v1554 = vunpack.c.l.b16 %v1546
        %v1555 = vunpack.c.l.b16 %v1547
        %v1556 = vrot.slane %v1549, 7
        %v1557 = vsel %vm1503, %v1556, %v1548
        %v1558 = vrot.slane %v1550, 6
        %v1559 = vsel %vm1506, %v1558, %v1557
        %v1560 = vrot.slane %v1551, 5
        %v1561 = vsel %vm1509, %v1560, %v1559
        %v1562 = vrot.slane %v1552, 4
        %v1563 = vsel %vm1512, %v1562, %v1561
        %v1564 = vrot.slane %v1553, 3
        %v1565 = vsel %vm1515, %v1564, %v1563
        %v1566 = vrot.slane %v1554, 2
        %v1567 = vsel %vm1518, %v1566, %v1565
        %v1568 = vrot.slane %v1555, 1
        %v1569 = vsel %vm1521, %v1568, %v1567
        %v1570 = vpack.c.b16 %v1569, %v1569
        %vm1571 = vcmask 261120
        %v1573 = vsel %vm1571, %v1523, 0
        %v1576 = vsel %vm1571, %v1570, 0
        %1578 = vmatpush.bf16.xpose.msra.mxu0 0
        %1579 = vmatpush.bf16.xpose.msra.mxu0 0
        %1580 = vmatpush.bf16.xpose.msra.mxu0 0
        %1581 = vmatpush.bf16.xpose.msra.mxu0 0
        %1582 = vmatpush.bf16.xpose.msra.mxu0 0
        %1583 = vmatpush.bf16.xpose.msra.mxu0 0
        %1584 = vmatpush.bf16.xpose.msra.mxu0 0
        %1585 = vmatpush.bf16.xpose.msra.mxu0 %v1576
        %1586 = vmatmul.bf16.gmra.mxu0 %v1573
        %v1587 = vpop.f32.mrf.mxu0
        %v1588 = vadd.f32 0.0, %v1587
        %v1589 = vpop.f32.mrf.mxu0
        %1590 = vdwg.mxu0
        %v1599 = vunpack.c.l.b16 %v1414
        %v1600 = vunpack.c.l.b16 %v1415
        %v1601 = vunpack.c.l.b16 %v1416
        %v1602 = vunpack.c.l.b16 %v1417
        %v1603 = vunpack.c.l.b16 %v1418
        %v1604 = vunpack.c.l.b16 %v1419
        %v1605 = vunpack.c.l.b16 %v1420
        %v1606 = vunpack.c.l.b16 %v1421
        %v1607 = vpack.c.b16 %v1599, %v1599
        %v1608 = vpack.c.b16 %v1600, %v1600
        %v1609 = vpack.c.b16 %v1601, %v1601
        %v1610 = vpack.c.b16 %v1602, %v1602
        %v1611 = vpack.c.b16 %v1603, %v1603
        %v1612 = vpack.c.b16 %v1604, %v1604
        %v1613 = vpack.c.b16 %v1605, %v1605
        %v1614 = vpack.c.b16 %v1606, %v1606
        %v1615 = vunpack.c.l.b16 %v1607
        %v1616 = vunpack.c.l.b16 %v1608
        %v1617 = vunpack.c.l.b16 %v1609
        %v1618 = vunpack.c.l.b16 %v1610
        %v1619 = vunpack.c.l.b16 %v1611
        %v1620 = vunpack.c.l.b16 %v1612
        %v1621 = vunpack.c.l.b16 %v1613
        %v1622 = vunpack.c.l.b16 %v1614
        %v1623 = vrot.slane %v1616, 7
        %v1624 = vsel %vm1503, %v1623, %v1615
        %v1625 = vrot.slane %v1617, 6
        %v1626 = vsel %vm1506, %v1625, %v1624
        %v1627 = vrot.slane %v1618, 5
        %v1628 = vsel %vm1509, %v1627, %v1626
        %v1629 = vrot.slane %v1619, 4
        %v1630 = vsel %vm1512, %v1629, %v1628
        %v1631 = vrot.slane %v1620, 3
        %v1632 = vsel %vm1515, %v1631, %v1630
        %v1633 = vrot.slane %v1621, 2
        %v1634 = vsel %vm1518, %v1633, %v1632
        %v1635 = vrot.slane %v1622, 1
        %v1636 = vsel %vm1521, %v1635, %v1634
        %v1637 = vpack.c.b16 %v1636, %v1636
        %v1646 = vunpack.c.l.b16 %v1446
        %v1647 = vunpack.c.l.b16 %v1447
        %v1648 = vunpack.c.l.b16 %v1448
        %v1649 = vunpack.c.l.b16 %v1449
        %v1650 = vunpack.c.l.b16 %v1450
        %v1651 = vunpack.c.l.b16 %v1451
        %v1652 = vunpack.c.l.b16 %v1452
        %v1653 = vunpack.c.l.b16 %v1453
        %v1654 = vpack.c.b16 %v1646, %v1646
        %v1655 = vpack.c.b16 %v1647, %v1647
        %v1656 = vpack.c.b16 %v1648, %v1648
        %v1657 = vpack.c.b16 %v1649, %v1649
        %v1658 = vpack.c.b16 %v1650, %v1650
        %v1659 = vpack.c.b16 %v1651, %v1651
        %v1660 = vpack.c.b16 %v1652, %v1652
        %v1661 = vpack.c.b16 %v1653, %v1653
        %v1662 = vunpack.c.l.b16 %v1654
        %v1663 = vunpack.c.l.b16 %v1655
        %v1664 = vunpack.c.l.b16 %v1656
        %v1665 = vunpack.c.l.b16 %v1657
        %v1666 = vunpack.c.l.b16 %v1658
        %v1667 = vunpack.c.l.b16 %v1659
        %v1668 = vunpack.c.l.b16 %v1660
        %v1669 = vunpack.c.l.b16 %v1661
        %v1670 = vrot.slane %v1663, 7
        %v1671 = vsel %vm1503, %v1670, %v1662
        %v1672 = vrot.slane %v1664, 6
        %v1673 = vsel %vm1506, %v1672, %v1671
        %v1674 = vrot.slane %v1665, 5
        %v1675 = vsel %vm1509, %v1674, %v1673
        %v1676 = vrot.slane %v1666, 4
        %v1677 = vsel %vm1512, %v1676, %v1675
        %v1678 = vrot.slane %v1667, 3
        %v1679 = vsel %vm1515, %v1678, %v1677
        %v1680 = vrot.slane %v1668, 2
        %v1681 = vsel %vm1518, %v1680, %v1679
        %v1682 = vrot.slane %v1669, 1
        %v1683 = vsel %vm1521, %v1682, %v1681
        %v1684 = vpack.c.b16 %v1683, %v1683
        %v1686 = vsel %vm1571, %v1637, 0
        %v1689 = vsel %vm1571, %v1684, 0
        %1691 = vmatpush.bf16.xpose.msra.mxu0 0
        %1692 = vmatpush.bf16.xpose.msra.mxu0 0
        %1693 = vmatpush.bf16.xpose.msra.mxu0 0
        %1694 = vmatpush.bf16.xpose.msra.mxu0 0
        %1695 = vmatpush.bf16.xpose.msra.mxu0 0
        %1696 = vmatpush.bf16.xpose.msra.mxu0 0
        %1697 = vmatpush.bf16.xpose.msra.mxu0 0
        %1698 = vmatpush.bf16.xpose.msra.mxu0 %v1689
        %1699 = vmatmul.bf16.gmra.mxu0 %v1686
        %v1700 = vpop.f32.mrf.mxu0
        %v1701 = vadd.f32 0.0, %v1700
        %v1702 = vpop.f32.mrf.mxu0
        %1703 = vdwg.mxu0
        %v1712 = vunpack.c.l.b16 %v1422
        %v1713 = vunpack.c.l.b16 %v1423
        %v1714 = vunpack.c.l.b16 %v1424
        %v1715 = vunpack.c.l.b16 %v1425
        %v1716 = vunpack.c.l.b16 %v1426
        %v1717 = vunpack.c.l.b16 %v1427
        %v1718 = vunpack.c.l.b16 %v1428
        %v1719 = vunpack.c.l.b16 %v1429
        %v1720 = vpack.c.b16 %v1712, %v1712
        %v1721 = vpack.c.b16 %v1713, %v1713
        %v1722 = vpack.c.b16 %v1714, %v1714
        %v1723 = vpack.c.b16 %v1715, %v1715
        %v1724 = vpack.c.b16 %v1716, %v1716
        %v1725 = vpack.c.b16 %v1717, %v1717
        %v1726 = vpack.c.b16 %v1718, %v1718
        %v1727 = vpack.c.b16 %v1719, %v1719
        %v1728 = vunpack.c.l.b16 %v1720
        %v1729 = vunpack.c.l.b16 %v1721
        %v1730 = vunpack.c.l.b16 %v1722
        %v1731 = vunpack.c.l.b16 %v1723
        %v1732 = vunpack.c.l.b16 %v1724
        %v1733 = vunpack.c.l.b16 %v1725
        %v1734 = vunpack.c.l.b16 %v1726
        %v1735 = vunpack.c.l.b16 %v1727
        %v1736 = vrot.slane %v1729, 7
        %v1737 = vsel %vm1503, %v1736, %v1728
        %v1738 = vrot.slane %v1730, 6
        %v1739 = vsel %vm1506, %v1738, %v1737
        %v1740 = vrot.slane %v1731, 5
        %v1741 = vsel %vm1509, %v1740, %v1739
        %v1742 = vrot.slane %v1732, 4
        %v1743 = vsel %vm1512, %v1742, %v1741
        %v1744 = vrot.slane %v1733, 3
        %v1745 = vsel %vm1515, %v1744, %v1743
        %v1746 = vrot.slane %v1734, 2
        %v1747 = vsel %vm1518, %v1746, %v1745
        %v1748 = vrot.slane %v1735, 1
        %v1749 = vsel %vm1521, %v1748, %v1747
        %v1750 = vpack.c.b16 %v1749, %v1749
        %v1759 = vunpack.c.l.b16 %v1454
        %v1760 = vunpack.c.l.b16 %v1455
        %v1761 = vunpack.c.l.b16 %v1456
        %v1762 = vunpack.c.l.b16 %v1457
        %v1763 = vunpack.c.l.b16 %v1458
        %v1764 = vunpack.c.l.b16 %v1459
        %v1765 = vunpack.c.l.b16 %v1460
        %v1766 = vunpack.c.l.b16 %v1461
        %v1767 = vpack.c.b16 %v1759, %v1759
        %v1768 = vpack.c.b16 %v1760, %v1760
        %v1769 = vpack.c.b16 %v1761, %v1761
        %v1770 = vpack.c.b16 %v1762, %v1762
        %v1771 = vpack.c.b16 %v1763, %v1763
        %v1772 = vpack.c.b16 %v1764, %v1764
        %v1773 = vpack.c.b16 %v1765, %v1765
        %v1774 = vpack.c.b16 %v1766, %v1766
        %v1775 = vunpack.c.l.b16 %v1767
        %v1776 = vunpack.c.l.b16 %v1768
        %v1777 = vunpack.c.l.b16 %v1769
        %v1778 = vunpack.c.l.b16 %v1770
        %v1779 = vunpack.c.l.b16 %v1771
        %v1780 = vunpack.c.l.b16 %v1772
        %v1781 = vunpack.c.l.b16 %v1773
        %v1782 = vunpack.c.l.b16 %v1774
        %v1783 = vrot.slane %v1776, 7
        %v1784 = vsel %vm1503, %v1783, %v1775
        %v1785 = vrot.slane %v1777, 6
        %v1786 = vsel %vm1506, %v1785, %v1784
        %v1787 = vrot.slane %v1778, 5
        %v1788 = vsel %vm1509, %v1787, %v1786
        %v1789 = vrot.slane %v1779, 4
        %v1790 = vsel %vm1512, %v1789, %v1788
        %v1791 = vrot.slane %v1780, 3
        %v1792 = vsel %vm1515, %v1791, %v1790
        %v1793 = vrot.slane %v1781, 2
        %v1794 = vsel %vm1518, %v1793, %v1792
        %v1795 = vrot.slane %v1782, 1
        %v1796 = vsel %vm1521, %v1795, %v1794
        %v1797 = vpack.c.b16 %v1796, %v1796
        %v1799 = vsel %vm1571, %v1750, 0
        %v1802 = vsel %vm1571, %v1797, 0
        %1804 = vmatpush.bf16.xpose.msra.mxu0 0
        %1805 = vmatpush.bf16.xpose.msra.mxu0 0
        %1806 = vmatpush.bf16.xpose.msra.mxu0 0
        %1807 = vmatpush.bf16.xpose.msra.mxu0 0
        %1808 = vmatpush.bf16.xpose.msra.mxu0 0
        %1809 = vmatpush.bf16.xpose.msra.mxu0 0
        %1810 = vmatpush.bf16.xpose.msra.mxu0 0
        %1811 = vmatpush.bf16.xpose.msra.mxu0 %v1802
        %1812 = vmatmul.bf16.gmra.mxu0 %v1799
        %v1813 = vpop.f32.mrf.mxu0
        %v1814 = vadd.f32 0.0, %v1813
        %v1815 = vpop.f32.mrf.mxu0
        %1816 = vdwg.mxu0
        %v1825 = vunpack.c.l.b16 %v1430
        %v1826 = vunpack.c.l.b16 %v1431
        %v1827 = vunpack.c.l.b16 %v1432
        %v1828 = vunpack.c.l.b16 %v1433
        %v1829 = vunpack.c.l.b16 %v1434
        %v1830 = vunpack.c.l.b16 %v1435
        %v1831 = vunpack.c.l.b16 %v1436
        %v1832 = vunpack.c.l.b16 %v1437
        %v1833 = vpack.c.b16 %v1825, %v1825
        %v1834 = vpack.c.b16 %v1826, %v1826
        %v1835 = vpack.c.b16 %v1827, %v1827
        %v1836 = vpack.c.b16 %v1828, %v1828
        %v1837 = vpack.c.b16 %v1829, %v1829
        %v1838 = vpack.c.b16 %v1830, %v1830
        %v1839 = vpack.c.b16 %v1831, %v1831
        %v1840 = vpack.c.b16 %v1832, %v1832
        %v1841 = vunpack.c.l.b16 %v1833
        %v1842 = vunpack.c.l.b16 %v1834
        %v1843 = vunpack.c.l.b16 %v1835
        %v1844 = vunpack.c.l.b16 %v1836
        %v1845 = vunpack.c.l.b16 %v1837
        %v1846 = vunpack.c.l.b16 %v1838
        %v1847 = vunpack.c.l.b16 %v1839
        %v1848 = vunpack.c.l.b16 %v1840
        %v1849 = vrot.slane %v1842, 7
        %v1850 = vsel %vm1503, %v1849, %v1841
        %v1851 = vrot.slane %v1843, 6
        %v1852 = vsel %vm1506, %v1851, %v1850
        %v1853 = vrot.slane %v1844, 5
        %v1854 = vsel %vm1509, %v1853, %v1852
        %v1855 = vrot.slane %v1845, 4
        %v1856 = vsel %vm1512, %v1855, %v1854
        %v1857 = vrot.slane %v1846, 3
        %v1858 = vsel %vm1515, %v1857, %v1856
        %v1859 = vrot.slane %v1847, 2
        %v1860 = vsel %vm1518, %v1859, %v1858
        %v1861 = vrot.slane %v1848, 1
        %v1862 = vsel %vm1521, %v1861, %v1860
        %v1863 = vpack.c.b16 %v1862, %v1862
        %v1872 = vunpack.c.l.b16 %v1462
        %v1873 = vunpack.c.l.b16 %v1463
        %v1874 = vunpack.c.l.b16 %v1464
        %v1875 = vunpack.c.l.b16 %v1465
        %v1876 = vunpack.c.l.b16 %v1466
        %v1877 = vunpack.c.l.b16 %v1467
        %v1878 = vunpack.c.l.b16 %v1468
        %v1879 = vunpack.c.l.b16 %v1469
        %v1880 = vpack.c.b16 %v1872, %v1872
        %v1881 = vpack.c.b16 %v1873, %v1873
        %v1882 = vpack.c.b16 %v1874, %v1874
        %v1883 = vpack.c.b16 %v1875, %v1875
        %v1884 = vpack.c.b16 %v1876, %v1876
        %v1885 = vpack.c.b16 %v1877, %v1877
        %v1886 = vpack.c.b16 %v1878, %v1878
        %v1887 = vpack.c.b16 %v1879, %v1879
        %v1888 = vunpack.c.l.b16 %v1880
        %v1889 = vunpack.c.l.b16 %v1881
        %v1890 = vunpack.c.l.b16 %v1882
        %v1891 = vunpack.c.l.b16 %v1883
        %v1892 = vunpack.c.l.b16 %v1884
        %v1893 = vunpack.c.l.b16 %v1885
        %v1894 = vunpack.c.l.b16 %v1886
        %v1895 = vunpack.c.l.b16 %v1887
        %v1896 = vrot.slane %v1889, 7
        %v1897 = vsel %vm1503, %v1896, %v1888
        %v1898 = vrot.slane %v1890, 6
        %v1899 = vsel %vm1506, %v1898, %v1897
        %v1900 = vrot.slane %v1891, 5
        %v1901 = vsel %vm1509, %v1900, %v1899
        %v1902 = vrot.slane %v1892, 4
        %v1903 = vsel %vm1512, %v1902, %v1901
        %v1904 = vrot.slane %v1893, 3
        %v1905 = vsel %vm1515, %v1904, %v1903
        %v1906 = vrot.slane %v1894, 2
        %v1907 = vsel %vm1518, %v1906, %v1905
        %v1908 = vrot.slane %v1895, 1
        %v1909 = vsel %vm1521, %v1908, %v1907
        %v1910 = vpack.c.b16 %v1909, %v1909
        %v1912 = vsel %vm1571, %v1863, 0
        %v1915 = vsel %vm1571, %v1910, 0
        %1917 = vmatpush.bf16.xpose.msra.mxu0 0
        %1918 = vmatpush.bf16.xpose.msra.mxu0 0
        %1919 = vmatpush.bf16.xpose.msra.mxu0 0
        %1920 = vmatpush.bf16.xpose.msra.mxu0 0
        %1921 = vmatpush.bf16.xpose.msra.mxu0 0
        %1922 = vmatpush.bf16.xpose.msra.mxu0 0
        %1923 = vmatpush.bf16.xpose.msra.mxu0 0
        %1924 = vmatpush.bf16.xpose.msra.mxu0 %v1915
        %1925 = vmatmul.bf16.gmra.mxu0 %v1912
        %v1926 = vpop.f32.mrf.mxu0
        %v1927 = vadd.f32 0.0, %v1926
        %v1928 = vpop.f32.mrf.mxu0
        %1929 = vdwg.mxu0
        %vm1930 = vcmask 64512
        %v1931 = vsel %vm1930, %v1588, -inf
        %1932 = vmax.xlane.f32.xlu0 %v1931
        %v1933 = vpop.xlane.xlu0 %1932
        %v1934 = vsel %vm1930, %v1701, -inf
        %1935 = vmax.xlane.f32.xlu0 %v1934
        %v1936 = vpop.xlane.xlu0 %1935
        %v1937 = vsel %vm1930, %v1814, -inf
        %1938 = vmax.xlane.f32.xlu0 %v1937
        %v1939 = vpop.xlane.xlu0 %1938
        %v1940 = vsel %vm1930, %v1927, -inf
        %1941 = vmax.xlane.f32.xlu0 %v1940
        %v1942 = vpop.xlane.xlu0 %1941
        %v1943 = vsub.f32 %v1588, %v1933
        %v1944 = vsub.f32 %v1701, %v1936
        %v1945 = vsub.f32 %v1814, %v1939
        %v1946 = vsub.f32 %v1927, %v1942
        %v1947 = vmul.f32 %v1943, 1.442695
        %v1948 = vpow.pop %v1947
        %v1949 = vmul.f32 %v1944, 1.442695
        %v1950 = vpow.pop %v1949
        %v1951 = vmul.f32 %v1945, 1.442695
        %v1952 = vpow.pop %v1951
        %v1953 = vmul.f32 %v1946, 1.442695
        %v1954 = vpow.pop %v1953
        %v1955 = vsel %vm1930, %v1948, 0.0
        %1956 = vadd.xlane.f32.xlu0 %v1955
        %v1957 = vpop.xlane.xlu0 %1956
        %v1958 = vsel %vm1930, %v1950, 0.0
        %1959 = vadd.xlane.f32.xlu0 %v1958
        %v1960 = vpop.xlane.xlu0 %1959
        %v1961 = vsel %vm1930, %v1952, 0.0
        %1962 = vadd.xlane.f32.xlu0 %v1961
        %v1963 = vpop.xlane.xlu0 %1962
        %v1964 = vsel %vm1930, %v1954, 0.0
        %1965 = vadd.xlane.f32.xlu0 %v1964
        %v1966 = vpop.xlane.xlu0 %1965
        %v1967 = vrcp.pop %v1957
        %v1968 = vrcp.pop %v1960
        %v1969 = vrcp.pop %v1963
        %v1970 = vrcp.pop %v1966
        %v1971 = vmul.f32 %v1948, %v1967
        %v1972 = vmul.f32 %v1950, %v1968
        %v1973 = vmul.f32 %v1952, %v1969
        %v1974 = vmul.f32 %v1954, %v1970
        %v1975 = vpack.c.bf16 %v1971, %v1971
        %v1976 = vpack.c.bf16 %v1972, %v1972
        %v1977 = vpack.c.bf16 %v1973, %v1973
        %v1978 = vpack.c.bf16 %v1974, %v1974
        %v1979 = vpack.c.bf16 %v1342, %v1342
        %v1980 = vpack.c.bf16 %v1343, %v1343
        %v1981 = vpack.c.bf16 %v1344, %v1344
        %v1982 = vpack.c.bf16 %v1345, %v1345
        %v1983 = vpack.c.bf16 %v1346, %v1346
        %v1984 = vpack.c.bf16 %v1347, %v1347
        %v1985 = vpack.c.bf16 %v1348, %v1348
        %v1986 = vpack.c.bf16 %v1349, %v1349
        %v1987 = vpack.c.bf16 %v1358, %v1358
        %v1988 = vpack.c.bf16 %v1359, %v1359
        %v1989 = vpack.c.bf16 %v1360, %v1360
        %v1990 = vpack.c.bf16 %v1361, %v1361
        %v1991 = vpack.c.bf16 %v1362, %v1362
        %v1992 = vpack.c.bf16 %v1363, %v1363
        %v1993 = vpack.c.bf16 %v1364, %v1364
        %v1994 = vpack.c.bf16 %v1365, %v1365
        %v1995 = vpack.c.bf16 %v1374, %v1374
        %v1996 = vpack.c.bf16 %v1375, %v1375
        %v1997 = vpack.c.bf16 %v1376, %v1376
        %v1998 = vpack.c.bf16 %v1377, %v1377
        %v1999 = vpack.c.bf16 %v1378, %v1378
        %v2000 = vpack.c.bf16 %v1379, %v1379
        %v2001 = vpack.c.bf16 %v1380, %v1380
        %v2002 = vpack.c.bf16 %v1381, %v1381
        %v2003 = vpack.c.bf16 %v1390, %v1390
        %v2004 = vpack.c.bf16 %v1391, %v1391
        %v2005 = vpack.c.bf16 %v1392, %v1392
        %v2006 = vpack.c.bf16 %v1393, %v1393
        %v2007 = vpack.c.bf16 %v1394, %v1394
        %v2008 = vpack.c.bf16 %v1395, %v1395
        %v2009 = vpack.c.bf16 %v1396, %v1396
        %v2010 = vpack.c.bf16 %v1397, %v1397
        %v2019 = vunpack.c.l.b16 %v1979
        %v2020 = vunpack.c.l.b16 %v1980
        %v2021 = vunpack.c.l.b16 %v1981
        %v2022 = vunpack.c.l.b16 %v1982
        %v2023 = vunpack.c.l.b16 %v1983
        %v2024 = vunpack.c.l.b16 %v1984
        %v2025 = vunpack.c.l.b16 %v1985
        %v2026 = vunpack.c.l.b16 %v1986
        %v2027 = vpack.c.b16 %v2019, %v2019
        %v2028 = vpack.c.b16 %v2020, %v2020
        %v2029 = vpack.c.b16 %v2021, %v2021
        %v2030 = vpack.c.b16 %v2022, %v2022
        %v2031 = vpack.c.b16 %v2023, %v2023
        %v2032 = vpack.c.b16 %v2024, %v2024
        %v2033 = vpack.c.b16 %v2025, %v2025
        %v2034 = vpack.c.b16 %v2026, %v2026
        %v2035 = vunpack.c.l.b16 %v2027
        %v2036 = vunpack.c.l.b16 %v2028
        %v2037 = vunpack.c.l.b16 %v2029
        %v2038 = vunpack.c.l.b16 %v2030
        %v2039 = vunpack.c.l.b16 %v2031
        %v2040 = vunpack.c.l.b16 %v2032
        %v2041 = vunpack.c.l.b16 %v2033
        %v2042 = vunpack.c.l.b16 %v2034
        %v2043 = vrot.slane %v2036, 7
        %v2044 = vsel %vm1503, %v2043, %v2035
        %v2045 = vrot.slane %v2037, 6
        %v2046 = vsel %vm1506, %v2045, %v2044
        %v2047 = vrot.slane %v2038, 5
        %v2048 = vsel %vm1509, %v2047, %v2046
        %v2049 = vrot.slane %v2039, 4
        %v2050 = vsel %vm1512, %v2049, %v2048
        %v2051 = vrot.slane %v2040, 3
        %v2052 = vsel %vm1515, %v2051, %v2050
        %v2053 = vrot.slane %v2041, 2
        %v2054 = vsel %vm1518, %v2053, %v2052
        %v2055 = vrot.slane %v2042, 1
        %v2056 = vsel %vm1521, %v2055, %v2054
        %v2057 = vpack.c.b16 %v2056, %v2056
        %v2059 = vsel %vm1930, %v1975, 0
        %v2062 = vsel %vm1140, %v2057, 0
        %2064 = vmatpush.bf16.msra.mxu0 0
        %2065 = vmatpush.bf16.msra.mxu0 0
        %2066 = vmatpush.bf16.msra.mxu0 0
        %2067 = vmatpush.bf16.msra.mxu0 0
        %2068 = vmatpush.bf16.msra.mxu0 0
        %2069 = vmatpush.bf16.msra.mxu0 0
        %2070 = vmatpush.bf16.msra.mxu0 0
        %2071 = vmatpush.bf16.msra.mxu0 %v2062
        %2072 = vmatmul.bf16.gmra.mxu0 %v2059
        %v2073 = vpop.f32.mrf.mxu0
        %v2074 = vadd.f32 0.0, %v2073
        %v2075 = vpop.f32.mrf.mxu0
        %2076 = vdwg.mxu0
        %v2085 = vunpack.c.l.b16 %v1987
        %v2086 = vunpack.c.l.b16 %v1988
        %v2087 = vunpack.c.l.b16 %v1989
        %v2088 = vunpack.c.l.b16 %v1990
        %v2089 = vunpack.c.l.b16 %v1991
        %v2090 = vunpack.c.l.b16 %v1992
        %v2091 = vunpack.c.l.b16 %v1993
        %v2092 = vunpack.c.l.b16 %v1994
        %v2093 = vpack.c.b16 %v2085, %v2085
        %v2094 = vpack.c.b16 %v2086, %v2086
        %v2095 = vpack.c.b16 %v2087, %v2087
        %v2096 = vpack.c.b16 %v2088, %v2088
        %v2097 = vpack.c.b16 %v2089, %v2089
        %v2098 = vpack.c.b16 %v2090, %v2090
        %v2099 = vpack.c.b16 %v2091, %v2091
        %v2100 = vpack.c.b16 %v2092, %v2092
        %v2101 = vunpack.c.l.b16 %v2093
        %v2102 = vunpack.c.l.b16 %v2094
        %v2103 = vunpack.c.l.b16 %v2095
        %v2104 = vunpack.c.l.b16 %v2096
        %v2105 = vunpack.c.l.b16 %v2097
        %v2106 = vunpack.c.l.b16 %v2098
        %v2107 = vunpack.c.l.b16 %v2099
        %v2108 = vunpack.c.l.b16 %v2100
        %v2109 = vrot.slane %v2102, 7
        %v2110 = vsel %vm1503, %v2109, %v2101
        %v2111 = vrot.slane %v2103, 6
        %v2112 = vsel %vm1506, %v2111, %v2110
        %v2113 = vrot.slane %v2104, 5
        %v2114 = vsel %vm1509, %v2113, %v2112
        %v2115 = vrot.slane %v2105, 4
        %v2116 = vsel %vm1512, %v2115, %v2114
        %v2117 = vrot.slane %v2106, 3
        %v2118 = vsel %vm1515, %v2117, %v2116
        %v2119 = vrot.slane %v2107, 2
        %v2120 = vsel %vm1518, %v2119, %v2118
        %v2121 = vrot.slane %v2108, 1
        %v2122 = vsel %vm1521, %v2121, %v2120
        %v2123 = vpack.c.b16 %v2122, %v2122
        %v2125 = vsel %vm1930, %v1976, 0
        %v2128 = vsel %vm1140, %v2123, 0
        %2130 = vmatpush.bf16.msra.mxu0 0
        %2131 = vmatpush.bf16.msra.mxu0 0
        %2132 = vmatpush.bf16.msra.mxu0 0
        %2133 = vmatpush.bf16.msra.mxu0 0
        %2134 = vmatpush.bf16.msra.mxu0 0
        %2135 = vmatpush.bf16.msra.mxu0 0
        %2136 = vmatpush.bf16.msra.mxu0 0
        %2137 = vmatpush.bf16.msra.mxu0 %v2128
        %2138 = vmatmul.bf16.gmra.mxu0 %v2125
        %v2139 = vpop.f32.mrf.mxu0
        %v2140 = vadd.f32 0.0, %v2139
        %v2141 = vpop.f32.mrf.mxu0
        %2142 = vdwg.mxu0
        %v2151 = vunpack.c.l.b16 %v1995
        %v2152 = vunpack.c.l.b16 %v1996
        %v2153 = vunpack.c.l.b16 %v1997
        %v2154 = vunpack.c.l.b16 %v1998
        %v2155 = vunpack.c.l.b16 %v1999
        %v2156 = vunpack.c.l.b16 %v2000
        %v2157 = vunpack.c.l.b16 %v2001
        %v2158 = vunpack.c.l.b16 %v2002
        %v2159 = vpack.c.b16 %v2151, %v2151
        %v2160 = vpack.c.b16 %v2152, %v2152
        %v2161 = vpack.c.b16 %v2153, %v2153
        %v2162 = vpack.c.b16 %v2154, %v2154
        %v2163 = vpack.c.b16 %v2155, %v2155
        %v2164 = vpack.c.b16 %v2156, %v2156
        %v2165 = vpack.c.b16 %v2157, %v2157
        %v2166 = vpack.c.b16 %v2158, %v2158
        %v2167 = vunpack.c.l.b16 %v2159
        %v2168 = vunpack.c.l.b16 %v2160
        %v2169 = vunpack.c.l.b16 %v2161
        %v2170 = vunpack.c.l.b16 %v2162
        %v2171 = vunpack.c.l.b16 %v2163
        %v2172 = vunpack.c.l.b16 %v2164
        %v2173 = vunpack.c.l.b16 %v2165
        %v2174 = vunpack.c.l.b16 %v2166
        %v2175 = vrot.slane %v2168, 7
        %v2176 = vsel %vm1503, %v2175, %v2167
        %v2177 = vrot.slane %v2169, 6
        %v2178 = vsel %vm1506, %v2177, %v2176
        %v2179 = vrot.slane %v2170, 5
        %v2180 = vsel %vm1509, %v2179, %v2178
        %v2181 = vrot.slane %v2171, 4
        %v2182 = vsel %vm1512, %v2181, %v2180
        %v2183 = vrot.slane %v2172, 3
        %v2184 = vsel %vm1515, %v2183, %v2182
        %v2185 = vrot.slane %v2173, 2
        %v2186 = vsel %vm1518, %v2185, %v2184
        %v2187 = vrot.slane %v2174, 1
        %v2188 = vsel %vm1521, %v2187, %v2186
        %v2189 = vpack.c.b16 %v2188, %v2188
        %v2191 = vsel %vm1930, %v1977, 0
        %v2194 = vsel %vm1140, %v2189, 0
        %2196 = vmatpush.bf16.msra.mxu0 0
        %2197 = vmatpush.bf16.msra.mxu0 0
        %2198 = vmatpush.bf16.msra.mxu0 0
        %2199 = vmatpush.bf16.msra.mxu0 0
        %2200 = vmatpush.bf16.msra.mxu0 0
        %2201 = vmatpush.bf16.msra.mxu0 0
        %2202 = vmatpush.bf16.msra.mxu0 0
        %2203 = vmatpush.bf16.msra.mxu0 %v2194
        %2204 = vmatmul.bf16.gmra.mxu0 %v2191
        %v2205 = vpop.f32.mrf.mxu0
        %v2206 = vadd.f32 0.0, %v2205
        %v2207 = vpop.f32.mrf.mxu0
        %2208 = vdwg.mxu0
        %v2217 = vunpack.c.l.b16 %v2003
        %v2218 = vunpack.c.l.b16 %v2004
        %v2219 = vunpack.c.l.b16 %v2005
        %v2220 = vunpack.c.l.b16 %v2006
        %v2221 = vunpack.c.l.b16 %v2007
        %v2222 = vunpack.c.l.b16 %v2008
        %v2223 = vunpack.c.l.b16 %v2009
        %v2224 = vunpack.c.l.b16 %v2010
        %v2225 = vpack.c.b16 %v2217, %v2217
        %v2226 = vpack.c.b16 %v2218, %v2218
        %v2227 = vpack.c.b16 %v2219, %v2219
        %v2228 = vpack.c.b16 %v2220, %v2220
        %v2229 = vpack.c.b16 %v2221, %v2221
        %v2230 = vpack.c.b16 %v2222, %v2222
        %v2231 = vpack.c.b16 %v2223, %v2223
        %v2232 = vpack.c.b16 %v2224, %v2224
        %v2233 = vunpack.c.l.b16 %v2225
        %v2234 = vunpack.c.l.b16 %v2226
        %v2235 = vunpack.c.l.b16 %v2227
        %v2236 = vunpack.c.l.b16 %v2228
        %v2237 = vunpack.c.l.b16 %v2229
        %v2238 = vunpack.c.l.b16 %v2230
        %v2239 = vunpack.c.l.b16 %v2231
        %v2240 = vunpack.c.l.b16 %v2232
        %v2241 = vrot.slane %v2234, 7
        %v2242 = vsel %vm1503, %v2241, %v2233
        %v2243 = vrot.slane %v2235, 6
        %v2244 = vsel %vm1506, %v2243, %v2242
        %v2245 = vrot.slane %v2236, 5
        %v2246 = vsel %vm1509, %v2245, %v2244
        %v2247 = vrot.slane %v2237, 4
        %v2248 = vsel %vm1512, %v2247, %v2246
        %v2249 = vrot.slane %v2238, 3
        %v2250 = vsel %vm1515, %v2249, %v2248
        %v2251 = vrot.slane %v2239, 2
        %v2252 = vsel %vm1518, %v2251, %v2250
        %v2253 = vrot.slane %v2240, 1
        %v2254 = vsel %vm1521, %v2253, %v2252
        %v2255 = vpack.c.b16 %v2254, %v2254
        %v2257 = vsel %vm1930, %v1978, 0
        %v2260 = vsel %vm1140, %v2255, 0
        %2262 = vmatpush.bf16.msra.mxu0 0
        %2263 = vmatpush.bf16.msra.mxu0 0
        %2264 = vmatpush.bf16.msra.mxu0 0
        %2265 = vmatpush.bf16.msra.mxu0 0
        %2266 = vmatpush.bf16.msra.mxu0 0
        %2267 = vmatpush.bf16.msra.mxu0 0
        %2268 = vmatpush.bf16.msra.mxu0 0
        %2269 = vmatpush.bf16.msra.mxu0 %v2260
        %2270 = vmatmul.bf16.gmra.mxu0 %v2257
        %v2271 = vpop.f32.mrf.mxu0
        %v2272 = vadd.f32 0.0, %v2271
        %v2273 = vpop.f32.mrf.mxu0
        %2274 = vdwg.mxu0
        %2276 = vrot.lane.b32.xlu0 %v2140, 32
        %v2277 = vpop.permute.xlu0 %2276
        %2280 = vrot.lane.b32.xlu0 %v2206, 64
        %v2281 = vpop.permute.xlu0 %2280
        %2284 = vrot.lane.b32.xlu0 %v2272, 96
        %v2285 = vpop.permute.xlu0 %2284
        %v2287 = vsel %vm1571, %v2074, %v2277
        %vm2288 = vcmask 523264
        %v2289 = vsel %vm2288, %v2287, %v2281
        %vm2290 = vcmask 785408
        %v2291 = vsel %vm2290, %v2289, %v2285
        %v2293 = vrot.slane %v2291, 1
        %v2294 = vrot.slane %v2291, 2
        %v2295 = vrot.slane %v2291, 3
        %v2296 = vrot.slane %v2291, 4
        %v2297 = vrot.slane %v2291, 5
        %v2298 = vrot.slane %v2291, 6
        %v2299 = vrot.slane %v2291, 7
        %2307 = vst [vmem:[#allocation2] sm:$0x1] %v2291
        %2308 = vst [vmem:[#allocation2 + $0x2] sm:$0x1] %v2293
        %2309 = vst [vmem:[#allocation2 + $0x4] sm:$0x1] %v2294
        %2310 = vst [vmem:[#allocation2 + $0x6] sm:$0x1] %v2295
        %2311 = vst [vmem:[#allocation2 + $0x8] sm:$0x1] %v2296
        %2312 = vst [vmem:[#allocation2 + $0xa] sm:$0x1] %v2297
        %2313 = vst [vmem:[#allocation2 + $0xc] sm:$0x1] %v2298
        %2314 = vst [vmem:[#allocation2 + $0xe] sm:$0x1] %v2299
        %v2315 = vrot.slane %v1494, 1
        %v2316 = vsel %vm1503, %v1495, %v2315
        %v2317 = vrot.slane %v1496, 7
        %v2318 = vsel %vm1506, %v2317, %v2316
        %v2319 = vrot.slane %v1497, 6
        %v2320 = vsel %vm1509, %v2319, %v2318
        %v2321 = vrot.slane %v1498, 5
        %v2322 = vsel %vm1512, %v2321, %v2320
        %v2323 = vrot.slane %v1499, 4
        %v2324 = vsel %vm1515, %v2323, %v2322
        %v2325 = vrot.slane %v1500, 3
        %v2326 = vsel %vm1518, %v2325, %v2324
        %v2327 = vrot.slane %v1501, 2
        %v2328 = vsel %vm1521, %v2327, %v2326
        %v2329 = vpack.c.b16 %v2328, %v2328
        %v2330 = vrot.slane %v1548, 1
        %v2331 = vsel %vm1503, %v1549, %v2330
        %v2332 = vrot.slane %v1550, 7
        %v2333 = vsel %vm1506, %v2332, %v2331
        %v2334 = vrot.slane %v1551, 6
        %v2335 = vsel %vm1509, %v2334, %v2333
        %v2336 = vrot.slane %v1552, 5
        %v2337 = vsel %vm1512, %v2336, %v2335
        %v2338 = vrot.slane %v1553, 4
        %v2339 = vsel %vm1515, %v2338, %v2337
        %v2340 = vrot.slane %v1554, 3
        %v2341 = vsel %vm1518, %v2340, %v2339
        %v2342 = vrot.slane %v1555, 2
        %v2343 = vsel %vm1521, %v2342, %v2341
        %v2344 = vpack.c.b16 %v2343, %v2343
        %v2346 = vsel %vm1571, %v2329, 0
        %v2349 = vsel %vm1571, %v2344, 0
        %2351 = vmatpush.bf16.xpose.msra.mxu0 0
        %2352 = vmatpush.bf16.xpose.msra.mxu0 0
        %2353 = vmatpush.bf16.xpose.msra.mxu0 0
        %2354 = vmatpush.bf16.xpose.msra.mxu0 0
        %2355 = vmatpush.bf16.xpose.msra.mxu0 0
        %2356 = vmatpush.bf16.xpose.msra.mxu0 0
        %2357 = vmatpush.bf16.xpose.msra.mxu0 0
        %2358 = vmatpush.bf16.xpose.msra.mxu0 %v2349
        %2359 = vmatmul.bf16.gmra.mxu0 %v2346
        %v2360 = vpop.f32.mrf.mxu0
        %v2361 = vadd.f32 0.0, %v2360
        %v2362 = vpop.f32.mrf.mxu0
        %2363 = vdwg.mxu0
        %v2364 = vrot.slane %v1615, 1
        %v2365 = vsel %vm1503, %v1616, %v2364
        %v2366 = vrot.slane %v1617, 7
        %v2367 = vsel %vm1506, %v2366, %v2365
        %v2368 = vrot.slane %v1618, 6
        %v2369 = vsel %vm1509, %v2368, %v2367
        %v2370 = vrot.slane %v1619, 5
        %v2371 = vsel %vm1512, %v2370, %v2369
        %v2372 = vrot.slane %v1620, 4
        %v2373 = vsel %vm1515, %v2372, %v2371
        %v2374 = vrot.slane %v1621, 3
        %v2375 = vsel %vm1518, %v2374, %v2373
        %v2376 = vrot.slane %v1622, 2
        %v2377 = vsel %vm1521, %v2376, %v2375
        %v2378 = vpack.c.b16 %v2377, %v2377
        %v2379 = vrot.slane %v1662, 1
        %v2380 = vsel %vm1503, %v1663, %v2379
        %v2381 = vrot.slane %v1664, 7
        %v2382 = vsel %vm1506, %v2381, %v2380
        %v2383 = vrot.slane %v1665, 6
        %v2384 = vsel %vm1509, %v2383, %v2382
        %v2385 = vrot.slane %v1666, 5
        %v2386 = vsel %vm1512, %v2385, %v2384
        %v2387 = vrot.slane %v1667, 4
        %v2388 = vsel %vm1515, %v2387, %v2386
        %v2389 = vrot.slane %v1668, 3
        %v2390 = vsel %vm1518, %v2389, %v2388
        %v2391 = vrot.slane %v1669, 2
        %v2392 = vsel %vm1521, %v2391, %v2390
        %v2393 = vpack.c.b16 %v2392, %v2392
        %v2395 = vsel %vm1571, %v2378, 0
        %v2398 = vsel %vm1571, %v2393, 0
        %2400 = vmatpush.bf16.xpose.msra.mxu0 0
        %2401 = vmatpush.bf16.xpose.msra.mxu0 0
        %2402 = vmatpush.bf16.xpose.msra.mxu0 0
        %2403 = vmatpush.bf16.xpose.msra.mxu0 0
        %2404 = vmatpush.bf16.xpose.msra.mxu0 0
        %2405 = vmatpush.bf16.xpose.msra.mxu0 0
        %2406 = vmatpush.bf16.xpose.msra.mxu0 0
        %2407 = vmatpush.bf16.xpose.msra.mxu0 %v2398
        %2408 = vmatmul.bf16.gmra.mxu0 %v2395
        %v2409 = vpop.f32.mrf.mxu0
        %v2410 = vadd.f32 0.0, %v2409
        %v2411 = vpop.f32.mrf.mxu0
        %2412 = vdwg.mxu0
        %v2413 = vrot.slane %v1728, 1
        %v2414 = vsel %vm1503, %v1729, %v2413
        %v2415 = vrot.slane %v1730, 7
        %v2416 = vsel %vm1506, %v2415, %v2414
        %v2417 = vrot.slane %v1731, 6
        %v2418 = vsel %vm1509, %v2417, %v2416
        %v2419 = vrot.slane %v1732, 5
        %v2420 = vsel %vm1512, %v2419, %v2418
        %v2421 = vrot.slane %v1733, 4
        %v2422 = vsel %vm1515, %v2421, %v2420
        %v2423 = vrot.slane %v1734, 3
        %v2424 = vsel %vm1518, %v2423, %v2422
        %v2425 = vrot.slane %v1735, 2
        %v2426 = vsel %vm1521, %v2425, %v2424
        %v2427 = vpack.c.b16 %v2426, %v2426
        %v2428 = vrot.slane %v1775, 1
        %v2429 = vsel %vm1503, %v1776, %v2428
        %v2430 = vrot.slane %v1777, 7
        %v2431 = vsel %vm1506, %v2430, %v2429
        %v2432 = vrot.slane %v1778, 6
        %v2433 = vsel %vm1509, %v2432, %v2431
        %v2434 = vrot.slane %v1779, 5
        %v2435 = vsel %vm1512, %v2434, %v2433
        %v2436 = vrot.slane %v1780, 4
        %v2437 = vsel %vm1515, %v2436, %v2435
        %v2438 = vrot.slane %v1781, 3
        %v2439 = vsel %vm1518, %v2438, %v2437
        %v2440 = vrot.slane %v1782, 2
        %v2441 = vsel %vm1521, %v2440, %v2439
        %v2442 = vpack.c.b16 %v2441, %v2441
        %v2444 = vsel %vm1571, %v2427, 0
        %v2447 = vsel %vm1571, %v2442, 0
        %2449 = vmatpush.bf16.xpose.msra.mxu0 0
        %2450 = vmatpush.bf16.xpose.msra.mxu0 0
        %2451 = vmatpush.bf16.xpose.msra.mxu0 0
        %2452 = vmatpush.bf16.xpose.msra.mxu0 0
        %2453 = vmatpush.bf16.xpose.msra.mxu0 0
        %2454 = vmatpush.bf16.xpose.msra.mxu0 0
        %2455 = vmatpush.bf16.xpose.msra.mxu0 0
        %2456 = vmatpush.bf16.xpose.msra.mxu0 %v2447
        %2457 = vmatmul.bf16.gmra.mxu0 %v2444
        %v2458 = vpop.f32.mrf.mxu0
        %v2459 = vadd.f32 0.0, %v2458
        %v2460 = vpop.f32.mrf.mxu0
        %2461 = vdwg.mxu0
        %v2462 = vrot.slane %v1841, 1
        %v2463 = vsel %vm1503, %v1842, %v2462
        %v2464 = vrot.slane %v1843, 7
        %v2465 = vsel %vm1506, %v2464, %v2463
        %v2466 = vrot.slane %v1844, 6
        %v2467 = vsel %vm1509, %v2466, %v2465
        %v2468 = vrot.slane %v1845, 5
        %v2469 = vsel %vm1512, %v2468, %v2467
        %v2470 = vrot.slane %v1846, 4
        %v2471 = vsel %vm1515, %v2470, %v2469
        %v2472 = vrot.slane %v1847, 3
        %v2473 = vsel %vm1518, %v2472, %v2471
        %v2474 = vrot.slane %v1848, 2
        %v2475 = vsel %vm1521, %v2474, %v2473
        %v2476 = vpack.c.b16 %v2475, %v2475
        %v2477 = vrot.slane %v1888, 1
        %v2478 = vsel %vm1503, %v1889, %v2477
        %v2479 = vrot.slane %v1890, 7
        %v2480 = vsel %vm1506, %v2479, %v2478
        %v2481 = vrot.slane %v1891, 6
        %v2482 = vsel %vm1509, %v2481, %v2480
        %v2483 = vrot.slane %v1892, 5
        %v2484 = vsel %vm1512, %v2483, %v2482
        %v2485 = vrot.slane %v1893, 4
        %v2486 = vsel %vm1515, %v2485, %v2484
        %v2487 = vrot.slane %v1894, 3
        %v2488 = vsel %vm1518, %v2487, %v2486
        %v2489 = vrot.slane %v1895, 2
        %v2490 = vsel %vm1521, %v2489, %v2488
        %v2491 = vpack.c.b16 %v2490, %v2490
        %v2493 = vsel %vm1571, %v2476, 0
        %v2496 = vsel %vm1571, %v2491, 0
        %2498 = vmatpush.bf16.xpose.msra.mxu0 0
        %2499 = vmatpush.bf16.xpose.msra.mxu0 0
        %2500 = vmatpush.bf16.xpose.msra.mxu0 0
        %2501 = vmatpush.bf16.xpose.msra.mxu0 0
        %2502 = vmatpush.bf16.xpose.msra.mxu0 0
        %2503 = vmatpush.bf16.xpose.msra.mxu0 0
        %2504 = vmatpush.bf16.xpose.msra.mxu0 0
        %2505 = vmatpush.bf16.xpose.msra.mxu0 %v2496
        %2506 = vmatmul.bf16.gmra.mxu0 %v2493
        %v2507 = vpop.f32.mrf.mxu0
        %v2508 = vadd.f32 0.0, %v2507
        %v2509 = vpop.f32.mrf.mxu0
        %2510 = vdwg.mxu0
        %v2511 = vsel %vm1930, %v2361, -inf
        %2512 = vmax.xlane.f32.xlu0 %v2511
        %v2513 = vpop.xlane.xlu0 %2512
        %v2514 = vsel %vm1930, %v2410, -inf
        %2515 = vmax.xlane.f32.xlu0 %v2514
        %v2516 = vpop.xlane.xlu0 %2515
        %v2517 = vsel %vm1930, %v2459, -inf
        %2518 = vmax.xlane.f32.xlu0 %v2517
        %v2519 = vpop.xlane.xlu0 %2518
        %v2520 = vsel %vm1930, %v2508, -inf
        %2521 = vmax.xlane.f32.xlu0 %v2520
        %v2522 = vpop.xlane.xlu0 %2521
        %v2523 = vsub.f32 %v2361, %v2513
        %v2524 = vsub.f32 %v2410, %v2516
        %v2525 = vsub.f32 %v2459, %v2519
        %v2526 = vsub.f32 %v2508, %v2522
        %v2527 = vmul.f32 %v2523, 1.442695
        %v2528 = vpow.pop %v2527
        %v2529 = vmul.f32 %v2524, 1.442695
        %v2530 = vpow.pop %v2529
        %v2531 = vmul.f32 %v2525, 1.442695
        %v2532 = vpow.pop %v2531
        %v2533 = vmul.f32 %v2526, 1.442695
        %v2534 = vpow.pop %v2533
        %v2535 = vsel %vm1930, %v2528, 0.0
        %2536 = vadd.xlane.f32.xlu0 %v2535
        %v2537 = vpop.xlane.xlu0 %2536
        %v2538 = vsel %vm1930, %v2530, 0.0
        %2539 = vadd.xlane.f32.xlu0 %v2538
        %v2540 = vpop.xlane.xlu0 %2539
        %v2541 = vsel %vm1930, %v2532, 0.0
        %2542 = vadd.xlane.f32.xlu0 %v2541
        %v2543 = vpop.xlane.xlu0 %2542
        %v2544 = vsel %vm1930, %v2534, 0.0
        %2545 = vadd.xlane.f32.xlu0 %v2544
        %v2546 = vpop.xlane.xlu0 %2545
        %v2547 = vrcp.pop %v2537
        %v2548 = vrcp.pop %v2540
        %v2549 = vrcp.pop %v2543
        %v2550 = vrcp.pop %v2546
        %v2551 = vmul.f32 %v2528, %v2547
        %v2552 = vmul.f32 %v2530, %v2548
        %v2553 = vmul.f32 %v2532, %v2549
        %v2554 = vmul.f32 %v2534, %v2550
        %v2555 = vpack.c.bf16 %v2551, %v2551
        %v2556 = vpack.c.bf16 %v2552, %v2552
        %v2557 = vpack.c.bf16 %v2553, %v2553
        %v2558 = vpack.c.bf16 %v2554, %v2554
        %v2559 = vrot.slane %v2035, 1
        %v2560 = vsel %vm1503, %v2036, %v2559
        %v2561 = vrot.slane %v2037, 7
        %v2562 = vsel %vm1506, %v2561, %v2560
        %v2563 = vrot.slane %v2038, 6
        %v2564 = vsel %vm1509, %v2563, %v2562
        %v2565 = vrot.slane %v2039, 5
        %v2566 = vsel %vm1512, %v2565, %v2564
        %v2567 = vrot.slane %v2040, 4
        %v2568 = vsel %vm1515, %v2567, %v2566
        %v2569 = vrot.slane %v2041, 3
        %v2570 = vsel %vm1518, %v2569, %v2568
        %v2571 = vrot.slane %v2042, 2
        %v2572 = vsel %vm1521, %v2571, %v2570
        %v2573 = vpack.c.b16 %v2572, %v2572
        %v2575 = vsel %vm1930, %v2555, 0
        %v2578 = vsel %vm1140, %v2573, 0
        %2580 = vmatpush.bf16.msra.mxu0 0
        %2581 = vmatpush.bf16.msra.mxu0 0
        %2582 = vmatpush.bf16.msra.mxu0 0
        %2583 = vmatpush.bf16.msra.mxu0 0
        %2584 = vmatpush.bf16.msra.mxu0 0
        %2585 = vmatpush.bf16.msra.mxu0 0
        %2586 = vmatpush.bf16.msra.mxu0 0
        %2587 = vmatpush.bf16.msra.mxu0 %v2578
        %2588 = vmatmul.bf16.gmra.mxu0 %v2575
        %v2589 = vpop.f32.mrf.mxu0
        %v2590 = vadd.f32 0.0, %v2589
        %v2591 = vpop.f32.mrf.mxu0
        %2592 = vdwg.mxu0
        %v2593 = vrot.slane %v2101, 1
        %v2594 = vsel %vm1503, %v2102, %v2593
        %v2595 = vrot.slane %v2103, 7
        %v2596 = vsel %vm1506, %v2595, %v2594
        %v2597 = vrot.slane %v2104, 6
        %v2598 = vsel %vm1509, %v2597, %v2596
        %v2599 = vrot.slane %v2105, 5
        %v2600 = vsel %vm1512, %v2599, %v2598
        %v2601 = vrot.slane %v2106, 4
        %v2602 = vsel %vm1515, %v2601, %v2600
        %v2603 = vrot.slane %v2107, 3
        %v2604 = vsel %vm1518, %v2603, %v2602
        %v2605 = vrot.slane %v2108, 2
        %v2606 = vsel %vm1521, %v2605, %v2604
        %v2607 = vpack.c.b16 %v2606, %v2606
        %v2609 = vsel %vm1930, %v2556, 0
        %v2612 = vsel %vm1140, %v2607, 0
        %2614 = vmatpush.bf16.msra.mxu0 0
        %2615 = vmatpush.bf16.msra.mxu0 0
        %2616 = vmatpush.bf16.msra.mxu0 0
        %2617 = vmatpush.bf16.msra.mxu0 0
        %2618 = vmatpush.bf16.msra.mxu0 0
        %2619 = vmatpush.bf16.msra.mxu0 0
        %2620 = vmatpush.bf16.msra.mxu0 0
        %2621 = vmatpush.bf16.msra.mxu0 %v2612
        %2622 = vmatmul.bf16.gmra.mxu0 %v2609
        %v2623 = vpop.f32.mrf.mxu0
        %v2624 = vadd.f32 0.0, %v2623
        %v2625 = vpop.f32.mrf.mxu0
        %2626 = vdwg.mxu0
        %v2627 = vrot.slane %v2167, 1
        %v2628 = vsel %vm1503, %v2168, %v2627
        %v2629 = vrot.slane %v2169, 7
        %v2630 = vsel %vm1506, %v2629, %v2628
        %v2631 = vrot.slane %v2170, 6
        %v2632 = vsel %vm1509, %v2631, %v2630
        %v2633 = vrot.slane %v2171, 5
        %v2634 = vsel %vm1512, %v2633, %v2632
        %v2635 = vrot.slane %v2172, 4
        %v2636 = vsel %vm1515, %v2635, %v2634
        %v2637 = vrot.slane %v2173, 3
        %v2638 = vsel %vm1518, %v2637, %v2636
        %v2639 = vrot.slane %v2174, 2
        %v2640 = vsel %vm1521, %v2639, %v2638
        %v2641 = vpack.c.b16 %v2640, %v2640
        %v2643 = vsel %vm1930, %v2557, 0
        %v2646 = vsel %vm1140, %v2641, 0
        %2648 = vmatpush.bf16.msra.mxu0 0
        %2649 = vmatpush.bf16.msra.mxu0 0
        %2650 = vmatpush.bf16.msra.mxu0 0
        %2651 = vmatpush.bf16.msra.mxu0 0
        %2652 = vmatpush.bf16.msra.mxu0 0
        %2653 = vmatpush.bf16.msra.mxu0 0
        %2654 = vmatpush.bf16.msra.mxu0 0
        %2655 = vmatpush.bf16.msra.mxu0 %v2646
        %2656 = vmatmul.bf16.gmra.mxu0 %v2643
        %v2657 = vpop.f32.mrf.mxu0
        %v2658 = vadd.f32 0.0, %v2657
        %v2659 = vpop.f32.mrf.mxu0
        %2660 = vdwg.mxu0
        %v2661 = vrot.slane %v2233, 1
        %v2662 = vsel %vm1503, %v2234, %v2661
        %v2663 = vrot.slane %v2235, 7
        %v2664 = vsel %vm1506, %v2663, %v2662
        %v2665 = vrot.slane %v2236, 6
        %v2666 = vsel %vm1509, %v2665, %v2664
        %v2667 = vrot.slane %v2237, 5
        %v2668 = vsel %vm1512, %v2667, %v2666
        %v2669 = vrot.slane %v2238, 4
        %v2670 = vsel %vm1515, %v2669, %v2668
        %v2671 = vrot.slane %v2239, 3
        %v2672 = vsel %vm1518, %v2671, %v2670
        %v2673 = vrot.slane %v2240, 2
        %v2674 = vsel %vm1521, %v2673, %v2672
        %v2675 = vpack.c.b16 %v2674, %v2674
        %v2677 = vsel %vm1930, %v2558, 0
        %v2680 = vsel %vm1140, %v2675, 0
        %2682 = vmatpush.bf16.msra.mxu0 0
        %2683 = vmatpush.bf16.msra.mxu0 0
        %2684 = vmatpush.bf16.msra.mxu0 0
        %2685 = vmatpush.bf16.msra.mxu0 0
        %2686 = vmatpush.bf16.msra.mxu0 0
        %2687 = vmatpush.bf16.msra.mxu0 0
        %2688 = vmatpush.bf16.msra.mxu0 0
        %2689 = vmatpush.bf16.msra.mxu0 %v2680
        %2690 = vmatmul.bf16.gmra.mxu0 %v2677
        %v2691 = vpop.f32.mrf.mxu0
        %v2692 = vadd.f32 0.0, %v2691
        %v2693 = vpop.f32.mrf.mxu0
        %2694 = vdwg.mxu0
        %2696 = vrot.lane.b32.xlu0 %v2624, 32
        %v2697 = vpop.permute.xlu0 %2696
        %2700 = vrot.lane.b32.xlu0 %v2658, 64
        %v2701 = vpop.permute.xlu0 %2700
        %2704 = vrot.lane.b32.xlu0 %v2692, 96
        %v2705 = vpop.permute.xlu0 %2704
        %v2707 = vsel %vm1571, %v2590, %v2697
        %v2708 = vsel %vm2288, %v2707, %v2701
        %v2709 = vsel %vm2290, %v2708, %v2705
        %v2711 = vrot.slane %v2709, 1
        %v2712 = vrot.slane %v2709, 2
        %v2713 = vrot.slane %v2709, 3
        %v2714 = vrot.slane %v2709, 4
        %v2715 = vrot.slane %v2709, 5
        %v2716 = vrot.slane %v2709, 6
        %v2717 = vrot.slane %v2709, 7
        %2725 = vst [vmem:[#allocation2 + $0x1] sm:$0x1] %v2709
        %2726 = vst [vmem:[#allocation2 + $0x3] sm:$0x1] %v2711
        %2727 = vst [vmem:[#allocation2 + $0x5] sm:$0x1] %v2712
        %2728 = vst [vmem:[#allocation2 + $0x7] sm:$0x1] %v2713
        %2729 = vst [vmem:[#allocation2 + $0x9] sm:$0x1] %v2714
        %2730 = vst [vmem:[#allocation2 + $0xb] sm:$0x1] %v2715
        %2731 = vst [vmem:[#allocation2 + $0xd] sm:$0x1] %v2716
        %2732 = vst [vmem:[#allocation2 + $0xf] sm:$0x1] %v2717
        %v2733 = vld [vmem:[#allocation2] sm:$0x3]
        %v2734 = vld [vmem:[#allocation2 + $0x2] sm:$0x3]
        %v2735 = vld [vmem:[#allocation2 + $0x4] sm:$0x3]
        %v2736 = vld [vmem:[#allocation2 + $0x6] sm:$0x3]
        %v2737 = vld [vmem:[#allocation2 + $0x8] sm:$0x3]
        %v2738 = vld [vmem:[#allocation2 + $0xa] sm:$0x3]
        %v2739 = vld [vmem:[#allocation2 + $0xc] sm:$0x3]
        %v2740 = vld [vmem:[#allocation2 + $0xe] sm:$0x3]
        %2749 = vst [vmem:[#allocation1] ss:$4 sm:$0xff] %v2733
        %s2750 = scalar_lea.vmem [#allocation1], 1
        %2751 = vst [vmem:[%s2750] ss:$4 sm:$0xff] %v2734
        %s2752 = scalar_lea.vmem [#allocation1], 2
        %2753 = vst [vmem:[%s2752] ss:$4 sm:$0xff] %v2735
        %s2754 = scalar_lea.vmem [#allocation1], 3
        %2755 = vst [vmem:[%s2754] ss:$4 sm:$0xff] %v2736
        %s2756 = scalar_lea.vmem [#allocation1], 32
        %2757 = vst [vmem:[%s2756] ss:$4 sm:$0xff] %v2737
        %s2758 = scalar_lea.vmem [#allocation1], 33
        %2759 = vst [vmem:[%s2758] ss:$4 sm:$0xff] %v2738
        %s2760 = scalar_lea.vmem [#allocation1], 34
        %2761 = vst [vmem:[%s2760] ss:$4 sm:$0xff] %v2739
        %s2762 = scalar_lea.vmem [#allocation1], 35
        %2763 = vst [vmem:[%s2762] ss:$4 sm:$0xff] %v2740
        %v2764 = vld.sshfl [vmem:[#allocation1] sm:$0xff pattern:$0x73625140]
        %v2765 = vld.sshfl [vmem:[#allocation1 + $0x20] sm:$0xff pattern:$0x73625140]
        %v2768 = vpack.c.bf16 %v2765, %v2764
        %v2769 = vld [vmem:[%s713] sm:$0xf]
        %v2770 = vld [vmem:[%s713 + $0x4] sm:$0xf]
        %v2771 = vld [vmem:[%s713 + $0x8] sm:$0xf]
        %v2772 = vld [vmem:[%s713 + $0xc] sm:$0xf]
        %v2773 = vld [vmem:[%s713 + $0x10] sm:$0xf]
        %v2774 = vld [vmem:[%s713 + $0x14] sm:$0xf]
        %v2775 = vld [vmem:[%s713 + $0x18] sm:$0xf]
        %v2776 = vld [vmem:[%s713 + $0x1c] sm:$0xf]
        %v2777 = vld [vmem:[%s713 + $0x20] sm:$0xf]
        %v2778 = vld [vmem:[%s713 + $0x24] sm:$0xf]
        %v2779 = vld [vmem:[%s713 + $0x28] sm:$0xf]
        %v2780 = vld [vmem:[%s713 + $0x2c] sm:$0xf]
        %v2781 = vld [vmem:[%s713 + $0x30] sm:$0xf]
        %v2782 = vld [vmem:[%s713 + $0x34] sm:$0xf]
        %v2783 = vld [vmem:[%s713 + $0x38] sm:$0xf]
        %v2784 = vld [vmem:[%s713 + $0x3c] sm:$0xf]
        %v2785 = vld [vmem:[%s850] sm:$0x1]
        %v2787 = vperm.slane %v2785, 0
        %v2805 = vunpack.c.l.b16 %v2769
        %v2806 = vunpack.c.l.b16 %v2770
        %v2807 = vunpack.c.l.b16 %v2771
        %v2808 = vunpack.c.l.b16 %v2772
        %v2809 = vunpack.c.l.b16 %v2773
        %v2810 = vunpack.c.l.b16 %v2774
        %v2811 = vunpack.c.l.b16 %v2775
        %v2812 = vunpack.c.l.b16 %v2776
        %v2813 = vunpack.c.l.b16 %v2777
        %v2814 = vunpack.c.l.b16 %v2778
        %v2815 = vunpack.c.l.b16 %v2779
        %v2816 = vunpack.c.l.b16 %v2780
        %v2817 = vunpack.c.l.b16 %v2781
        %v2818 = vunpack.c.l.b16 %v2782
        %v2819 = vunpack.c.l.b16 %v2783
        %v2820 = vunpack.c.l.b16 %v2784
        %v2821 = vpack.c.b16 %v2806, %v2805
        %v2822 = vpack.c.b16 %v2808, %v2807
        %v2823 = vpack.c.b16 %v2810, %v2809
        %v2824 = vpack.c.b16 %v2812, %v2811
        %v2825 = vpack.c.b16 %v2814, %v2813
        %v2826 = vpack.c.b16 %v2816, %v2815
        %v2827 = vpack.c.b16 %v2818, %v2817
        %v2828 = vpack.c.b16 %v2820, %v2819
        %2837 = vmatpush.bf16.msra.mxu0 %v2828
        %2838 = vmatpush.bf16.msra.mxu0 %v2827
        %2839 = vmatpush.bf16.msra.mxu0 %v2826
        %2840 = vmatpush.bf16.msra.mxu0 %v2825
        %2841 = vmatpush.bf16.msra.mxu0 %v2824
        %2842 = vmatpush.bf16.msra.mxu0 %v2823
        %2843 = vmatpush.bf16.msra.mxu0 %v2822
        %2844 = vmatpush.bf16.msra.mxu0 %v2821
        %2845 = vmatmul.bf16.gmra.mxu0 %v2768
        %v2846 = vpop.f32.mrf.mxu0
        %v2847 = vadd.f32 %v2787, %v2846
        %v2848 = vpop.f32.mrf.mxu0
        %v2849 = vadd.f32 %v2787, %v2848
        %2850 = vdwg.mxu0
        %v2853 = vrot.slane %v2847, 2
        %v2854 = vrot.slane %v2847, 4
        %v2855 = vrot.slane %v2847, 6
        %v2856 = vrot.slane %v2849, 2
        %v2857 = vrot.slane %v2849, 4
        %v2858 = vrot.slane %v2849, 6
        %v2865 = vadd.f32 %v882, %v2847
        %v2866 = vadd.f32 %v883, %v2853
        %v2867 = vadd.f32 %v884, %v2854
        %v2868 = vadd.f32 %v885, %v2855
        %v2869 = vadd.f32 %v886, %v2849
        %v2870 = vadd.f32 %v887, %v2856
        %v2871 = vadd.f32 %v888, %v2857
        %v2872 = vadd.f32 %v889, %v2858
        %v2873 = vld [vmem:[%s722] sm:$0x1]
        %v2874 = vld [vmem:[%s731] sm:$0x1]
        %2883 = vst [vmem:[#allocation1] ss:$4 sm:$0xff] %v2865
        %s2884 = scalar_lea.vmem [#allocation1], 1
        %2885 = vst [vmem:[%s2884] ss:$4 sm:$0xff] %v2866
        %s2886 = scalar_lea.vmem [#allocation1], 2
        %2887 = vst [vmem:[%s2886] ss:$4 sm:$0xff] %v2867
        %s2888 = scalar_lea.vmem [#allocation1], 3
        %2889 = vst [vmem:[%s2888] ss:$4 sm:$0xff] %v2868
        %s2890 = scalar_lea.vmem [#allocation1], 32
        %2891 = vst [vmem:[%s2890] ss:$4 sm:$0xff] %v2869
        %s2892 = scalar_lea.vmem [#allocation1], 33
        %2893 = vst [vmem:[%s2892] ss:$4 sm:$0xff] %v2870
        %s2894 = scalar_lea.vmem [#allocation1], 34
        %2895 = vst [vmem:[%s2894] ss:$4 sm:$0xff] %v2871
        %s2896 = scalar_lea.vmem [#allocation1], 35
        %2897 = vst [vmem:[%s2896] ss:$4 sm:$0xff] %v2872
        %v2898 = vld.sshfl [vmem:[#allocation1] sm:$0xff pattern:$0x73625140]
        %v2899 = vld.sshfl [vmem:[#allocation1 + $0x20] sm:$0xff pattern:$0x73625140]
        %2902 = vadd.xlane.f32.xlu0 %v2898
        %v2903 = vpop.xlane.xlu0 %2902
        %2904 = vadd.xlane.f32.xlu0 %v2899
        %v2905 = vpop.xlane.xlu0 %2904
        %v2906 = vrcp.pop 128.0
        %v2907 = vmul.f32 128.0, %v2906
        %v2908 = vsub.f32 1.0, %v2907
        %v2909 = vmul.f32 %v2906, %v2908
        %v2910 = vadd.f32 %v2906, %v2909
        %vm2911 = vweird.f32 %v2906
        %v2912 = vsel %vm2911, %v2906, %v2910
        %v2913 = vmul.f32 %v2903, %v2912
        %v2914 = vmul.f32 %v2905, %v2912
        %v2918 = vunpack.c.l.s4 269488144
        %v2919 = vunpack.c.0.s8 %v2918
        %v2920 = vperm.slane %v2913, %v2919
        %v2922 = vunpack.c.l.s4 842150450
        %v2923 = vunpack.c.0.s8 %v2922
        %v2924 = vperm.slane %v2913, %v2923
        %v2926 = vunpack.c.l.s4 1414812756
        %v2927 = vunpack.c.0.s8 %v2926
        %v2928 = vperm.slane %v2913, %v2927
        %v2930 = vunpack.c.l.s4 1987475062
        %v2931 = vunpack.c.0.s8 %v2930
        %v2932 = vperm.slane %v2913, %v2931
        %v2934 = vunpack.c.l.s4 269488144
        %v2935 = vunpack.c.0.s8 %v2934
        %v2936 = vperm.slane %v2914, %v2935
        %v2938 = vunpack.c.l.s4 842150450
        %v2939 = vunpack.c.0.s8 %v2938
        %v2940 = vperm.slane %v2914, %v2939
        %v2942 = vunpack.c.l.s4 1414812756
        %v2943 = vunpack.c.0.s8 %v2942
        %v2944 = vperm.slane %v2914, %v2943
        %v2946 = vunpack.c.l.s4 1987475062
        %v2947 = vunpack.c.0.s8 %v2946
        %v2948 = vperm.slane %v2914, %v2947
        %v2957 = vsub.f32 %v2865, %v2920
        %v2958 = vsub.f32 %v2866, %v2924
        %v2959 = vsub.f32 %v2867, %v2928
        %v2960 = vsub.f32 %v2868, %v2932
        %v2961 = vsub.f32 %v2869, %v2936
        %v2962 = vsub.f32 %v2870, %v2940
        %v2963 = vsub.f32 %v2871, %v2944
        %v2964 = vsub.f32 %v2872, %v2948
        %v2965 = vmul.f32 %v2957, %v2957
        %v2966 = vmul.f32 %v2958, %v2958
        %v2967 = vmul.f32 %v2959, %v2959
        %v2968 = vmul.f32 %v2960, %v2960
        %v2969 = vmul.f32 %v2961, %v2961
        %v2970 = vmul.f32 %v2962, %v2962
        %v2971 = vmul.f32 %v2963, %v2963
        %v2972 = vmul.f32 %v2964, %v2964
        %2981 = vst [vmem:[#allocation1] ss:$4 sm:$0xff] %v2965
        %s2982 = scalar_lea.vmem [#allocation1], 1
        %2983 = vst [vmem:[%s2982] ss:$4 sm:$0xff] %v2966
        %s2984 = scalar_lea.vmem [#allocation1], 2
        %2985 = vst [vmem:[%s2984] ss:$4 sm:$0xff] %v2967
        %s2986 = scalar_lea.vmem [#allocation1], 3
        %2987 = vst [vmem:[%s2986] ss:$4 sm:$0xff] %v2968
        %s2988 = scalar_lea.vmem [#allocation1], 32
        %2989 = vst [vmem:[%s2988] ss:$4 sm:$0xff] %v2969
        %s2990 = scalar_lea.vmem [#allocation1], 33
        %2991 = vst [vmem:[%s2990] ss:$4 sm:$0xff] %v2970
        %s2992 = scalar_lea.vmem [#allocation1], 34
        %2993 = vst [vmem:[%s2992] ss:$4 sm:$0xff] %v2971
        %s2994 = scalar_lea.vmem [#allocation1], 35
        %2995 = vst [vmem:[%s2994] ss:$4 sm:$0xff] %v2972
        %v2996 = vld.sshfl [vmem:[#allocation1] sm:$0xff pattern:$0x73625140]
        %v2997 = vld.sshfl [vmem:[#allocation1 + $0x20] sm:$0xff pattern:$0x73625140]
        %3000 = vadd.xlane.f32.xlu0 %v2996
        %v3001 = vpop.xlane.xlu0 %3000
        %3002 = vadd.xlane.f32.xlu0 %v2997
        %v3003 = vpop.xlane.xlu0 %3002
        %v3004 = vmul.f32 %v3001, %v2912
        %v3005 = vmul.f32 %v3003, %v2912
        %v3006 = vadd.f32 %v3004, 1e-05
        %v3007 = vadd.f32 %v3005, 1e-05
        %v3008 = vrsqrt.pop %v3006
        %v3009 = vmul.f32 %v3008, %v3006
        %v3010 = vmul.f32 %v3009, %v3008
        %v3011 = vmul.f32 0.5, %v3010
        %v3012 = vsub.f32 1.5, %v3011
        %v3013 = vmul.f32 %v3008, %v3012
        %vm3014 = vweird.f32 %v3006
        %vm3015 = vweird.f32 %v3008
        %vm3016 = vmor %vm3014, %vm3015
        %v3017 = vsel %vm3016, %v3008, %v3013
        %v3018 = vrsqrt.pop %v3007
        %v3019 = vmul.f32 %v3018, %v3007
        %v3020 = vmul.f32 %v3019, %v3018
        %v3021 = vmul.f32 0.5, %v3020
        %v3022 = vsub.f32 1.5, %v3021
        %v3023 = vmul.f32 %v3018, %v3022
        %vm3024 = vweird.f32 %v3007
        %vm3025 = vweird.f32 %v3018
        %vm3026 = vmor %vm3024, %vm3025
        %v3027 = vsel %vm3026, %v3018, %v3023
        %v3031 = vunpack.c.l.s4 269488144
        %v3032 = vunpack.c.0.s8 %v3031
        %v3033 = vperm.slane %v3017, %v3032
        %v3035 = vunpack.c.l.s4 842150450
        %v3036 = vunpack.c.0.s8 %v3035
        %v3037 = vperm.slane %v3017, %v3036
        %v3039 = vunpack.c.l.s4 1414812756
        %v3040 = vunpack.c.0.s8 %v3039
        %v3041 = vperm.slane %v3017, %v3040
        %v3043 = vunpack.c.l.s4 1987475062
        %v3044 = vunpack.c.0.s8 %v3043
        %v3045 = vperm.slane %v3017, %v3044
        %v3047 = vunpack.c.l.s4 269488144
        %v3048 = vunpack.c.0.s8 %v3047
        %v3049 = vperm.slane %v3027, %v3048
        %v3051 = vunpack.c.l.s4 842150450
        %v3052 = vunpack.c.0.s8 %v3051
        %v3053 = vperm.slane %v3027, %v3052
        %v3055 = vunpack.c.l.s4 1414812756
        %v3056 = vunpack.c.0.s8 %v3055
        %v3057 = vperm.slane %v3027, %v3056
        %v3059 = vunpack.c.l.s4 1987475062
        %v3060 = vunpack.c.0.s8 %v3059
        %v3061 = vperm.slane %v3027, %v3060
        %v3070 = vmul.f32 %v2957, %v3033
        %v3071 = vmul.f32 %v2958, %v3037
        %v3072 = vmul.f32 %v2959, %v3041
        %v3073 = vmul.f32 %v2960, %v3045
        %v3074 = vmul.f32 %v2961, %v3049
        %v3075 = vmul.f32 %v2962, %v3053
        %v3076 = vmul.f32 %v2963, %v3057
        %v3077 = vmul.f32 %v2964, %v3061
        %v3079 = vperm.slane %v2873, 0
        %v3081 = vrot.slane %v3079, 2
        %v3082 = vrot.slane %v3079, 4
        %v3083 = vrot.slane %v3079, 6
        %v3087 = vmul.f32 %v3070, %v3079
        %v3088 = vmul.f32 %v3071, %v3081
        %v3089 = vmul.f32 %v3072, %v3082
        %v3090 = vmul.f32 %v3073, %v3083
        %v3091 = vmul.f32 %v3074, %v3079
        %v3092 = vmul.f32 %v3075, %v3081
        %v3093 = vmul.f32 %v3076, %v3082
        %v3094 = vmul.f32 %v3077, %v3083
        %v3096 = vperm.slane %v2874, 0
        %v3098 = vrot.slane %v3096, 2
        %v3099 = vrot.slane %v3096, 4
        %v3100 = vrot.slane %v3096, 6
        %v3104 = vadd.f32 %v3087, %v3096
        %v3105 = vadd.f32 %v3088, %v3098
        %v3106 = vadd.f32 %v3089, %v3099
        %v3107 = vadd.f32 %v3090, %v3100
        %v3108 = vadd.f32 %v3091, %v3096
        %v3109 = vadd.f32 %v3092, %v3098
        %v3110 = vadd.f32 %v3093, %v3099
        %v3111 = vadd.f32 %v3094, %v3100
        %3120 = vst [vmem:[#allocation1] ss:$4 sm:$0xff] %v3104
        %s3121 = scalar_lea.vmem [#allocation1], 1
        %3122 = vst [vmem:[%s3121] ss:$4 sm:$0xff] %v3105
        %s3123 = scalar_lea.vmem [#allocation1], 2
        %3124 = vst [vmem:[%s3123] ss:$4 sm:$0xff] %v3106
        %s3125 = scalar_lea.vmem [#allocation1], 3
        %3126 = vst [vmem:[%s3125] ss:$4 sm:$0xff] %v3107
        %s3127 = scalar_lea.vmem [#allocation1], 32
        %3128 = vst [vmem:[%s3127] ss:$4 sm:$0xff] %v3108
        %s3129 = scalar_lea.vmem [#allocation1], 33
        %3130 = vst [vmem:[%s3129] ss:$4 sm:$0xff] %v3109
        %s3131 = scalar_lea.vmem [#allocation1], 34
        %3132 = vst [vmem:[%s3131] ss:$4 sm:$0xff] %v3110
        %s3133 = scalar_lea.vmem [#allocation1], 35
        %3134 = vst [vmem:[%s3133] ss:$4 sm:$0xff] %v3111
        %v3135 = vld.sshfl [vmem:[#allocation1] sm:$0xff pattern:$0x73625140]
        %v3136 = vld.sshfl [vmem:[#allocation1 + $0x20] sm:$0xff pattern:$0x73625140]
        %v3139 = vpack.c.bf16 %v3136, %v3135
        %v3140 = vld [vmem:[%s741] sm:$0xff]
        %v3141 = vld [vmem:[%s741 + $0x8] sm:$0xff]
        %v3142 = vld [vmem:[%s741 + $0x10] sm:$0xff]
        %v3143 = vld [vmem:[%s741 + $0x18] sm:$0xff]
        %v3144 = vld [vmem:[%s741 + $0x20] sm:$0xff]
        %v3145 = vld [vmem:[%s741 + $0x28] sm:$0xff]
        %v3146 = vld [vmem:[%s741 + $0x30] sm:$0xff]
        %v3147 = vld [vmem:[%s741 + $0x38] sm:$0xff]
        %v3148 = vld [vmem:[%s741 + $0x40] sm:$0xff]
        %v3149 = vld [vmem:[%s741 + $0x48] sm:$0xff]
        %v3150 = vld [vmem:[%s741 + $0x50] sm:$0xff]
        %v3151 = vld [vmem:[%s741 + $0x58] sm:$0xff]
        %v3152 = vld [vmem:[%s741 + $0x60] sm:$0xff]
        %v3153 = vld [vmem:[%s741 + $0x68] sm:$0xff]
        %v3154 = vld [vmem:[%s741 + $0x70] sm:$0xff]
        %v3155 = vld [vmem:[%s741 + $0x78] sm:$0xff]
        %v3156 = vld [vmem:[%s854] sm:$0x3]
        %v3158 = vperm.slane %v3156, 0
        %v3159 = vperm.slane %v3156, 1
        %v3178 = vunpack.c.l.b16 %v3140
        %v3179 = vunpack.c.h.b16 %v3140
        %v3180 = vunpack.c.l.b16 %v3141
        %v3181 = vunpack.c.h.b16 %v3141
        %v3182 = vunpack.c.l.b16 %v3142
        %v3183 = vunpack.c.h.b16 %v3142
        %v3184 = vunpack.c.l.b16 %v3143
        %v3185 = vunpack.c.h.b16 %v3143
        %v3186 = vunpack.c.l.b16 %v3144
        %v3187 = vunpack.c.h.b16 %v3144
        %v3188 = vunpack.c.l.b16 %v3145
        %v3189 = vunpack.c.h.b16 %v3145
        %v3190 = vunpack.c.l.b16 %v3146
        %v3191 = vunpack.c.h.b16 %v3146
        %v3192 = vunpack.c.l.b16 %v3147
        %v3193 = vunpack.c.h.b16 %v3147
        %v3194 = vunpack.c.l.b16 %v3148
        %v3195 = vunpack.c.h.b16 %v3148
        %v3196 = vunpack.c.l.b16 %v3149
        %v3197 = vunpack.c.h.b16 %v3149
        %v3198 = vunpack.c.l.b16 %v3150
        %v3199 = vunpack.c.h.b16 %v3150
        %v3200 = vunpack.c.l.b16 %v3151
        %v3201 = vunpack.c.h.b16 %v3151
        %v3202 = vunpack.c.l.b16 %v3152
        %v3203 = vunpack.c.h.b16 %v3152
        %v3204 = vunpack.c.l.b16 %v3153
        %v3205 = vunpack.c.h.b16 %v3153
        %v3206 = vunpack.c.l.b16 %v3154
        %v3207 = vunpack.c.h.b16 %v3154
        %v3208 = vunpack.c.l.b16 %v3155
        %v3209 = vunpack.c.h.b16 %v3155
        %v3210 = vpack.c.b16 %v3180, %v3178
        %v3211 = vpack.c.b16 %v3181, %v3179
        %v3212 = vpack.c.b16 %v3184, %v3182
        %v3213 = vpack.c.b16 %v3185, %v3183
        %v3214 = vpack.c.b16 %v3188, %v3186
        %v3215 = vpack.c.b16 %v3189, %v3187
        %v3216 = vpack.c.b16 %v3192, %v3190
        %v3217 = vpack.c.b16 %v3193, %v3191
        %v3218 = vpack.c.b16 %v3196, %v3194
        %v3219 = vpack.c.b16 %v3197, %v3195
        %v3220 = vpack.c.b16 %v3200, %v3198
        %v3221 = vpack.c.b16 %v3201, %v3199
        %v3222 = vpack.c.b16 %v3204, %v3202
        %v3223 = vpack.c.b16 %v3205, %v3203
        %v3224 = vpack.c.b16 %v3208, %v3206
        %v3225 = vpack.c.b16 %v3209, %v3207
        %3242 = vmatpush.bf16.msra.mxu0 %v3224
        %3243 = vmatpush.bf16.msra.mxu0 %v3222
        %3244 = vmatpush.bf16.msra.mxu0 %v3220
        %3245 = vmatpush.bf16.msra.mxu0 %v3218
        %3246 = vmatpush.bf16.msra.mxu0 %v3216
        %3247 = vmatpush.bf16.msra.mxu0 %v3214
        %3248 = vmatpush.bf16.msra.mxu0 %v3212
        %3249 = vmatpush.bf16.msra.mxu0 %v3210
        %3250 = vmatmul.bf16.gmra.mxu0 %v3139
        %v3251 = vpop.f32.mrf.mxu0
        %v3252 = vadd.f32 %v3158, %v3251
        %v3253 = vpop.f32.mrf.mxu0
        %v3254 = vadd.f32 %v3158, %v3253
        %3255 = vdwg.mxu0
        %3256 = vmatpush.bf16.msra.mxu0 %v3225
        %3257 = vmatpush.bf16.msra.mxu0 %v3223
        %3258 = vmatpush.bf16.msra.mxu0 %v3221
        %3259 = vmatpush.bf16.msra.mxu0 %v3219
        %3260 = vmatpush.bf16.msra.mxu0 %v3217
        %3261 = vmatpush.bf16.msra.mxu0 %v3215
        %3262 = vmatpush.bf16.msra.mxu0 %v3213
        %3263 = vmatpush.bf16.msra.mxu0 %v3211
        %3264 = vmatmul.bf16.gmra.mxu0 %v3139
        %v3265 = vpop.f32.mrf.mxu0
        %v3266 = vadd.f32 %v3159, %v3265
        %v3267 = vpop.f32.mrf.mxu0
        %v3268 = vadd.f32 %v3159, %v3267
        %3269 = vdwg.mxu0
        %v3270 = vmax.f32 %v3252, 0.0
        %v3271 = vmax.f32 %v3266, 0.0
        %v3272 = vmax.f32 %v3254, 0.0
        %v3273 = vmax.f32 %v3268, 0.0
        %v3274 = vpack.c.bf16 %v3272, %v3270
        %v3275 = vpack.c.bf16 %v3273, %v3271
        %v3276 = vld [vmem:[%s751] sm:$0xf]
        %v3277 = vld [vmem:[%s751 + $0x4] sm:$0xf]
        %v3278 = vld [vmem:[%s751 + $0x8] sm:$0xf]
        %v3279 = vld [vmem:[%s751 + $0xc] sm:$0xf]
        %v3280 = vld [vmem:[%s751 + $0x10] sm:$0xf]
        %v3281 = vld [vmem:[%s751 + $0x14] sm:$0xf]
        %v3282 = vld [vmem:[%s751 + $0x18] sm:$0xf]
        %v3283 = vld [vmem:[%s751 + $0x1c] sm:$0xf]
        %v3284 = vld [vmem:[%s751 + $0x20] sm:$0xf]
        %v3285 = vld [vmem:[%s751 + $0x24] sm:$0xf]
        %v3286 = vld [vmem:[%s751 + $0x28] sm:$0xf]
        %v3287 = vld [vmem:[%s751 + $0x2c] sm:$0xf]
        %v3288 = vld [vmem:[%s751 + $0x30] sm:$0xf]
        %v3289 = vld [vmem:[%s751 + $0x34] sm:$0xf]
        %v3290 = vld [vmem:[%s751 + $0x38] sm:$0xf]
        %v3291 = vld [vmem:[%s751 + $0x3c] sm:$0xf]
        %v3292 = vld [vmem:[%s751 + $0x40] sm:$0xf]
        %v3293 = vld [vmem:[%s751 + $0x44] sm:$0xf]
        %v3294 = vld [vmem:[%s751 + $0x48] sm:$0xf]
        %v3295 = vld [vmem:[%s751 + $0x4c] sm:$0xf]
        %v3296 = vld [vmem:[%s751 + $0x50] sm:$0xf]
        %v3297 = vld [vmem:[%s751 + $0x54] sm:$0xf]
        %v3298 = vld [vmem:[%s751 + $0x58] sm:$0xf]
        %v3299 = vld [vmem:[%s751 + $0x5c] sm:$0xf]
        %v3300 = vld [vmem:[%s751 + $0x60] sm:$0xf]
        %v3301 = vld [vmem:[%s751 + $0x64] sm:$0xf]
        %v3302 = vld [vmem:[%s751 + $0x68] sm:$0xf]
        %v3303 = vld [vmem:[%s751 + $0x6c] sm:$0xf]
        %v3304 = vld [vmem:[%s751 + $0x70] sm:$0xf]
        %v3305 = vld [vmem:[%s751 + $0x74] sm:$0xf]
        %v3306 = vld [vmem:[%s751 + $0x78] sm:$0xf]
        %v3307 = vld [vmem:[%s751 + $0x7c] sm:$0xf]
        %v3308 = vld [vmem:[%s857] sm:$0x1]
        %v3310 = vperm.slane %v3308, 0
        %v3344 = vunpack.c.l.b16 %v3276
        %v3345 = vunpack.c.l.b16 %v3277
        %v3346 = vunpack.c.l.b16 %v3278
        %v3347 = vunpack.c.l.b16 %v3279
        %v3348 = vunpack.c.l.b16 %v3280
        %v3349 = vunpack.c.l.b16 %v3281
        %v3350 = vunpack.c.l.b16 %v3282
        %v3351 = vunpack.c.l.b16 %v3283
        %v3352 = vunpack.c.l.b16 %v3284
        %v3353 = vunpack.c.l.b16 %v3285
        %v3354 = vunpack.c.l.b16 %v3286
        %v3355 = vunpack.c.l.b16 %v3287
        %v3356 = vunpack.c.l.b16 %v3288
        %v3357 = vunpack.c.l.b16 %v3289
        %v3358 = vunpack.c.l.b16 %v3290
        %v3359 = vunpack.c.l.b16 %v3291
        %v3360 = vunpack.c.l.b16 %v3292
        %v3361 = vunpack.c.l.b16 %v3293
        %v3362 = vunpack.c.l.b16 %v3294
        %v3363 = vunpack.c.l.b16 %v3295
        %v3364 = vunpack.c.l.b16 %v3296
        %v3365 = vunpack.c.l.b16 %v3297
        %v3366 = vunpack.c.l.b16 %v3298
        %v3367 = vunpack.c.l.b16 %v3299
        %v3368 = vunpack.c.l.b16 %v3300
        %v3369 = vunpack.c.l.b16 %v3301
        %v3370 = vunpack.c.l.b16 %v3302
        %v3371 = vunpack.c.l.b16 %v3303
        %v3372 = vunpack.c.l.b16 %v3304
        %v3373 = vunpack.c.l.b16 %v3305
        %v3374 = vunpack.c.l.b16 %v3306
        %v3375 = vunpack.c.l.b16 %v3307
        %v3376 = vpack.c.b16 %v3345, %v3344
        %v3377 = vpack.c.b16 %v3347, %v3346
        %v3378 = vpack.c.b16 %v3349, %v3348
        %v3379 = vpack.c.b16 %v3351, %v3350
        %v3380 = vpack.c.b16 %v3353, %v3352
        %v3381 = vpack.c.b16 %v3355, %v3354
        %v3382 = vpack.c.b16 %v3357, %v3356
        %v3383 = vpack.c.b16 %v3359, %v3358
        %v3384 = vpack.c.b16 %v3361, %v3360
        %v3385 = vpack.c.b16 %v3363, %v3362
        %v3386 = vpack.c.b16 %v3365, %v3364
        %v3387 = vpack.c.b16 %v3367, %v3366
        %v3388 = vpack.c.b16 %v3369, %v3368
        %v3389 = vpack.c.b16 %v3371, %v3370
        %v3390 = vpack.c.b16 %v3373, %v3372
        %v3391 = vpack.c.b16 %v3375, %v3374
        %3408 = vmatpush.bf16.msra.mxu0 %v3383
        %3409 = vmatpush.bf16.msra.mxu0 %v3382
        %3410 = vmatpush.bf16.msra.mxu0 %v3381
        %3411 = vmatpush.bf16.msra.mxu0 %v3380
        %3412 = vmatpush.bf16.msra.mxu0 %v3379
        %3413 = vmatpush.bf16.msra.mxu0 %v3378
        %3414 = vmatpush.bf16.msra.mxu0 %v3377
        %3415 = vmatpush.bf16.msra.mxu0 %v3376
        %3416 = vmatmul.bf16.gmra.mxu0 %v3274
        %v3417 = vpop.f32.mrf.mxu0
        %v3418 = vadd.f32 %v3310, %v3417
        %v3419 = vpop.f32.mrf.mxu0
        %v3420 = vadd.f32 %v3310, %v3419
        %3421 = vdwg.mxu0
        %3422 = vmatpush.bf16.msra.mxu0 %v3391
        %3423 = vmatpush.bf16.msra.mxu0 %v3390
        %3424 = vmatpush.bf16.msra.mxu0 %v3389
        %3425 = vmatpush.bf16.msra.mxu0 %v3388
        %3426 = vmatpush.bf16.msra.mxu0 %v3387
        %3427 = vmatpush.bf16.msra.mxu0 %v3386
        %3428 = vmatpush.bf16.msra.mxu0 %v3385
        %3429 = vmatpush.bf16.msra.mxu0 %v3384
        %3430 = vmatmul.bf16.gmra.mxu0 %v3275
        %v3431 = vpop.f32.mrf.mxu0
        %v3432 = vadd.f32 %v3418, %v3431
        %v3433 = vpop.f32.mrf.mxu0
        %v3434 = vadd.f32 %v3420, %v3433
        %3435 = vdwg.mxu0
        %v3438 = vrot.slane %v3432, 2
        %v3439 = vrot.slane %v3432, 4
        %v3440 = vrot.slane %v3432, 6
        %v3441 = vrot.slane %v3434, 2
        %v3442 = vrot.slane %v3434, 4
        %v3443 = vrot.slane %v3434, 6
        %v3450 = vadd.f32 %v3104, %v3432
        %v3451 = vadd.f32 %v3105, %v3438
        %v3452 = vadd.f32 %v3106, %v3439
        %v3453 = vadd.f32 %v3107, %v3440
        %v3454 = vadd.f32 %v3108, %v3434
        %v3455 = vadd.f32 %v3109, %v3441
        %v3456 = vadd.f32 %v3110, %v3442
        %v3457 = vadd.f32 %v3111, %v3443
        %v3458 = vld [vmem:[%s860] sm:$0x1]
        %v3459 = vld [vmem:[%s760] sm:$0x1]
        %3468 = vst [vmem:[#allocation1] ss:$4 sm:$0xff] %v3450
        %s3469 = scalar_lea.vmem [#allocation1], 1
        %3470 = vst [vmem:[%s3469] ss:$4 sm:$0xff] %v3451
        %s3471 = scalar_lea.vmem [#allocation1], 2
        %3472 = vst [vmem:[%s3471] ss:$4 sm:$0xff] %v3452
        %s3473 = scalar_lea.vmem [#allocation1], 3
        %3474 = vst [vmem:[%s3473] ss:$4 sm:$0xff] %v3453
        %s3475 = scalar_lea.vmem [#allocation1], 32
        %3476 = vst [vmem:[%s3475] ss:$4 sm:$0xff] %v3454
        %s3477 = scalar_lea.vmem [#allocation1], 33
        %3478 = vst [vmem:[%s3477] ss:$4 sm:$0xff] %v3455
        %s3479 = scalar_lea.vmem [#allocation1], 34
        %3480 = vst [vmem:[%s3479] ss:$4 sm:$0xff] %v3456
        %s3481 = scalar_lea.vmem [#allocation1], 35
        %3482 = vst [vmem:[%s3481] ss:$4 sm:$0xff] %v3457
        %v3483 = vld.sshfl [vmem:[#allocation1] sm:$0xff pattern:$0x73625140]
        %v3484 = vld.sshfl [vmem:[#allocation1 + $0x20] sm:$0xff pattern:$0x73625140]
        %3487 = vadd.xlane.f32.xlu0 %v3483
        %v3488 = vpop.xlane.xlu0 %3487
        %3489 = vadd.xlane.f32.xlu0 %v3484
        %v3490 = vpop.xlane.xlu0 %3489
        %v3491 = vmul.f32 %v3488, %v2912
        %v3492 = vmul.f32 %v3490, %v2912
        %v3496 = vunpack.c.l.s4 269488144
        %v3497 = vunpack.c.0.s8 %v3496
        %v3498 = vperm.slane %v3491, %v3497
        %v3500 = vunpack.c.l.s4 842150450
        %v3501 = vunpack.c.0.s8 %v3500
        %v3502 = vperm.slane %v3491, %v3501
        %v3504 = vunpack.c.l.s4 1414812756
        %v3505 = vunpack.c.0.s8 %v3504
        %v3506 = vperm.slane %v3491, %v3505
        %v3508 = vunpack.c.l.s4 1987475062
        %v3509 = vunpack.c.0.s8 %v3508
        %v3510 = vperm.slane %v3491, %v3509
        %v3512 = vunpack.c.l.s4 269488144
        %v3513 = vunpack.c.0.s8 %v3512
        %v3514 = vperm.slane %v3492, %v3513
        %v3516 = vunpack.c.l.s4 842150450
        %v3517 = vunpack.c.0.s8 %v3516
        %v3518 = vperm.slane %v3492, %v3517
        %v3520 = vunpack.c.l.s4 1414812756
        %v3521 = vunpack.c.0.s8 %v3520
        %v3522 = vperm.slane %v3492, %v3521
        %v3524 = vunpack.c.l.s4 1987475062
        %v3525 = vunpack.c.0.s8 %v3524
        %v3526 = vperm.slane %v3492, %v3525
        %v3535 = vsub.f32 %v3450, %v3498
        %v3536 = vsub.f32 %v3451, %v3502
        %v3537 = vsub.f32 %v3452, %v3506
        %v3538 = vsub.f32 %v3453, %v3510
        %v3539 = vsub.f32 %v3454, %v3514
        %v3540 = vsub.f32 %v3455, %v3518
        %v3541 = vsub.f32 %v3456, %v3522
        %v3542 = vsub.f32 %v3457, %v3526
        %v3543 = vmul.f32 %v3535, %v3535
        %v3544 = vmul.f32 %v3536, %v3536
        %v3545 = vmul.f32 %v3537, %v3537
        %v3546 = vmul.f32 %v3538, %v3538
        %v3547 = vmul.f32 %v3539, %v3539
        %v3548 = vmul.f32 %v3540, %v3540
        %v3549 = vmul.f32 %v3541, %v3541
        %v3550 = vmul.f32 %v3542, %v3542
        %3559 = vst [vmem:[#allocation1] ss:$4 sm:$0xff] %v3543
        %s3560 = scalar_lea.vmem [#allocation1], 1
        %3561 = vst [vmem:[%s3560] ss:$4 sm:$0xff] %v3544
        %s3562 = scalar_lea.vmem [#allocation1], 2
        %3563 = vst [vmem:[%s3562] ss:$4 sm:$0xff] %v3545
        %s3564 = scalar_lea.vmem [#allocation1], 3
        %3565 = vst [vmem:[%s3564] ss:$4 sm:$0xff] %v3546
        %s3566 = scalar_lea.vmem [#allocation1], 32
        %3567 = vst [vmem:[%s3566] ss:$4 sm:$0xff] %v3547
        %s3568 = scalar_lea.vmem [#allocation1], 33
        %3569 = vst [vmem:[%s3568] ss:$4 sm:$0xff] %v3548
        %s3570 = scalar_lea.vmem [#allocation1], 34
        %3571 = vst [vmem:[%s3570] ss:$4 sm:$0xff] %v3549
        %s3572 = scalar_lea.vmem [#allocation1], 35
        %3573 = vst [vmem:[%s3572] ss:$4 sm:$0xff] %v3550
        %v3574 = vld.sshfl [vmem:[#allocation1] sm:$0xff pattern:$0x73625140]
        %v3575 = vld.sshfl [vmem:[#allocation1 + $0x20] sm:$0xff pattern:$0x73625140]
        %3578 = vadd.xlane.f32.xlu0 %v3574
        %v3579 = vpop.xlane.xlu0 %3578
        %3580 = vadd.xlane.f32.xlu0 %v3575
        %v3581 = vpop.xlane.xlu0 %3580
        %v3582 = vmul.f32 %v3579, %v2912
        %v3583 = vmul.f32 %v3581, %v2912
        %v3584 = vadd.f32 %v3582, 1e-05
        %v3585 = vadd.f32 %v3583, 1e-05
        %v3586 = vrsqrt.pop %v3584
        %v3587 = vmul.f32 %v3586, %v3584
        %v3588 = vmul.f32 %v3587, %v3586
        %v3589 = vmul.f32 0.5, %v3588
        %v3590 = vsub.f32 1.5, %v3589
        %v3591 = vmul.f32 %v3586, %v3590
        %vm3592 = vweird.f32 %v3584
        %vm3593 = vweird.f32 %v3586
        %vm3594 = vmor %vm3592, %vm3593
        %v3595 = vsel %vm3594, %v3586, %v3591
        %v3596 = vrsqrt.pop %v3585
        %v3597 = vmul.f32 %v3596, %v3585
        %v3598 = vmul.f32 %v3597, %v3596
        %v3599 = vmul.f32 0.5, %v3598
        %v3600 = vsub.f32 1.5, %v3599
        %v3601 = vmul.f32 %v3596, %v3600
        %vm3602 = vweird.f32 %v3585
        %vm3603 = vweird.f32 %v3596
        %vm3604 = vmor %vm3602, %vm3603
        %v3605 = vsel %vm3604, %v3596, %v3601
        %v3609 = vunpack.c.l.s4 269488144
        %v3610 = vunpack.c.0.s8 %v3609
        %v3611 = vperm.slane %v3595, %v3610
        %v3613 = vunpack.c.l.s4 842150450
        %v3614 = vunpack.c.0.s8 %v3613
        %v3615 = vperm.slane %v3595, %v3614
        %v3617 = vunpack.c.l.s4 1414812756
        %v3618 = vunpack.c.0.s8 %v3617
        %v3619 = vperm.slane %v3595, %v3618
        %v3621 = vunpack.c.l.s4 1987475062
        %v3622 = vunpack.c.0.s8 %v3621
        %v3623 = vperm.slane %v3595, %v3622
        %v3625 = vunpack.c.l.s4 269488144
        %v3626 = vunpack.c.0.s8 %v3625
        %v3627 = vperm.slane %v3605, %v3626
        %v3629 = vunpack.c.l.s4 842150450
        %v3630 = vunpack.c.0.s8 %v3629
        %v3631 = vperm.slane %v3605, %v3630
        %v3633 = vunpack.c.l.s4 1414812756
        %v3634 = vunpack.c.0.s8 %v3633
        %v3635 = vperm.slane %v3605, %v3634
        %v3637 = vunpack.c.l.s4 1987475062
        %v3638 = vunpack.c.0.s8 %v3637
        %v3639 = vperm.slane %v3605, %v3638
        %v3648 = vmul.f32 %v3535, %v3611
        %v3649 = vmul.f32 %v3536, %v3615
        %v3650 = vmul.f32 %v3537, %v3619
        %v3651 = vmul.f32 %v3538, %v3623
        %v3652 = vmul.f32 %v3539, %v3627
        %v3653 = vmul.f32 %v3540, %v3631
        %v3654 = vmul.f32 %v3541, %v3635
        %v3655 = vmul.f32 %v3542, %v3639
        %v3657 = vperm.slane %v3458, 0
        %v3659 = vrot.slane %v3657, 2
        %v3660 = vrot.slane %v3657, 4
        %v3661 = vrot.slane %v3657, 6
        %v3665 = vmul.f32 %v3648, %v3657
        %v3666 = vmul.f32 %v3649, %v3659
        %v3667 = vmul.f32 %v3650, %v3660
        %v3668 = vmul.f32 %v3651, %v3661
        %v3669 = vmul.f32 %v3652, %v3657
        %v3670 = vmul.f32 %v3653, %v3659
        %v3671 = vmul.f32 %v3654, %v3660
        %v3672 = vmul.f32 %v3655, %v3661
        %v3674 = vperm.slane %v3459, 0
        %v3676 = vrot.slane %v3674, 2
        %v3677 = vrot.slane %v3674, 4
        %v3678 = vrot.slane %v3674, 6
        %v3682 = vadd.f32 %v3665, %v3674
        %v3683 = vadd.f32 %v3666, %v3676
        %v3684 = vadd.f32 %v3667, %v3677
        %v3685 = vadd.f32 %v3668, %v3678
        %v3686 = vadd.f32 %v3669, %v3674
        %v3687 = vadd.f32 %v3670, %v3676
        %v3688 = vadd.f32 %v3671, %v3677
        %v3689 = vadd.f32 %v3672, %v3678
        %p3690 = scmp.ne.s32.totalorder %s45, 1
        // Predicated region
        $region121: #{tpu_custom_call.1} parent=79 // pred_check
          %p3691 = pneg %p3690
        $region122: #{tpu_custom_call.1} parent=79 // pred_check_branch
          %3693 = sbr.rel (%p3691) target = $region124
        $region123: #{tpu_custom_call.1} parent=79 // pred_region
          %3694 = vst [vmem:[#allocation18] sm:$0x3] %v3682
          %3695 = vst [vmem:[#allocation18 + $0x2] sm:$0x3] %v3683
          %3696 = vst [vmem:[#allocation18 + $0x4] sm:$0x3] %v3684
          %3697 = vst [vmem:[#allocation18 + $0x6] sm:$0x3] %v3685
          %3698 = vst [vmem:[#allocation18 + $0x8] sm:$0x3] %v3686
          %3699 = vst [vmem:[#allocation18 + $0xa] sm:$0x3] %v3687
          %3700 = vst [vmem:[#allocation18 + $0xc] sm:$0x3] %v3688
          %3701 = vst [vmem:[#allocation18 + $0xe] sm:$0x3] %v3689
        $region124: #{tpu_custom_call.1} parent=79 // pred_fallthru
          _
        %p3702 = scmp.eq.s32.totalorder %s45, 1
        // Predicated region
        $region125: #{tpu_custom_call.1} parent=79 // pred_check
          %p3703 = pneg %p3702
        $region126: #{tpu_custom_call.1} parent=79 // pred_check_branch
          %3705 = sbr.rel (%p3703) target = $region128
        $region127: #{tpu_custom_call.1} parent=79 // pred_region
          %v3706 = vld [vmem:[%s13] sm:$0x1]
          %v3707 = vld [vmem:[%s14] sm:$0x1]
          %3716 = vst [vmem:[#allocation1] ss:$4 sm:$0xff] %v3682
          %s3717 = scalar_lea.vmem [#allocation1], 1
          %3718 = vst [vmem:[%s3717] ss:$4 sm:$0xff] %v3683
          %s3719 = scalar_lea.vmem [#allocation1], 2
          %3720 = vst [vmem:[%s3719] ss:$4 sm:$0xff] %v3684
          %s3721 = scalar_lea.vmem [#allocation1], 3
          %3722 = vst [vmem:[%s3721] ss:$4 sm:$0xff] %v3685
          %s3723 = scalar_lea.vmem [#allocation1], 32
          %3724 = vst [vmem:[%s3723] ss:$4 sm:$0xff] %v3686
          %s3725 = scalar_lea.vmem [#allocation1], 33
          %3726 = vst [vmem:[%s3725] ss:$4 sm:$0xff] %v3687
          %s3727 = scalar_lea.vmem [#allocation1], 34
          %3728 = vst [vmem:[%s3727] ss:$4 sm:$0xff] %v3688
          %s3729 = scalar_lea.vmem [#allocation1], 35
          %3730 = vst [vmem:[%s3729] ss:$4 sm:$0xff] %v3689
          %v3731 = vld.sshfl [vmem:[#allocation1] sm:$0xff pattern:$0x73625140]
          %v3732 = vld.sshfl [vmem:[#allocation1 + $0x20] sm:$0xff pattern:$0x73625140]
          %3735 = vadd.xlane.f32.xlu0 %v3731
          %v3736 = vpop.xlane.xlu0 %3735
          %3737 = vadd.xlane.f32.xlu0 %v3732
          %v3738 = vpop.xlane.xlu0 %3737
          %v3739 = vmul.f32 %v3736, %v2912
          %v3740 = vmul.f32 %v3738, %v2912
          %v3744 = vunpack.c.l.s4 269488144
          %v3745 = vunpack.c.0.s8 %v3744
          %v3746 = vperm.slane %v3739, %v3745
          %v3748 = vunpack.c.l.s4 842150450
          %v3749 = vunpack.c.0.s8 %v3748
          %v3750 = vperm.slane %v3739, %v3749
          %v3752 = vunpack.c.l.s4 1414812756
          %v3753 = vunpack.c.0.s8 %v3752
          %v3754 = vperm.slane %v3739, %v3753
          %v3756 = vunpack.c.l.s4 1987475062
          %v3757 = vunpack.c.0.s8 %v3756
          %v3758 = vperm.slane %v3739, %v3757
          %v3760 = vunpack.c.l.s4 269488144
          %v3761 = vunpack.c.0.s8 %v3760
          %v3762 = vperm.slane %v3740, %v3761
          %v3764 = vunpack.c.l.s4 842150450
          %v3765 = vunpack.c.0.s8 %v3764
          %v3766 = vperm.slane %v3740, %v3765
          %v3768 = vunpack.c.l.s4 1414812756
          %v3769 = vunpack.c.0.s8 %v3768
          %v3770 = vperm.slane %v3740, %v3769
          %v3772 = vunpack.c.l.s4 1987475062
          %v3773 = vunpack.c.0.s8 %v3772
          %v3774 = vperm.slane %v3740, %v3773
          %v3783 = vsub.f32 %v3682, %v3746
          %v3784 = vsub.f32 %v3683, %v3750
          %v3785 = vsub.f32 %v3684, %v3754
          %v3786 = vsub.f32 %v3685, %v3758
          %v3787 = vsub.f32 %v3686, %v3762
          %v3788 = vsub.f32 %v3687, %v3766
          %v3789 = vsub.f32 %v3688, %v3770
          %v3790 = vsub.f32 %v3689, %v3774
          %v3791 = vmul.f32 %v3783, %v3783
          %v3792 = vmul.f32 %v3784, %v3784
          %v3793 = vmul.f32 %v3785, %v3785
          %v3794 = vmul.f32 %v3786, %v3786
          %v3795 = vmul.f32 %v3787, %v3787
          %v3796 = vmul.f32 %v3788, %v3788
          %v3797 = vmul.f32 %v3789, %v3789
          %v3798 = vmul.f32 %v3790, %v3790
          %3807 = vst [vmem:[#allocation1] ss:$4 sm:$0xff] %v3791
          %s3808 = scalar_lea.vmem [#allocation1], 1
          %3809 = vst [vmem:[%s3808] ss:$4 sm:$0xff] %v3792
          %s3810 = scalar_lea.vmem [#allocation1], 2
          %3811 = vst [vmem:[%s3810] ss:$4 sm:$0xff] %v3793
          %s3812 = scalar_lea.vmem [#allocation1], 3
          %3813 = vst [vmem:[%s3812] ss:$4 sm:$0xff] %v3794
          %s3814 = scalar_lea.vmem [#allocation1], 32
          %3815 = vst [vmem:[%s3814] ss:$4 sm:$0xff] %v3795
          %s3816 = scalar_lea.vmem [#allocation1], 33
          %3817 = vst [vmem:[%s3816] ss:$4 sm:$0xff] %v3796
          %s3818 = scalar_lea.vmem [#allocation1], 34
          %3819 = vst [vmem:[%s3818] ss:$4 sm:$0xff] %v3797
          %s3820 = scalar_lea.vmem [#allocation1], 35
          %3821 = vst [vmem:[%s3820] ss:$4 sm:$0xff] %v3798
          %v3822 = vld.sshfl [vmem:[#allocation1] sm:$0xff pattern:$0x73625140]
          %v3823 = vld.sshfl [vmem:[#allocation1 + $0x20] sm:$0xff pattern:$0x73625140]
          %3826 = vadd.xlane.f32.xlu0 %v3822
          %v3827 = vpop.xlane.xlu0 %3826
          %3828 = vadd.xlane.f32.xlu0 %v3823
          %v3829 = vpop.xlane.xlu0 %3828
          %v3830 = vmul.f32 %v3827, %v2912
          %v3831 = vmul.f32 %v3829, %v2912
          %v3832 = vadd.f32 %v3830, 1e-05
          %v3833 = vadd.f32 %v3831, 1e-05
          %v3834 = vrsqrt.pop %v3832
          %v3835 = vmul.f32 %v3834, %v3832
          %v3836 = vmul.f32 %v3835, %v3834
          %v3837 = vmul.f32 0.5, %v3836
          %v3838 = vsub.f32 1.5, %v3837
          %v3839 = vmul.f32 %v3834, %v3838
          %vm3840 = vweird.f32 %v3832
          %vm3841 = vweird.f32 %v3834
          %vm3842 = vmor %vm3840, %vm3841
          %v3843 = vsel %vm3842, %v3834, %v3839
          %v3844 = vrsqrt.pop %v3833
          %v3845 = vmul.f32 %v3844, %v3833
          %v3846 = vmul.f32 %v3845, %v3844
          %v3847 = vmul.f32 0.5, %v3846
          %v3848 = vsub.f32 1.5, %v3847
          %v3849 = vmul.f32 %v3844, %v3848
          %vm3850 = vweird.f32 %v3833
          %vm3851 = vweird.f32 %v3844
          %vm3852 = vmor %vm3850, %vm3851
          %v3853 = vsel %vm3852, %v3844, %v3849
          %v3857 = vunpack.c.l.s4 269488144
          %v3858 = vunpack.c.0.s8 %v3857
          %v3859 = vperm.slane %v3843, %v3858
          %v3861 = vunpack.c.l.s4 842150450
          %v3862 = vunpack.c.0.s8 %v3861
          %v3863 = vperm.slane %v3843, %v3862
          %v3865 = vunpack.c.l.s4 1414812756
          %v3866 = vunpack.c.0.s8 %v3865
          %v3867 = vperm.slane %v3843, %v3866
          %v3869 = vunpack.c.l.s4 1987475062
          %v3870 = vunpack.c.0.s8 %v3869
          %v3871 = vperm.slane %v3843, %v3870
          %v3873 = vunpack.c.l.s4 269488144
          %v3874 = vunpack.c.0.s8 %v3873
          %v3875 = vperm.slane %v3853, %v3874
          %v3877 = vunpack.c.l.s4 842150450
          %v3878 = vunpack.c.0.s8 %v3877
          %v3879 = vperm.slane %v3853, %v3878
          %v3881 = vunpack.c.l.s4 1414812756
          %v3882 = vunpack.c.0.s8 %v3881
          %v3883 = vperm.slane %v3853, %v3882
          %v3885 = vunpack.c.l.s4 1987475062
          %v3886 = vunpack.c.0.s8 %v3885
          %v3887 = vperm.slane %v3853, %v3886
          %v3896 = vmul.f32 %v3783, %v3859
          %v3897 = vmul.f32 %v3784, %v3863
          %v3898 = vmul.f32 %v3785, %v3867
          %v3899 = vmul.f32 %v3786, %v3871
          %v3900 = vmul.f32 %v3787, %v3875
          %v3901 = vmul.f32 %v3788, %v3879
          %v3902 = vmul.f32 %v3789, %v3883
          %v3903 = vmul.f32 %v3790, %v3887
          %v3905 = vperm.slane %v3706, 0
          %v3907 = vrot.slane %v3905, 2
          %v3908 = vrot.slane %v3905, 4
          %v3909 = vrot.slane %v3905, 6
          %v3913 = vmul.f32 %v3896, %v3905
          %v3914 = vmul.f32 %v3897, %v3907
          %v3915 = vmul.f32 %v3898, %v3908
          %v3916 = vmul.f32 %v3899, %v3909
          %v3917 = vmul.f32 %v3900, %v3905
          %v3918 = vmul.f32 %v3901, %v3907
          %v3919 = vmul.f32 %v3902, %v3908
          %v3920 = vmul.f32 %v3903, %v3909
          %v3922 = vperm.slane %v3707, 0
          %v3924 = vrot.slane %v3922, 2
          %v3925 = vrot.slane %v3922, 4
          %v3926 = vrot.slane %v3922, 6
          %v3930 = vadd.f32 %v3913, %v3922
          %v3931 = vadd.f32 %v3914, %v3924
          %v3932 = vadd.f32 %v3915, %v3925
          %v3933 = vadd.f32 %v3916, %v3926
          %v3934 = vadd.f32 %v3917, %v3922
          %v3935 = vadd.f32 %v3918, %v3924
          %v3936 = vadd.f32 %v3919, %v3925
          %v3937 = vadd.f32 %v3920, %v3926
          %3938 = vst [vmem:[#allocation18] sm:$0x3] %v3930
          %3939 = vst [vmem:[#allocation18 + $0x2] sm:$0x3] %v3931
          %3940 = vst [vmem:[#allocation18 + $0x4] sm:$0x3] %v3932
          %3941 = vst [vmem:[#allocation18 + $0x6] sm:$0x3] %v3933
          %3942 = vst [vmem:[#allocation18 + $0x8] sm:$0x3] %v3934
          %3943 = vst [vmem:[#allocation18 + $0xa] sm:$0x3] %v3935
          %3944 = vst [vmem:[#allocation18 + $0xc] sm:$0x3] %v3936
          %3945 = vst [vmem:[#allocation18 + $0xe] sm:$0x3] %v3937
        $region128: #{tpu_custom_call.1} parent=79 // pred_fallthru
          _
        // Predicated region
        $region129: #{tpu_custom_call.1} parent=79 // pred_check
          %p3946 = pneg %p450
        $region130: #{tpu_custom_call.1} parent=79 // pred_check_branch
          %3948 = sbr.rel (%p3946) target = $region132
        $region131: #{tpu_custom_call.1} parent=79 // pred_region
          %3950 = vsyncadd [#allocation5], 0
          %s3951 = smul.addr %s44, 2
          %s3952 = scalar_lea.hbm %s15, %s3951
          %s3953 = sshll.u32 [#allocation18], 4
          %s3954 = int_to_ptr.vmem [resolvable:$true] %s3953
          %s3955 = sshll.u32 %s3952, 4
          %s3956 = int_to_ptr.hbm [resolvable:$true] %s3955
          %3961 = dma.vmem_to_hbm [thread:$0]  %s3954, 256, %s3956, [#allocation5], 32, 32, 2
        $region132: #{tpu_custom_call.1} parent=79 // pred_fallthru
          _
        // Predicated region
        $region133: #{tpu_custom_call.1} parent=79 // pred_check
          %p3962 = pneg %p450
        $region134: #{tpu_custom_call.1} parent=79 // pred_check_branch
          %3964 = sbr.rel (%p3962) target = $region136
        $region135: #{tpu_custom_call.1} parent=79 // pred_region
          %3966 = dma.done [#allocation5], 256
        $region136: #{tpu_custom_call.1} parent=79 // pred_fallthru
          _
      $region80: #{tpu_custom_call.1} parent=5 // pred_fallthru
        _
      %p3967 = scmp.le.s32.totalorder 2, %s35
      // Predicated region
      $region137: #{tpu_custom_call.1} parent=5 // pred_check
        %p3968 = pneg %p3967
      $region138: #{tpu_custom_call.1} parent=5 // pred_check_branch
        %3970 = sbr.rel (%p3968) target = $region140
      $region139: #{tpu_custom_call.1} parent=5 // pred_region
        %s3971 = ssub.s32 %s35, 2
      $region140: #{tpu_custom_call.1} parent=5 // pred_fallthru
        _
    $region6: #{tpu_custom_call.1} parent=1 // loop_footer
      %s39 = sadd.s32 1, %s35
    $region7: #{tpu_custom_call.1} parent=1 // loop_footer_branch
      %34 = sbr.rel target = $region3
    $region8: #{tpu_custom_call.1} parent=1 // loop_exit
      _
    %3972 = vsyncpa [#allocation4], 1
    %s3973 = scalar_lea.sflag [#allocation4], 1
    %3974 = vsyncpa %s3973, 1
    %3975 = vsyncpa [#allocation7], 1
    %s3976 = scalar_lea.sflag [#allocation7], 1
    %3977 = vsyncpa %s3976, 1
    %3978 = vsyncpa [#allocation10], 1
    %s3979 = scalar_lea.sflag [#allocation10], 1
    %3980 = vsyncpa %s3979, 1
    %3981 = vsyncpa [#allocation13], 1
    %s3982 = scalar_lea.sflag [#allocation13], 1
    %3983 = vsyncpa %s3982, 1
    %3984 = vsyncpa [#allocation16], 1
    %s3985 = scalar_lea.sflag [#allocation16], 1
    %3986 = vsyncpa %s3985, 1
    %3987 = vsyncpa [#allocation5], 1
    %s3988 = scalar_lea.sflag [#allocation5], 1
    %3989 = vsyncpa %s3988, 1

</llo_original>
